<compile_context>
chip_gen: v7x
topology: tpu7x:2x2x1
jax: 0.10.0
libtpu: 0.0.40
codegen_flags: <defaults>
</compile_context>

<pallas_src>
import jax
import jax.numpy as jnp
from jax.experimental import pallas as pl
from jax.experimental.pallas import tpu as pltpu


def _dft_matrix(n):
    """Symmetric DFT matrix F[j,k] = exp(-2*pi*i*j*k/n), as (re, im) f32."""
    idx = jnp.arange(n, dtype=jnp.float32)
    ang = (-2.0 * jnp.pi / n) * jnp.outer(idx, idx)
    return jnp.cos(ang).astype(jnp.float32), jnp.sin(ang).astype(jnp.float32)


def _fft_block_kernel(x_ref, ure_ref, uim_ref, dre_ref, dim_ref, sig_ref,
                      w1_ref, b1_ref, w2_ref, b2_ref,
                      fhre_ref, fhim_ref, fwre_ref, fwim_ref, out_ref):
    _, C, H, W = x_ref.shape
    K = w1_ref.shape[1]

    # ---- conv_fc: 1x1 convs == per-pixel MLP; computed once per image  ----
    s = sig_ref[0, 0]                                     # (H, W)
    z = jnp.zeros((H, W), jnp.float32)
    for k in range(K):                                    # K is small & static
        hk = jnp.maximum(s * w1_ref[0, k] + b1_ref[0, k], 0.0)
        z = z + hk * w2_ref[0, k]
    z = z + b2_ref[0, 0]
    # numerically-stable softplus
    rho = jnp.maximum(z, 0.0) + jnp.log(1.0 + jnp.exp(-jnp.abs(z)))

    fh_re = fhre_ref[...]
    fh_im = fhim_ref[...]
    fw_re = fwre_ref[...]
    fw_im = fwim_ref[...]
    inv_hw = 1.0 / float(H * W)

    def mm(a, b):
        return jnp.dot(a, b, preferred_element_type=jnp.float32)

    # rho broadcasts over the image channels of x / u / d.
    for c in range(C):
        xc = x_ref[0, c]                                  # (H, W), real

        # ---- forward FFT2: X = F_H @ x @ F_W  (x is real) ----
        a_re = mm(xc, fw_re)                              # fft along W
        a_im = mm(xc, fw_im)
        X_re = mm(fh_re, a_re) - mm(fh_im, a_im)          # fft along H
        X_im = mm(fh_re, a_im) + mm(fh_im, a_re)

        # ---- complex numerator / denominator and division ----
        n_re = ure_ref[0, c] + rho * X_re
        n_im = uim_ref[0, c] + rho * X_im
        den_re = dre_ref[0, c] + rho                      # real2complex(rho)
        den_im = dim_ref[0, c]
        inv = 1.0 / (den_re * den_re + den_im * den_im)
        z_re = (n_re * den_re + n_im * den_im) * inv
        z_im = (n_im * den_re - n_re * den_im) * inv

        # ---- real(ifft2(Z)) = Re( conj(F_H) @ Z @ conj(F_W) ) / (H*W) ----
        y_re = mm(fh_re, z_re) + mm(fh_im, z_im)
        y_im = mm(fh_re, z_im) - mm(fh_im, z_re)
        res = (mm(y_re, fw_re) + mm(y_im, fw_im)) * inv_hw

        out_ref[0, c] = res.astype(out_ref.dtype)


def fft_block(x, u, d, sigma, w1, b1, w2, b2):
    """FFTBlock forward.

    x:     (N, C, H, W)       real image
    u:     (N, C, H, W, 2)    complex (re/im stacked, torch.rfft layout)
    d:     (N, C, H, W, 2)    complex (re/im stacked)
    sigma: (N, 1, H, W)       noise map fed to conv_fc
    w1,b1: (K,)               Conv2d(1, K, 1) weight (flattened) / bias
    w2:    (K,)               Conv2d(K, 1, 1) weight (flattened)
    b2:    scalar             Conv2d(K, 1, 1) bias
    """
    N, C, H, W = x.shape
    K = w1.shape[0]

    # Split complex tensors into real/imag planes (keeps lane axis = W inside
    # the kernel instead of a size-2 trailing dim).
    u_re, u_im = u[..., 0], u[..., 1]
    d_re, d_im = d[..., 0], d[..., 1]

    fh_re, fh_im = _dft_matrix(H)
    fw_re, fw_im = _dft_matrix(W)

    img_spec = pl.BlockSpec((1, C, H, W), lambda n: (n, 0, 0, 0))
    smem_spec = pl.BlockSpec(memory_space=pltpu.MemorySpace.SMEM)
    const_h = pl.BlockSpec((H, H), lambda n: (0, 0))
    const_w = pl.BlockSpec((W, W), lambda n: (0, 0))

    grid_spec = pltpu.PrefetchScalarGridSpec(
        num_scalar_prefetch=0,
        grid=(N,),
        in_specs=[
            img_spec,                                         # x
            img_spec, img_spec,                               # u_re, u_im
            img_spec, img_spec,                               # d_re, d_im
            pl.BlockSpec((1, 1, H, W), lambda n: (n, 0, 0, 0)),  # sigma
            smem_spec, smem_spec, smem_spec, smem_spec,       # w1,b1,w2,b2
            const_h, const_h, const_w, const_w,               # DFT matrices
        ],
        out_specs=img_spec,
    )

    out = pl.pallas_call(
        _fft_block_kernel,
        out_shape=jax.ShapeDtypeStruct((N, C, H, W), x.dtype),
        grid_spec=grid_spec,
        compiler_params=pltpu.CompilerParams(
            dimension_semantics=("parallel",),   # batch axis is independent
            vmem_limit_bytes=32 * 1024 * 1024,
        ),
    )(x, u_re, u_im, d_re, d_im, sigma,
      w1.reshape(1, K).astype(jnp.float32),
      b1.reshape(1, K).astype(jnp.float32),
      w2.reshape(1, K).astype(jnp.float32),
      jnp.reshape(b2, (1, 1)).astype(jnp.float32),
      fh_re, fh_im, fw_re, fw_im)
    return out


def _reference(x, u, d, sigma, w1, b1, w2, b2):
    """Pure-JAX reference (jnp.fft) mirroring the PyTorch forward."""
    w1c = w1.reshape(1, -1, 1, 1)
    b1c = b1.reshape(1, -1, 1, 1)
    w2c = w2.reshape(1, -1, 1, 1)
    hidden = jnp.maximum(sigma * w1c + b1c, 0.0)            # (N, K, H, W)
    z = jnp.sum(hidden * w2c, axis=1, keepdims=True) + b2   # (N, 1, H, W)
    rho = jax.nn.softplus(z)

    X = jnp.fft.fft2(x, axes=(-2, -1))
    U = u[..., 0] + 1j * u[..., 1]
    D = d[..., 0] + 1j * d[..., 1]
    num = U + rho * X
    den = D + rho
    return jnp.real(jnp.fft.ifft2(num / den, axes=(-2, -1))).astype(x.dtype)


if __name__ == "__main__":
    key = jax.random.PRNGKey(0)
    ks = jax.random.split(key, 8)
    N, C, H, W, K = 2, 2, 16, 16, 8

    x = jax.random.normal(ks[0], (N, C, H, W), dtype=jnp.float32)
    u = jax.random.normal(ks[1], (N, C, H, W, 2), dtype=jnp.float32)
    # Keep the complex denominator away from zero (as in the real solver,
    # where d is a positive power spectrum plus a regularizer).
    d_re = 1.0 + jnp.abs(jax.random.normal(ks[2], (N, C, H, W), jnp.float32))
    d_im = 0.1 * jax.random.normal(ks[3], (N, C, H, W), jnp.float32)
    d = jnp.stack([d_re, d_im], axis=-1)
    sigma = 0.5 * jnp.abs(jax.random.normal(ks[4], (N, 1, H, W), jnp.float32))

    w1 = jax.random.normal(ks[5], (K,), dtype=jnp.float32)
    b1 = 0.1 * jax.random.normal(ks[6], (K,), dtype=jnp.float32)
    w2 = 0.3 * jax.random.normal(ks[7], (K,), dtype=jnp.float32)
    b2 = jnp.float32(0.05)

    out = fft_block(x, u, d, sigma, w1, b1, w2, b2)
    jax.block_until_ready(out)

    ref = _reference(x, u, d, sigma, w1, b1, w2, b2)
    assert out.shape == (N, C, H, W)
    err = float(jnp.max(jnp.abs(out - ref)))
    assert err < 5e-3, f"mismatch vs. JAX reference: max|diff|={err}"
    print("KERNEL_OK")
</pallas_src>

<mosaic_0001>
module attributes {stable_mosaic.version = 11 : i64} {
  func.func @_fft_block_kernel(%arg0: i32, %arg1: memref<1x2x16x16xf32, #tpu.memory_space<vmem>>, %arg2: memref<1x2x16x16xf32, #tpu.memory_space<vmem>>, %arg3: memref<1x2x16x16xf32, #tpu.memory_space<vmem>>, %arg4: memref<1x2x16x16xf32, #tpu.memory_space<vmem>>, %arg5: memref<1x2x16x16xf32, #tpu.memory_space<vmem>>, %arg6: memref<1x1x16x16xf32, #tpu.memory_space<vmem>>, %arg7: memref<1x8xf32, #tpu.memory_space<smem>>, %arg8: memref<1x8xf32, #tpu.memory_space<smem>>, %arg9: memref<1x8xf32, #tpu.memory_space<smem>>, %arg10: memref<1x1xf32, #tpu.memory_space<smem>>, %arg11: memref<16x16xf32, #tpu.memory_space<vmem>>, %arg12: memref<16x16xf32, #tpu.memory_space<vmem>>, %arg13: memref<16x16xf32, #tpu.memory_space<vmem>>, %arg14: memref<16x16xf32, #tpu.memory_space<vmem>>, %arg15: memref<1x2x16x16xf32, #tpu.memory_space<vmem>>) attributes {dimension_semantics = [#tpu.dimension_semantics<parallel>], iteration_bounds = array<i64: 2>, scalar_prefetch = 0 : i64, scratch_operands = 0 : i64, tpu.core_type = #tpu.core_type<tc>, window_params = [{transform_indices = @transform_0, window_bounds = array<i64: 1, 2, 16, 16>}, {transform_indices = @transform_1, window_bounds = array<i64: 1, 2, 16, 16>}, {transform_indices = @transform_2, window_bounds = array<i64: 1, 2, 16, 16>}, {transform_indices = @transform_3, window_bounds = array<i64: 1, 2, 16, 16>}, {transform_indices = @transform_4, window_bounds = array<i64: 1, 2, 16, 16>}, {transform_indices = @transform_5, window_bounds = array<i64: 1, 1, 16, 16>}, {transform_indices = @transform_6, window_bounds = array<i64: 1, 8>}, {transform_indices = @transform_7, window_bounds = array<i64: 1, 8>}, {transform_indices = @transform_8, window_bounds = array<i64: 1, 8>}, {transform_indices = @transform_9, window_bounds = array<i64: 1, 1>}, {pipeline_mode = #tpu.pipeline_mode<synchronous>, transform_indices = @transform_10, window_bounds = array<i64: 16, 16>}, {pipeline_mode = #tpu.pipeline_mode<synchronous>, transform_indices = @transform_11, window_bounds = array<i64: 16, 16>}, {pipeline_mode = #tpu.pipeline_mode<synchronous>, transform_indices = @transform_12, window_bounds = array<i64: 16, 16>}, {pipeline_mode = #tpu.pipeline_mode<synchronous>, transform_indices = @transform_13, window_bounds = array<i64: 16, 16>}, {transform_indices = @transform_14, window_bounds = array<i64: 1, 2, 16, 16>}]} {
    %c0 = arith.constant 0 : index
    %c0_0 = arith.constant 0 : index
    %c0_1 = arith.constant 0 : index
    %c0_2 = arith.constant 0 : index
    %0 = vector.load %arg6[%c0, %c0_0, %c0_1, %c0_2] : memref<1x1x16x16xf32, #tpu.memory_space<vmem>>, vector<1x1x16x16xf32>
    %1 = vector.shape_cast %0 : vector<1x1x16x16xf32> to vector<16x16xf32>
    %cst = arith.constant 0.000000e+00 : f32
    %2 = vector.broadcast %cst : f32 to vector<16x16xf32>
    %c0_3 = arith.constant 0 : index
    %c0_4 = arith.constant 0 : index
    %3 = memref.load %arg7[%c0_3, %c0_4] : memref<1x8xf32, #tpu.memory_space<smem>>
    %4 = vector.broadcast %3 : f32 to vector<16x16xf32>
    %5 = arith.mulf %1, %4 : vector<16x16xf32>
    %c0_5 = arith.constant 0 : index
    %c0_6 = arith.constant 0 : index
    %6 = memref.load %arg8[%c0_5, %c0_6] : memref<1x8xf32, #tpu.memory_space<smem>>
    %7 = vector.broadcast %6 : f32 to vector<16x16xf32>
    %8 = arith.addf %5, %7 : vector<16x16xf32>
    %cst_7 = arith.constant 0.000000e+00 : f32
    %9 = vector.broadcast %cst_7 : f32 to vector<16x16xf32>
    %10 = arith.maximumf %8, %9 : vector<16x16xf32>
    %c0_8 = arith.constant 0 : index
    %c0_9 = arith.constant 0 : index
    %11 = memref.load %arg9[%c0_8, %c0_9] : memref<1x8xf32, #tpu.memory_space<smem>>
    %12 = vector.broadcast %11 : f32 to vector<16x16xf32>
    %13 = arith.mulf %10, %12 : vector<16x16xf32>
    %14 = arith.addf %2, %13 : vector<16x16xf32>
    %c0_10 = arith.constant 0 : index
    %c1 = arith.constant 1 : index
    %15 = memref.load %arg7[%c0_10, %c1] : memref<1x8xf32, #tpu.memory_space<smem>>
    %16 = vector.broadcast %15 : f32 to vector<16x16xf32>
    %17 = arith.mulf %1, %16 : vector<16x16xf32>
    %c0_11 = arith.constant 0 : index
    %c1_12 = arith.constant 1 : index
    %18 = memref.load %arg8[%c0_11, %c1_12] : memref<1x8xf32, #tpu.memory_space<smem>>
    %19 = vector.broadcast %18 : f32 to vector<16x16xf32>
    %20 = arith.addf %17, %19 : vector<16x16xf32>
    %cst_13 = arith.constant 0.000000e+00 : f32
    %21 = vector.broadcast %cst_13 : f32 to vector<16x16xf32>
    %22 = arith.maximumf %20, %21 : vector<16x16xf32>
    %c0_14 = arith.constant 0 : index
    %c1_15 = arith.constant 1 : index
    %23 = memref.load %arg9[%c0_14, %c1_15] : memref<1x8xf32, #tpu.memory_space<smem>>
    %24 = vector.broadcast %23 : f32 to vector<16x16xf32>
    %25 = arith.mulf %22, %24 : vector<16x16xf32>
    %26 = arith.addf %14, %25 : vector<16x16xf32>
    %c0_16 = arith.constant 0 : index
    %c2 = arith.constant 2 : index
    %27 = memref.load %arg7[%c0_16, %c2] : memref<1x8xf32, #tpu.memory_space<smem>>
    %28 = vector.broadcast %27 : f32 to vector<16x16xf32>
    %29 = arith.mulf %1, %28 : vector<16x16xf32>
    %c0_17 = arith.constant 0 : index
    %c2_18 = arith.constant 2 : index
    %30 = memref.load %arg8[%c0_17, %c2_18] : memref<1x8xf32, #tpu.memory_space<smem>>
    %31 = vector.broadcast %30 : f32 to vector<16x16xf32>
    %32 = arith.addf %29, %31 : vector<16x16xf32>
    %cst_19 = arith.constant 0.000000e+00 : f32
    %33 = vector.broadcast %cst_19 : f32 to vector<16x16xf32>
    %34 = arith.maximumf %32, %33 : vector<16x16xf32>
    %c0_20 = arith.constant 0 : index
    %c2_21 = arith.constant 2 : index
    %35 = memref.load %arg9[%c0_20, %c2_21] : memref<1x8xf32, #tpu.memory_space<smem>>
    %36 = vector.broadcast %35 : f32 to vector<16x16xf32>
    %37 = arith.mulf %34, %36 : vector<16x16xf32>
    %38 = arith.addf %26, %37 : vector<16x16xf32>
    %c0_22 = arith.constant 0 : index
    %c3 = arith.constant 3 : index
    %39 = memref.load %arg7[%c0_22, %c3] : memref<1x8xf32, #tpu.memory_space<smem>>
    %40 = vector.broadcast %39 : f32 to vector<16x16xf32>
    %41 = arith.mulf %1, %40 : vector<16x16xf32>
    %c0_23 = arith.constant 0 : index
    %c3_24 = arith.constant 3 : index
    %42 = memref.load %arg8[%c0_23, %c3_24] : memref<1x8xf32, #tpu.memory_space<smem>>
    %43 = vector.broadcast %42 : f32 to vector<16x16xf32>
    %44 = arith.addf %41, %43 : vector<16x16xf32>
    %cst_25 = arith.constant 0.000000e+00 : f32
    %45 = vector.broadcast %cst_25 : f32 to vector<16x16xf32>
    %46 = arith.maximumf %44, %45 : vector<16x16xf32>
    %c0_26 = arith.constant 0 : index
    %c3_27 = arith.constant 3 : index
    %47 = memref.load %arg9[%c0_26, %c3_27] : memref<1x8xf32, #tpu.memory_space<smem>>
    %48 = vector.broadcast %47 : f32 to vector<16x16xf32>
    %49 = arith.mulf %46, %48 : vector<16x16xf32>
    %50 = arith.addf %38, %49 : vector<16x16xf32>
    %c0_28 = arith.constant 0 : index
    %c4 = arith.constant 4 : index
    %51 = memref.load %arg7[%c0_28, %c4] : memref<1x8xf32, #tpu.memory_space<smem>>
    %52 = vector.broadcast %51 : f32 to vector<16x16xf32>
    %53 = arith.mulf %1, %52 : vector<16x16xf32>
    %c0_29 = arith.constant 0 : index
    %c4_30 = arith.constant 4 : index
    %54 = memref.load %arg8[%c0_29, %c4_30] : memref<1x8xf32, #tpu.memory_space<smem>>
    %55 = vector.broadcast %54 : f32 to vector<16x16xf32>
    %56 = arith.addf %53, %55 : vector<16x16xf32>
    %cst_31 = arith.constant 0.000000e+00 : f32
    %57 = vector.broadcast %cst_31 : f32 to vector<16x16xf32>
    %58 = arith.maximumf %56, %57 : vector<16x16xf32>
    %c0_32 = arith.constant 0 : index
    %c4_33 = arith.constant 4 : index
    %59 = memref.load %arg9[%c0_32, %c4_33] : memref<1x8xf32, #tpu.memory_space<smem>>
    %60 = vector.broadcast %59 : f32 to vector<16x16xf32>
    %61 = arith.mulf %58, %60 : vector<16x16xf32>
    %62 = arith.addf %50, %61 : vector<16x16xf32>
    %c0_34 = arith.constant 0 : index
    %c5 = arith.constant 5 : index
    %63 = memref.load %arg7[%c0_34, %c5] : memref<1x8xf32, #tpu.memory_space<smem>>
    %64 = vector.broadcast %63 : f32 to vector<16x16xf32>
    %65 = arith.mulf %1, %64 : vector<16x16xf32>
    %c0_35 = arith.constant 0 : index
    %c5_36 = arith.constant 5 : index
    %66 = memref.load %arg8[%c0_35, %c5_36] : memref<1x8xf32, #tpu.memory_space<smem>>
    %67 = vector.broadcast %66 : f32 to vector<16x16xf32>
    %68 = arith.addf %65, %67 : vector<16x16xf32>
    %cst_37 = arith.constant 0.000000e+00 : f32
    %69 = vector.broadcast %cst_37 : f32 to vector<16x16xf32>
    %70 = arith.maximumf %68, %69 : vector<16x16xf32>
    %c0_38 = arith.constant 0 : index
    %c5_39 = arith.constant 5 : index
    %71 = memref.load %arg9[%c0_38, %c5_39] : memref<1x8xf32, #tpu.memory_space<smem>>
    %72 = vector.broadcast %71 : f32 to vector<16x16xf32>
    %73 = arith.mulf %70, %72 : vector<16x16xf32>
    %74 = arith.addf %62, %73 : vector<16x16xf32>
    %c0_40 = arith.constant 0 : index
    %c6 = arith.constant 6 : index
    %75 = memref.load %arg7[%c0_40, %c6] : memref<1x8xf32, #tpu.memory_space<smem>>
    %76 = vector.broadcast %75 : f32 to vector<16x16xf32>
    %77 = arith.mulf %1, %76 : vector<16x16xf32>
    %c0_41 = arith.constant 0 : index
    %c6_42 = arith.constant 6 : index
    %78 = memref.load %arg8[%c0_41, %c6_42] : memref<1x8xf32, #tpu.memory_space<smem>>
    %79 = vector.broadcast %78 : f32 to vector<16x16xf32>
    %80 = arith.addf %77, %79 : vector<16x16xf32>
    %cst_43 = arith.constant 0.000000e+00 : f32
    %81 = vector.broadcast %cst_43 : f32 to vector<16x16xf32>
    %82 = arith.maximumf %80, %81 : vector<16x16xf32>
    %c0_44 = arith.constant 0 : index
    %c6_45 = arith.constant 6 : index
    %83 = memref.load %arg9[%c0_44, %c6_45] : memref<1x8xf32, #tpu.memory_space<smem>>
    %84 = vector.broadcast %83 : f32 to vector<16x16xf32>
    %85 = arith.mulf %82, %84 : vector<16x16xf32>
    %86 = arith.addf %74, %85 : vector<16x16xf32>
    %c0_46 = arith.constant 0 : index
    %c7 = arith.constant 7 : index
    %87 = memref.load %arg7[%c0_46, %c7] : memref<1x8xf32, #tpu.memory_space<smem>>
    %88 = vector.broadcast %87 : f32 to vector<16x16xf32>
    %89 = arith.mulf %1, %88 : vector<16x16xf32>
    %c0_47 = arith.constant 0 : index
    %c7_48 = arith.constant 7 : index
    %90 = memref.load %arg8[%c0_47, %c7_48] : memref<1x8xf32, #tpu.memory_space<smem>>
    %91 = vector.broadcast %90 : f32 to vector<16x16xf32>
    %92 = arith.addf %89, %91 : vector<16x16xf32>
    %cst_49 = arith.constant 0.000000e+00 : f32
    %93 = vector.broadcast %cst_49 : f32 to vector<16x16xf32>
    %94 = arith.maximumf %92, %93 : vector<16x16xf32>
    %c0_50 = arith.constant 0 : index
    %c7_51 = arith.constant 7 : index
    %95 = memref.load %arg9[%c0_50, %c7_51] : memref<1x8xf32, #tpu.memory_space<smem>>
    %96 = vector.broadcast %95 : f32 to vector<16x16xf32>
    %97 = arith.mulf %94, %96 : vector<16x16xf32>
    %98 = arith.addf %86, %97 : vector<16x16xf32>
    %c0_52 = arith.constant 0 : index
    %c0_53 = arith.constant 0 : index
    %99 = memref.load %arg10[%c0_52, %c0_53] : memref<1x1xf32, #tpu.memory_space<smem>>
    %100 = vector.broadcast %99 : f32 to vector<16x16xf32>
    %101 = arith.addf %98, %100 : vector<16x16xf32>
    %cst_54 = arith.constant 0.000000e+00 : f32
    %102 = vector.broadcast %cst_54 : f32 to vector<16x16xf32>
    %103 = arith.maximumf %101, %102 : vector<16x16xf32>
    %104 = math.absf %101 : vector<16x16xf32>
    %cst_55 = arith.constant 0.000000e+00 : f32
    %105 = vector.broadcast %cst_55 : f32 to vector<16x16xf32>
    %106 = arith.subf %105, %104 : vector<16x16xf32>
    %107 = math.exp %106 : vector<16x16xf32>
    %cst_56 = arith.constant 1.000000e+00 : f32
    %108 = vector.broadcast %cst_56 : f32 to vector<16x16xf32>
    %109 = arith.addf %108, %107 : vector<16x16xf32>
    %110 = math.log %109 : vector<16x16xf32>
    %111 = arith.addf %103, %110 : vector<16x16xf32>
    %c0_57 = arith.constant 0 : index
    %c0_58 = arith.constant 0 : index
    %112 = vector.load %arg11[%c0_57, %c0_58] : memref<16x16xf32, #tpu.memory_space<vmem>>, vector<16x16xf32>
    %c0_59 = arith.constant 0 : index
    %c0_60 = arith.constant 0 : index
    %113 = vector.load %arg12[%c0_59, %c0_60] : memref<16x16xf32, #tpu.memory_space<vmem>>, vector<16x16xf32>
    %c0_61 = arith.constant 0 : index
    %c0_62 = arith.constant 0 : index
    %114 = vector.load %arg13[%c0_61, %c0_62] : memref<16x16xf32, #tpu.memory_space<vmem>>, vector<16x16xf32>
    %c0_63 = arith.constant 0 : index
    %c0_64 = arith.constant 0 : index
    %115 = vector.load %arg14[%c0_63, %c0_64] : memref<16x16xf32, #tpu.memory_space<vmem>>, vector<16x16xf32>
    %c0_65 = arith.constant 0 : index
    %c0_66 = arith.constant 0 : index
    %c0_67 = arith.constant 0 : index
    %c0_68 = arith.constant 0 : index
    %116 = vector.load %arg1[%c0_65, %c0_66, %c0_67, %c0_68] : memref<1x2x16x16xf32, #tpu.memory_space<vmem>>, vector<1x1x16x16xf32>
    %117 = vector.shape_cast %116 : vector<1x1x16x16xf32> to vector<16x16xf32>
    %cst_69 = arith.constant dense<0.000000e+00> : vector<16x16xf32>
    %118 = tpu.matmul %117, %114, %cst_69 {dimension_numbers = #tpu.dot_dimension_numbers<[1], [0], [0], [1], [0, 0, 1, 1], [], []>} : vector<16x16xf32>, vector<16x16xf32>, vector<16x16xf32> -> vector<16x16xf32>
    %cst_70 = arith.constant dense<0.000000e+00> : vector<16x16xf32>
    %119 = tpu.matmul %117, %115, %cst_70 {dimension_numbers = #tpu.dot_dimension_numbers<[1], [0], [0], [1], [0, 0, 1, 1], [], []>} : vector<16x16xf32>, vector<16x16xf32>, vector<16x16xf32> -> vector<16x16xf32>
    %cst_71 = arith.constant dense<0.000000e+00> : vector<16x16xf32>
    %120 = tpu.matmul %112, %118, %cst_71 {dimension_numbers = #tpu.dot_dimension_numbers<[1], [0], [0], [1], [0, 0, 1, 1], [], []>} : vector<16x16xf32>, vector<16x16xf32>, vector<16x16xf32> -> vector<16x16xf32>
    %cst_72 = arith.constant dense<0.000000e+00> : vector<16x16xf32>
    %121 = tpu.matmul %113, %119, %cst_72 {dimension_numbers = #tpu.dot_dimension_numbers<[1], [0], [0], [1], [0, 0, 1, 1], [], []>} : vector<16x16xf32>, vector<16x16xf32>, vector<16x16xf32> -> vector<16x16xf32>
    %122 = arith.subf %120, %121 : vector<16x16xf32>
    %cst_73 = arith.constant dense<0.000000e+00> : vector<16x16xf32>
    %123 = tpu.matmul %112, %119, %cst_73 {dimension_numbers = #tpu.dot_dimension_numbers<[1], [0], [0], [1], [0, 0, 1, 1], [], []>} : vector<16x16xf32>, vector<16x16xf32>, vector<16x16xf32> -> vector<16x16xf32>
    %cst_74 = arith.constant dense<0.000000e+00> : vector<16x16xf32>
    %124 = tpu.matmul %113, %118, %cst_74 {dimension_numbers = #tpu.dot_dimension_numbers<[1], [0], [0], [1], [0, 0, 1, 1], [], []>} : vector<16x16xf32>, vector<16x16xf32>, vector<16x16xf32> -> vector<16x16xf32>
    %125 = arith.addf %123, %124 : vector<16x16xf32>
    %c0_75 = arith.constant 0 : index
    %c0_76 = arith.constant 0 : index
    %c0_77 = arith.constant 0 : index
    %c0_78 = arith.constant 0 : index
    %126 = vector.load %arg2[%c0_75, %c0_76, %c0_77, %c0_78] : memref<1x2x16x16xf32, #tpu.memory_space<vmem>>, vector<1x1x16x16xf32>
    %127 = vector.shape_cast %126 : vector<1x1x16x16xf32> to vector<16x16xf32>
    %128 = arith.mulf %111, %122 : vector<16x16xf32>
    %129 = arith.addf %127, %128 : vector<16x16xf32>
    %c0_79 = arith.constant 0 : index
    %c0_80 = arith.constant 0 : index
    %c0_81 = arith.constant 0 : index
    %c0_82 = arith.constant 0 : index
    %130 = vector.load %arg3[%c0_79, %c0_80, %c0_81, %c0_82] : memref<1x2x16x16xf32, #tpu.memory_space<vmem>>, vector<1x1x16x16xf32>
    %131 = vector.shape_cast %130 : vector<1x1x16x16xf32> to vector<16x16xf32>
    %132 = arith.mulf %111, %125 : vector<16x16xf32>
    %133 = arith.addf %131, %132 : vector<16x16xf32>
    %c0_83 = arith.constant 0 : index
    %c0_84 = arith.constant 0 : index
    %c0_85 = arith.constant 0 : index
    %c0_86 = arith.constant 0 : index
    %134 = vector.load %arg4[%c0_83, %c0_84, %c0_85, %c0_86] : memref<1x2x16x16xf32, #tpu.memory_space<vmem>>, vector<1x1x16x16xf32>
    %135 = vector.shape_cast %134 : vector<1x1x16x16xf32> to vector<16x16xf32>
    %136 = arith.addf %135, %111 : vector<16x16xf32>
    %c0_87 = arith.constant 0 : index
    %c0_88 = arith.constant 0 : index
    %c0_89 = arith.constant 0 : index
    %c0_90 = arith.constant 0 : index
    %137 = vector.load %arg5[%c0_87, %c0_88, %c0_89, %c0_90] : memref<1x2x16x16xf32, #tpu.memory_space<vmem>>, vector<1x1x16x16xf32>
    %138 = vector.shape_cast %137 : vector<1x1x16x16xf32> to vector<16x16xf32>
    %139 = arith.mulf %136, %136 : vector<16x16xf32>
    %140 = arith.mulf %138, %138 : vector<16x16xf32>
    %141 = arith.addf %139, %140 : vector<16x16xf32>
    %cst_91 = arith.constant 1.000000e+00 : f32
    %142 = vector.broadcast %cst_91 : f32 to vector<16x16xf32>
    %143 = arith.divf %142, %141 : vector<16x16xf32>
    %144 = arith.mulf %129, %136 : vector<16x16xf32>
    %145 = arith.mulf %133, %138 : vector<16x16xf32>
    %146 = arith.addf %144, %145 : vector<16x16xf32>
    %147 = arith.mulf %146, %143 : vector<16x16xf32>
    %148 = arith.mulf %133, %136 : vector<16x16xf32>
    %149 = arith.mulf %129, %138 : vector<16x16xf32>
    %150 = arith.subf %148, %149 : vector<16x16xf32>
    %151 = arith.mulf %150, %143 : vector<16x16xf32>
    %cst_92 = arith.constant dense<0.000000e+00> : vector<16x16xf32>
    %152 = tpu.matmul %112, %147, %cst_92 {dimension_numbers = #tpu.dot_dimension_numbers<[1], [0], [0], [1], [0, 0, 1, 1], [], []>} : vector<16x16xf32>, vector<16x16xf32>, vector<16x16xf32> -> vector<16x16xf32>
    %cst_93 = arith.constant dense<0.000000e+00> : vector<16x16xf32>
    %153 = tpu.matmul %113, %151, %cst_93 {dimension_numbers = #tpu.dot_dimension_numbers<[1], [0], [0], [1], [0, 0, 1, 1], [], []>} : vector<16x16xf32>, vector<16x16xf32>, vector<16x16xf32> -> vector<16x16xf32>
    %154 = arith.addf %152, %153 : vector<16x16xf32>
    %cst_94 = arith.constant dense<0.000000e+00> : vector<16x16xf32>
    %155 = tpu.matmul %112, %151, %cst_94 {dimension_numbers = #tpu.dot_dimension_numbers<[1], [0], [0], [1], [0, 0, 1, 1], [], []>} : vector<16x16xf32>, vector<16x16xf32>, vector<16x16xf32> -> vector<16x16xf32>
    %cst_95 = arith.constant dense<0.000000e+00> : vector<16x16xf32>
    %156 = tpu.matmul %113, %147, %cst_95 {dimension_numbers = #tpu.dot_dimension_numbers<[1], [0], [0], [1], [0, 0, 1, 1], [], []>} : vector<16x16xf32>, vector<16x16xf32>, vector<16x16xf32> -> vector<16x16xf32>
    %157 = arith.subf %155, %156 : vector<16x16xf32>
    %cst_96 = arith.constant dense<0.000000e+00> : vector<16x16xf32>
    %158 = tpu.matmul %154, %114, %cst_96 {dimension_numbers = #tpu.dot_dimension_numbers<[1], [0], [0], [1], [0, 0, 1, 1], [], []>} : vector<16x16xf32>, vector<16x16xf32>, vector<16x16xf32> -> vector<16x16xf32>
    %cst_97 = arith.constant dense<0.000000e+00> : vector<16x16xf32>
    %159 = tpu.matmul %157, %115, %cst_97 {dimension_numbers = #tpu.dot_dimension_numbers<[1], [0], [0], [1], [0, 0, 1, 1], [], []>} : vector<16x16xf32>, vector<16x16xf32>, vector<16x16xf32> -> vector<16x16xf32>
    %160 = arith.addf %158, %159 : vector<16x16xf32>
    %cst_98 = arith.constant 3.906250e-03 : f32
    %161 = vector.broadcast %cst_98 : f32 to vector<16x16xf32>
    %162 = arith.mulf %160, %161 : vector<16x16xf32>
    %c0_99 = arith.constant 0 : index
    %c0_100 = arith.constant 0 : index
    %c0_101 = arith.constant 0 : index
    %c0_102 = arith.constant 0 : index
    %163 = vector.load %arg15[%c0_99, %c0_100, %c0_101, %c0_102] : memref<1x2x16x16xf32, #tpu.memory_space<vmem>>, vector<1x1x16x16xf32>
    %164 = vector.shape_cast %163 : vector<1x1x16x16xf32> to vector<16x16xf32>
    %165 = vector.shape_cast %162 : vector<16x16xf32> to vector<1x1x16x16xf32>
    tpu.vector_store %arg15[%c0_99, %c0_100, %c0_101, %c0_102], %165 {strides = array<i32>} : memref<1x2x16x16xf32, #tpu.memory_space<vmem>>, vector<1x1x16x16xf32>,
    %c0_103 = arith.constant 0 : index
    %c1_104 = arith.constant 1 : index
    %c0_105 = arith.constant 0 : index
    %c0_106 = arith.constant 0 : index
    %166 = vector.load %arg1[%c0_103, %c1_104, %c0_105, %c0_106] : memref<1x2x16x16xf32, #tpu.memory_space<vmem>>, vector<1x1x16x16xf32>
    %167 = vector.shape_cast %166 : vector<1x1x16x16xf32> to vector<16x16xf32>
    %cst_107 = arith.constant dense<0.000000e+00> : vector<16x16xf32>
    %168 = tpu.matmul %167, %114, %cst_107 {dimension_numbers = #tpu.dot_dimension_numbers<[1], [0], [0], [1], [0, 0, 1, 1], [], []>} : vector<16x16xf32>, vector<16x16xf32>, vector<16x16xf32> -> vector<16x16xf32>
    %cst_108 = arith.constant dense<0.000000e+00> : vector<16x16xf32>
    %169 = tpu.matmul %167, %115, %cst_108 {dimension_numbers = #tpu.dot_dimension_numbers<[1], [0], [0], [1], [0, 0, 1, 1], [], []>} : vector<16x16xf32>, vector<16x16xf32>, vector<16x16xf32> -> vector<16x16xf32>
    %cst_109 = arith.constant dense<0.000000e+00> : vector<16x16xf32>
    %170 = tpu.matmul %112, %168, %cst_109 {dimension_numbers = #tpu.dot_dimension_numbers<[1], [0], [0], [1], [0, 0, 1, 1], [], []>} : vector<16x16xf32>, vector<16x16xf32>, vector<16x16xf32> -> vector<16x16xf32>
    %cst_110 = arith.constant dense<0.000000e+00> : vector<16x16xf32>
    %171 = tpu.matmul %113, %169, %cst_110 {dimension_numbers = #tpu.dot_dimension_numbers<[1], [0], [0], [1], [0, 0, 1, 1], [], []>} : vector<16x16xf32>, vector<16x16xf32>, vector<16x16xf32> -> vector<16x16xf32>
    %172 = arith.subf %170, %171 : vector<16x16xf32>
    %cst_111 = arith.constant dense<0.000000e+00> : vector<16x16xf32>
    %173 = tpu.matmul %112, %169, %cst_111 {dimension_numbers = #tpu.dot_dimension_numbers<[1], [0], [0], [1], [0, 0, 1, 1], [], []>} : vector<16x16xf32>, vector<16x16xf32>, vector<16x16xf32> -> vector<16x16xf32>
    %cst_112 = arith.constant dense<0.000000e+00> : vector<16x16xf32>
    %174 = tpu.matmul %113, %168, %cst_112 {dimension_numbers = #tpu.dot_dimension_numbers<[1], [0], [0], [1], [0, 0, 1, 1], [], []>} : vector<16x16xf32>, vector<16x16xf32>, vector<16x16xf32> -> vector<16x16xf32>
    %175 = arith.addf %173, %174 : vector<16x16xf32>
    %c0_113 = arith.constant 0 : index
    %c1_114 = arith.constant 1 : index
    %c0_115 = arith.constant 0 : index
    %c0_116 = arith.constant 0 : index
    %176 = vector.load %arg2[%c0_113, %c1_114, %c0_115, %c0_116] : memref<1x2x16x16xf32, #tpu.memory_space<vmem>>, vector<1x1x16x16xf32>
    %177 = vector.shape_cast %176 : vector<1x1x16x16xf32> to vector<16x16xf32>
    %178 = arith.mulf %111, %172 : vector<16x16xf32>
    %179 = arith.addf %177, %178 : vector<16x16xf32>
    %c0_117 = arith.constant 0 : index
    %c1_118 = arith.constant 1 : index
    %c0_119 = arith.constant 0 : index
    %c0_120 = arith.constant 0 : index
    %180 = vector.load %arg3[%c0_117, %c1_118, %c0_119, %c0_120] : memref<1x2x16x16xf32, #tpu.memory_space<vmem>>, vector<1x1x16x16xf32>
    %181 = vector.shape_cast %180 : vector<1x1x16x16xf32> to vector<16x16xf32>
    %182 = arith.mulf %111, %175 : vector<16x16xf32>
    %183 = arith.addf %181, %182 : vector<16x16xf32>
    %c0_121 = arith.constant 0 : index
    %c1_122 = arith.constant 1 : index
    %c0_123 = arith.constant 0 : index
    %c0_124 = arith.constant 0 : index
    %184 = vector.load %arg4[%c0_121, %c1_122, %c0_123, %c0_124] : memref<1x2x16x16xf32, #tpu.memory_space<vmem>>, vector<1x1x16x16xf32>
    %185 = vector.shape_cast %184 : vector<1x1x16x16xf32> to vector<16x16xf32>
    %186 = arith.addf %185, %111 : vector<16x16xf32>
    %c0_125 = arith.constant 0 : index
    %c1_126 = arith.constant 1 : index
    %c0_127 = arith.constant 0 : index
    %c0_128 = arith.constant 0 : index
    %187 = vector.load %arg5[%c0_125, %c1_126, %c0_127, %c0_128] : memref<1x2x16x16xf32, #tpu.memory_space<vmem>>, vector<1x1x16x16xf32>
    %188 = vector.shape_cast %187 : vector<1x1x16x16xf32> to vector<16x16xf32>
    %189 = arith.mulf %186, %186 : vector<16x16xf32>
    %190 = arith.mulf %188, %188 : vector<16x16xf32>
    %191 = arith.addf %189, %190 : vector<16x16xf32>
    %cst_129 = arith.constant 1.000000e+00 : f32
    %192 = vector.broadcast %cst_129 : f32 to vector<16x16xf32>
    %193 = arith.divf %192, %191 : vector<16x16xf32>
    %194 = arith.mulf %179, %186 : vector<16x16xf32>
    %195 = arith.mulf %183, %188 : vector<16x16xf32>
    %196 = arith.addf %194, %195 : vector<16x16xf32>
    %197 = arith.mulf %196, %193 : vector<16x16xf32>
    %198 = arith.mulf %183, %186 : vector<16x16xf32>
    %199 = arith.mulf %179, %188 : vector<16x16xf32>
    %200 = arith.subf %198, %199 : vector<16x16xf32>
    %201 = arith.mulf %200, %193 : vector<16x16xf32>
    %cst_130 = arith.constant dense<0.000000e+00> : vector<16x16xf32>
    %202 = tpu.matmul %112, %197, %cst_130 {dimension_numbers = #tpu.dot_dimension_numbers<[1], [0], [0], [1], [0, 0, 1, 1], [], []>} : vector<16x16xf32>, vector<16x16xf32>, vector<16x16xf32> -> vector<16x16xf32>
    %cst_131 = arith.constant dense<0.000000e+00> : vector<16x16xf32>
    %203 = tpu.matmul %113, %201, %cst_131 {dimension_numbers = #tpu.dot_dimension_numbers<[1], [0], [0], [1], [0, 0, 1, 1], [], []>} : vector<16x16xf32>, vector<16x16xf32>, vector<16x16xf32> -> vector<16x16xf32>
    %204 = arith.addf %202, %203 : vector<16x16xf32>
    %cst_132 = arith.constant dense<0.000000e+00> : vector<16x16xf32>
    %205 = tpu.matmul %112, %201, %cst_132 {dimension_numbers = #tpu.dot_dimension_numbers<[1], [0], [0], [1], [0, 0, 1, 1], [], []>} : vector<16x16xf32>, vector<16x16xf32>, vector<16x16xf32> -> vector<16x16xf32>
    %cst_133 = arith.constant dense<0.000000e+00> : vector<16x16xf32>
    %206 = tpu.matmul %113, %197, %cst_133 {dimension_numbers = #tpu.dot_dimension_numbers<[1], [0], [0], [1], [0, 0, 1, 1], [], []>} : vector<16x16xf32>, vector<16x16xf32>, vector<16x16xf32> -> vector<16x16xf32>
    %207 = arith.subf %205, %206 : vector<16x16xf32>
    %cst_134 = arith.constant dense<0.000000e+00> : vector<16x16xf32>
    %208 = tpu.matmul %204, %114, %cst_134 {dimension_numbers = #tpu.dot_dimension_numbers<[1], [0], [0], [1], [0, 0, 1, 1], [], []>} : vector<16x16xf32>, vector<16x16xf32>, vector<16x16xf32> -> vector<16x16xf32>
    %cst_135 = arith.constant dense<0.000000e+00> : vector<16x16xf32>
    %209 = tpu.matmul %207, %115, %cst_135 {dimension_numbers = #tpu.dot_dimension_numbers<[1], [0], [0], [1], [0, 0, 1, 1], [], []>} : vector<16x16xf32>, vector<16x16xf32>, vector<16x16xf32> -> vector<16x16xf32>
    %210 = arith.addf %208, %209 : vector<16x16xf32>
    %cst_136 = arith.constant 3.906250e-03 : f32
    %211 = vector.broadcast %cst_136 : f32 to vector<16x16xf32>
    %212 = arith.mulf %210, %211 : vector<16x16xf32>
    %c0_137 = arith.constant 0 : index
    %c1_138 = arith.constant 1 : index
    %c0_139 = arith.constant 0 : index
    %c0_140 = arith.constant 0 : index
    %213 = vector.load %arg15[%c0_137, %c1_138, %c0_139, %c0_140] : memref<1x2x16x16xf32, #tpu.memory_space<vmem>>, vector<1x1x16x16xf32>
    %214 = vector.shape_cast %213 : vector<1x1x16x16xf32> to vector<16x16xf32>
    %215 = vector.shape_cast %212 : vector<16x16xf32> to vector<1x1x16x16xf32>
    tpu.vector_store %arg15[%c0_137, %c1_138, %c0_139, %c0_140], %215 {strides = array<i32>} : memref<1x2x16x16xf32, #tpu.memory_space<vmem>>, vector<1x1x16x16xf32>,
    return
  }
  func.func @transform_0(%arg0: i32) -> (i32, i32, i32, i32) {
    %c0_i32 = arith.constant 0 : i32
    %c0_i32_0 = arith.constant 0 : i32
    %c0_i32_1 = arith.constant 0 : i32
    %c0_i32_2 = arith.constant 0 : i32
    return %arg0, %c0_i32, %c0_i32_0, %c0_i32_1 : i32, i32, i32, i32
  }
  func.func @transform_1(%arg0: i32) -> (i32, i32, i32, i32) {
    %c0_i32 = arith.constant 0 : i32
    %c0_i32_0 = arith.constant 0 : i32
    %c0_i32_1 = arith.constant 0 : i32
    %c0_i32_2 = arith.constant 0 : i32
    return %arg0, %c0_i32, %c0_i32_0, %c0_i32_1 : i32, i32, i32, i32
  }
  func.func @transform_2(%arg0: i32) -> (i32, i32, i32, i32) {
    %c0_i32 = arith.constant 0 : i32
    %c0_i32_0 = arith.constant 0 : i32
    %c0_i32_1 = arith.constant 0 : i32
    %c0_i32_2 = arith.constant 0 : i32
    return %arg0, %c0_i32, %c0_i32_0, %c0_i32_1 : i32, i32, i32, i32
  }
  func.func @transform_3(%arg0: i32) -> (i32, i32, i32, i32) {
    %c0_i32 = arith.constant 0 : i32
    %c0_i32_0 = arith.constant 0 : i32
    %c0_i32_1 = arith.constant 0 : i32
    %c0_i32_2 = arith.constant 0 : i32
    return %arg0, %c0_i32, %c0_i32_0, %c0_i32_1 : i32, i32, i32, i32
  }
  func.func @transform_4(%arg0: i32) -> (i32, i32, i32, i32) {
    %c0_i32 = arith.constant 0 : i32
    %c0_i32_0 = arith.constant 0 : i32
    %c0_i32_1 = arith.constant 0 : i32
    %c0_i32_2 = arith.constant 0 : i32
    return %arg0, %c0_i32, %c0_i32_0, %c0_i32_1 : i32, i32, i32, i32
  }
  func.func @transform_5(%arg0: i32) -> (i32, i32, i32, i32) {
    %c0_i32 = arith.constant 0 : i32
    %c0_i32_0 = arith.constant 0 : i32
    %c0_i32_1 = arith.constant 0 : i32
    %c0_i32_2 = arith.constant 0 : i32
    return %arg0, %c0_i32, %c0_i32_0, %c0_i32_1 : i32, i32, i32, i32
  }
  func.func @transform_6(%arg0: i32) -> (i32, i32) {
    %c0_i32 = arith.constant 0 : i32
    %c0_i32_0 = arith.constant 0 : i32
    %c0_i32_1 = arith.constant 0 : i32
    return %c0_i32, %c0_i32_0 : i32, i32
  }
  func.func @transform_7(%arg0: i32) -> (i32, i32) {
    %c0_i32 = arith.constant 0 : i32
    %c0_i32_0 = arith.constant 0 : i32
    %c0_i32_1 = arith.constant 0 : i32
    return %c0_i32, %c0_i32_0 : i32, i32
  }
  func.func @transform_8(%arg0: i32) -> (i32, i32) {
    %c0_i32 = arith.constant 0 : i32
    %c0_i32_0 = arith.constant 0 : i32
    %c0_i32_1 = arith.constant 0 : i32
    return %c0_i32, %c0_i32_0 : i32, i32
  }
  func.func @transform_9(%arg0: i32) -> (i32, i32) {
    %c0_i32 = arith.constant 0 : i32
    %c0_i32_0 = arith.constant 0 : i32
    %c0_i32_1 = arith.constant 0 : i32
    return %c0_i32, %c0_i32_0 : i32, i32
  }
  func.func @transform_10(%arg0: i32) -> (i32, i32) {
    %c0_i32 = arith.constant 0 : i32
    %c0_i32_0 = arith.constant 0 : i32
    %c0_i32_1 = arith.constant 0 : i32
    return %c0_i32, %c0_i32_0 : i32, i32
  }
  func.func @transform_11(%arg0: i32) -> (i32, i32) {
    %c0_i32 = arith.constant 0 : i32
    %c0_i32_0 = arith.constant 0 : i32
    %c0_i32_1 = arith.constant 0 : i32
    return %c0_i32, %c0_i32_0 : i32, i32
  }
  func.func @transform_12(%arg0: i32) -> (i32, i32) {
    %c0_i32 = arith.constant 0 : i32
    %c0_i32_0 = arith.constant 0 : i32
    %c0_i32_1 = arith.constant 0 : i32
    return %c0_i32, %c0_i32_0 : i32, i32
  }
  func.func @transform_13(%arg0: i32) -> (i32, i32) {
    %c0_i32 = arith.constant 0 : i32
    %c0_i32_0 = arith.constant 0 : i32
    %c0_i32_1 = arith.constant 0 : i32
    return %c0_i32, %c0_i32_0 : i32, i32
  }
  func.func @transform_14(%arg0: i32) -> (i32, i32, i32, i32) {
    %c0_i32 = arith.constant 0 : i32
    %c0_i32_0 = arith.constant 0 : i32
    %c0_i32_1 = arith.constant 0 : i32
    %c0_i32_2 = arith.constant 0 : i32
    return %arg0, %c0_i32, %c0_i32_0, %c0_i32_1 : i32, i32, i32, i32
  }
}

</mosaic_0001>

<llo_original>
// kernel: tpu_custom_call.1
$region0: #{tpu_custom_call.1}
  #allocation0 [shape = 'u32[]', space=smem, size = 0x4, offset = 0x4, fixed_abs, tag = 'smem constant byte address 0x4 - core index']
  #allocation1 [shape = 'u32[144,128]{1,0:T(1,128)}', space=vmem, size = 0x12000, scoped, tag = 'internal scratch']
  #allocation2 [shape = 'f32[1,1]{1,0:T(1,128)S(6)}', space=smem, size = 0x200, scoped, tag = 'scoped memory for tpu_custom_call.1']
  %s0 = inlined_call_operand.hbm [shape: f32[2,2,16,16], index: 0, kind: input, shape index: {}]
  %s1 = inlined_call_operand.hbm [shape: f32[2,2,16,16], index: 1, kind: input, shape index: {}]
  %s2 = inlined_call_operand.hbm [shape: f32[2,2,16,16], index: 2, kind: input, shape index: {}]
  %s3 = inlined_call_operand.hbm [shape: f32[2,2,16,16], index: 3, kind: input, shape index: {}]
  %s4 = inlined_call_operand.hbm [shape: f32[2,2,16,16], index: 4, kind: input, shape index: {}]
  %s5 = inlined_call_operand.hbm [shape: f32[2,1,16,16], index: 5, kind: input, shape index: {}]
  %s6 = inlined_call_operand.vmem [shape: f32[1,8], index: 6, kind: input, shape index: {}]
  %s7 = inlined_call_operand.hbm [shape: f32[1,8], index: 7, kind: input, shape index: {}]
  %s8 = inlined_call_operand.hbm [shape: f32[1,8], index: 8, kind: input, shape index: {}]
  %s9 = inlined_call_operand.<no memory space> [shape: f32[1,1], index: 9, kind: input, shape index: {}]
  %s10 = inlined_call_operand.vmem [shape: f32[16,16], index: 10, kind: input, shape index: {}]
  %s11 = inlined_call_operand.vmem [shape: f32[16,16], index: 11, kind: input, shape index: {}]
  %s12 = inlined_call_operand.hbm [shape: f32[16,16], index: 12, kind: input, shape index: {}]
  %s13 = inlined_call_operand.vmem [shape: f32[16,16], index: 13, kind: input, shape index: {}]
  %s14 = inlined_call_operand.hbm [shape: f32[2,2,16,16], index: 14, kind: output, shape index: {}]
  %s15 = sld [smem:[#allocation0]]
  $region129: #{tpu_custom_call.1} parent=0
    _
  %s17 = ssub.s32 1, %s15
  %s18 = scalar_select 0, %s17, %s15
  %19 = sst [smem:[#allocation2]] %s9
  $region1: #{tpu_custom_call.1} parent=0
    #allocation3 [shape = 'u8[32768]{0}', space=vmem, size = 0x8000, scoped, tag = 'input window, operand 0']
    #allocation4 [shape = 's32[2]{0}', space=sflag, size = 0x8, scoped, tag = 'scoped memory for tpu_custom_call.1']
    #allocation5 [shape = 's32[2]{0}', space=sflag, size = 0x8, scoped, tag = 'scoped memory for tpu_custom_call.1']
    #allocation6 [shape = 's32[2]{0}', space=sflag, size = 0x8, scoped, tag = 'scoped memory for tpu_custom_call.1']
    #allocation7 [shape = 's32[2]{0}', space=sflag, size = 0x8, scoped, tag = 'scoped memory for tpu_custom_call.1']
    #allocation8 [shape = 'u8[32768]{0}', space=vmem, size = 0x8000, scoped, tag = 'input window, operand 1']
    #allocation9 [shape = 's32[2]{0}', space=sflag, size = 0x8, scoped, tag = 'scoped memory for tpu_custom_call.1']
    #allocation10 [shape = 'u8[32768]{0}', space=vmem, size = 0x8000, scoped, tag = 'input window, operand 2']
    #allocation11 [shape = 'u8[32768]{0}', space=vmem, size = 0x8000, scoped, tag = 'input window, operand 3']
    #allocation12 [shape = 's32[2]{0}', space=sflag, size = 0x8, scoped, tag = 'scoped memory for tpu_custom_call.1']
    #allocation13 [shape = 'u8[32768]{0}', space=vmem, size = 0x8000, scoped, tag = 'input window, operand 4']
    #allocation14 [shape = 'u8[16384]{0}', space=vmem, size = 0x4000, scoped, tag = 'input window, operand 5']
    #allocation15 [shape = 's32[2]{0}', space=sflag, size = 0x8, scoped, tag = 'scoped memory for tpu_custom_call.1']
    #allocation16 [shape = 'u8[512]{0}', space=smem, size = 0x200, scoped, tag = 'input window, operand 6, single buffered']
    #allocation17 [shape = 'u8[512]{0}', space=smem, size = 0x200, scoped, tag = 'input window, operand 7, single buffered']
    #allocation18 [shape = 'u8[512]{0}', space=smem, size = 0x200, scoped, tag = 'input window, operand 8, single buffered']
    #allocation19 [shape = 's32[1]{0}', space=sflag, size = 0x4, scoped, tag = 'scoped memory for tpu_custom_call.1']
    #allocation20 [shape = 'u8[8192]{0}', space=vmem, size = 0x2000, scoped, tag = 'input window, operand 12, single buffered']
    #allocation21 [shape = 'u8[32768]{0}', space=vmem, size = 0x8000, scoped, tag = 'output window, operand 0']
    %20 = vsyncpa [#allocation4], 0
    %s21 = scalar_lea.sflag [#allocation4], 1
    %22 = vsyncpa %s21, 0
    %23 = vsyncpa [#allocation9], 0
    %s24 = scalar_lea.sflag [#allocation9], 1
    %25 = vsyncpa %s24, 0
    %26 = vsyncpa [#allocation12], 0
    %s27 = scalar_lea.sflag [#allocation12], 1
    %28 = vsyncpa %s27, 0
    %29 = vsyncpa [#allocation15], 0
    %s30 = scalar_lea.sflag [#allocation15], 1
    %31 = vsyncpa %s30, 0
    %32 = vsyncpa [#allocation7], 0
    %33 = vsyncpa [#allocation6], 0
    %34 = vsyncpa [#allocation19], 0
    %35 = vsyncpa [#allocation5], 0
    %s36 = scalar_lea.sflag [#allocation5], 1
    %37 = vsyncpa %s36, 0
    loop: start=0, step=1, limit=4
    $region2: #{tpu_custom_call.1} parent=1 // loop_pre_header
      _
    $region3: #{tpu_custom_call.1} parent=1 // loop_header
      %s39 = sphi 0, %s43
      %p40 = scmp.ge.s32.totalorder %s39, 4
      %s49 = sphi 0, %s51
      %s52 = sphi 0, %s49
      %s53 = sphi 0, %s52
      %s69 = sphi 0, %s53
      %s75 = sphi 0, %s77
      %s78 = sphi 0, %s75
      %s79 = sphi 0, %s78
      %s95 = sphi 0, %s79
      %s101 = sphi 0, %s103
      %s104 = sphi 0, %s101
      %s105 = sphi 0, %s104
      %s121 = sphi 0, %s105
      %s127 = sphi 0, %s129
      %s130 = sphi 0, %s127
      %s131 = sphi 0, %s130
      %s147 = sphi 0, %s131
      %s153 = sphi 0, %s155
      %s156 = sphi 0, %s153
      %s157 = sphi 0, %s156
      %s173 = sphi 0, %s157
      %s179 = sphi 0, %s181
      %s182 = sphi 0, %s179
      %s183 = sphi 0, %s182
      %s199 = sphi 0, %s183
      %s203 = sphi 0, %s203
      %s205 = sphi 0, %s203
      %s206 = sphi 0, %s205
      %s220 = sphi 0, %s206
      %s224 = sphi 0, %s224
      %s226 = sphi 0, %s224
      %s227 = sphi 0, %s226
      %s241 = sphi 0, %s227
      %s245 = sphi 0, %s245
      %s247 = sphi 0, %s245
      %s248 = sphi 0, %s247
      %s262 = sphi 0, %s248
      %s266 = sphi 0, %s266
      %s268 = sphi 0, %s266
      %s269 = sphi 0, %s268
      %s283 = sphi 0, %s269
      %s287 = sphi 0, %s287
      %s289 = sphi 0, %s287
      %s290 = sphi 0, %s289
      %s304 = sphi 0, %s290
      %s308 = sphi 0, %s308
      %s310 = sphi 0, %s308
      %s311 = sphi 0, %s310
      %s325 = sphi 0, %s311
      %s329 = sphi 0, %s329
      %s331 = sphi 0, %s329
      %s332 = sphi 0, %s331
      %s346 = sphi 0, %s332
      %s350 = sphi 0, %s350
      %s352 = sphi 0, %s350
      %s353 = sphi 0, %s352
      %s367 = sphi 0, %s353
      %s373 = sphi 0, %s375
      %s376 = sphi 0, %s373
      %s377 = sphi 0, %s376
      %s393 = sphi 0, %s377
    $region4: #{tpu_custom_call.1} parent=1 // loop_header_branch
      %42 = sbr.rel (%p40) target = $region8
    $region5: #{tpu_custom_call.1} parent=1 // loop_body
      %s44 = ssub.s32 %s39, 1
      %s45 = ssub.s32 %s39, 2
      %s46 = sadd.s32 %s39, 1
      %s47 = ssub.s32 %s39, %s46
      %p48 = scmp.eq.s32.totalorder %s47, 0
      %s50 = sadd.s32 %s49, 1
      %s51 = scalar_select %p48, %s49, %s50
      %p54 = pneg %p48
      %p55 = scmp.eq.s32.totalorder %s39, 1
      %p56 = por %p54, %p55
      %p57 = scmp.ne.s32.totalorder %s49, %s52
      %p58 = scmp.eq.s32.totalorder %s39, 0
      %p59 = por %p57, %p58
      %p60 = scmp.ne.s32.totalorder %s49, %s52
      %p61 = scmp.eq.s32.totalorder %s44, 1
      %p62 = por %p60, %p61
      %p63 = scmp.ne.s32.totalorder %s52, %s53
      %p64 = scmp.eq.s32.totalorder %s44, 0
      %p65 = por %p63, %p64
      %p66 = scmp.ne.s32.totalorder %s52, %s53
      %p67 = scmp.eq.s32.totalorder %s45, 1
      %p68 = por %p66, %p67
      %p70 = scmp.ne.s32.totalorder %s53, %s69
      %p71 = scmp.eq.s32.totalorder %s45, 0
      %p72 = por %p70, %p71
      %s73 = ssub.s32 %s39, %s46
      %p74 = scmp.eq.s32.totalorder %s73, 0
      %s76 = sadd.s32 %s75, 1
      %s77 = scalar_select %p74, %s75, %s76
      %p80 = pneg %p74
      %p81 = scmp.eq.s32.totalorder %s39, 1
      %p82 = por %p80, %p81
      %p83 = scmp.ne.s32.totalorder %s75, %s78
      %p84 = scmp.eq.s32.totalorder %s39, 0
      %p85 = por %p83, %p84
      %p86 = scmp.ne.s32.totalorder %s75, %s78
      %p87 = scmp.eq.s32.totalorder %s44, 1
      %p88 = por %p86, %p87
      %p89 = scmp.ne.s32.totalorder %s78, %s79
      %p90 = scmp.eq.s32.totalorder %s44, 0
      %p91 = por %p89, %p90
      %p92 = scmp.ne.s32.totalorder %s78, %s79
      %p93 = scmp.eq.s32.totalorder %s45, 1
      %p94 = por %p92, %p93
      %p96 = scmp.ne.s32.totalorder %s79, %s95
      %p97 = scmp.eq.s32.totalorder %s45, 0
      %p98 = por %p96, %p97
      %s99 = ssub.s32 %s39, %s46
      %p100 = scmp.eq.s32.totalorder %s99, 0
      %s102 = sadd.s32 %s101, 1
      %s103 = scalar_select %p100, %s101, %s102
      %p106 = pneg %p100
      %p107 = scmp.eq.s32.totalorder %s39, 1
      %p108 = por %p106, %p107
      %p109 = scmp.ne.s32.totalorder %s101, %s104
      %p110 = scmp.eq.s32.totalorder %s39, 0
      %p111 = por %p109, %p110
      %p112 = scmp.ne.s32.totalorder %s101, %s104
      %p113 = scmp.eq.s32.totalorder %s44, 1
      %p114 = por %p112, %p113
      %p115 = scmp.ne.s32.totalorder %s104, %s105
      %p116 = scmp.eq.s32.totalorder %s44, 0
      %p117 = por %p115, %p116
      %p118 = scmp.ne.s32.totalorder %s104, %s105
      %p119 = scmp.eq.s32.totalorder %s45, 1
      %p120 = por %p118, %p119
      %p122 = scmp.ne.s32.totalorder %s105, %s121
      %p123 = scmp.eq.s32.totalorder %s45, 0
      %p124 = por %p122, %p123
      %s125 = ssub.s32 %s39, %s46
      %p126 = scmp.eq.s32.totalorder %s125, 0
      %s128 = sadd.s32 %s127, 1
      %s129 = scalar_select %p126, %s127, %s128
      %p132 = pneg %p126
      %p133 = scmp.eq.s32.totalorder %s39, 1
      %p134 = por %p132, %p133
      %p135 = scmp.ne.s32.totalorder %s127, %s130
      %p136 = scmp.eq.s32.totalorder %s39, 0
      %p137 = por %p135, %p136
      %p138 = scmp.ne.s32.totalorder %s127, %s130
      %p139 = scmp.eq.s32.totalorder %s44, 1
      %p140 = por %p138, %p139
      %p141 = scmp.ne.s32.totalorder %s130, %s131
      %p142 = scmp.eq.s32.totalorder %s44, 0
      %p143 = por %p141, %p142
      %p144 = scmp.ne.s32.totalorder %s130, %s131
      %p145 = scmp.eq.s32.totalorder %s45, 1
      %p146 = por %p144, %p145
      %p148 = scmp.ne.s32.totalorder %s131, %s147
      %p149 = scmp.eq.s32.totalorder %s45, 0
      %p150 = por %p148, %p149
      %s151 = ssub.s32 %s39, %s46
      %p152 = scmp.eq.s32.totalorder %s151, 0
      %s154 = sadd.s32 %s153, 1
      %s155 = scalar_select %p152, %s153, %s154
      %p158 = pneg %p152
      %p159 = scmp.eq.s32.totalorder %s39, 1
      %p160 = por %p158, %p159
      %p161 = scmp.ne.s32.totalorder %s153, %s156
      %p162 = scmp.eq.s32.totalorder %s39, 0
      %p163 = por %p161, %p162
      %p164 = scmp.ne.s32.totalorder %s153, %s156
      %p165 = scmp.eq.s32.totalorder %s44, 1
      %p166 = por %p164, %p165
      %p167 = scmp.ne.s32.totalorder %s156, %s157
      %p168 = scmp.eq.s32.totalorder %s44, 0
      %p169 = por %p167, %p168
      %p170 = scmp.ne.s32.totalorder %s156, %s157
      %p171 = scmp.eq.s32.totalorder %s45, 1
      %p172 = por %p170, %p171
      %p174 = scmp.ne.s32.totalorder %s157, %s173
      %p175 = scmp.eq.s32.totalorder %s45, 0
      %p176 = por %p174, %p175
      %s177 = ssub.s32 %s39, %s46
      %p178 = scmp.eq.s32.totalorder %s177, 0
      %s180 = sadd.s32 %s179, 1
      %s181 = scalar_select %p178, %s179, %s180
      %p184 = pneg %p178
      %p185 = scmp.eq.s32.totalorder %s39, 1
      %p186 = por %p184, %p185
      %p187 = scmp.ne.s32.totalorder %s179, %s182
      %p188 = scmp.eq.s32.totalorder %s39, 0
      %p189 = por %p187, %p188
      %p190 = scmp.ne.s32.totalorder %s179, %s182
      %p191 = scmp.eq.s32.totalorder %s44, 1
      %p192 = por %p190, %p191
      %p193 = scmp.ne.s32.totalorder %s182, %s183
      %p194 = scmp.eq.s32.totalorder %s44, 0
      %p195 = por %p193, %p194
      %p196 = scmp.ne.s32.totalorder %s182, %s183
      %p197 = scmp.eq.s32.totalorder %s45, 1
      %p198 = por %p196, %p197
      %p200 = scmp.ne.s32.totalorder %s183, %s199
      %p201 = scmp.eq.s32.totalorder %s45, 0
      %p202 = por %p200, %p201
      %s204 = sadd.s32 %s203, 1
      %p207 = scmp.eq.s32.totalorder %s39, 1
      %p208 = scmp.ne.s32.totalorder %s203, %s205
      %p209 = scmp.eq.s32.totalorder %s39, 0
      %p210 = por %p208, %p209
      %p211 = scmp.ne.s32.totalorder %s203, %s205
      %p212 = scmp.eq.s32.totalorder %s44, 1
      %p213 = por %p211, %p212
      %p214 = scmp.ne.s32.totalorder %s205, %s206
      %p215 = scmp.eq.s32.totalorder %s44, 0
      %p216 = por %p214, %p215
      %p217 = scmp.ne.s32.totalorder %s205, %s206
      %p218 = scmp.eq.s32.totalorder %s45, 1
      %p219 = por %p217, %p218
      %p221 = scmp.ne.s32.totalorder %s206, %s220
      %p222 = scmp.eq.s32.totalorder %s45, 0
      %p223 = por %p221, %p222
      %s225 = sadd.s32 %s224, 1
      %p228 = scmp.eq.s32.totalorder %s39, 1
      %p229 = scmp.ne.s32.totalorder %s224, %s226
      %p230 = scmp.eq.s32.totalorder %s39, 0
      %p231 = por %p229, %p230
      %p232 = scmp.ne.s32.totalorder %s224, %s226
      %p233 = scmp.eq.s32.totalorder %s44, 1
      %p234 = por %p232, %p233
      %p235 = scmp.ne.s32.totalorder %s226, %s227
      %p236 = scmp.eq.s32.totalorder %s44, 0
      %p237 = por %p235, %p236
      %p238 = scmp.ne.s32.totalorder %s226, %s227
      %p239 = scmp.eq.s32.totalorder %s45, 1
      %p240 = por %p238, %p239
      %p242 = scmp.ne.s32.totalorder %s227, %s241
      %p243 = scmp.eq.s32.totalorder %s45, 0
      %p244 = por %p242, %p243
      %s246 = sadd.s32 %s245, 1
      %p249 = scmp.eq.s32.totalorder %s39, 1
      %p250 = scmp.ne.s32.totalorder %s245, %s247
      %p251 = scmp.eq.s32.totalorder %s39, 0
      %p252 = por %p250, %p251
      %p253 = scmp.ne.s32.totalorder %s245, %s247
      %p254 = scmp.eq.s32.totalorder %s44, 1
      %p255 = por %p253, %p254
      %p256 = scmp.ne.s32.totalorder %s247, %s248
      %p257 = scmp.eq.s32.totalorder %s44, 0
      %p258 = por %p256, %p257
      %p259 = scmp.ne.s32.totalorder %s247, %s248
      %p260 = scmp.eq.s32.totalorder %s45, 1
      %p261 = por %p259, %p260
      %p263 = scmp.ne.s32.totalorder %s248, %s262
      %p264 = scmp.eq.s32.totalorder %s45, 0
      %p265 = por %p263, %p264
      %s267 = sadd.s32 %s266, 1
      %p270 = scmp.eq.s32.totalorder %s39, 1
      %p271 = scmp.ne.s32.totalorder %s266, %s268
      %p272 = scmp.eq.s32.totalorder %s39, 0
      %p273 = por %p271, %p272
      %p274 = scmp.ne.s32.totalorder %s266, %s268
      %p275 = scmp.eq.s32.totalorder %s44, 1
      %p276 = por %p274, %p275
      %p277 = scmp.ne.s32.totalorder %s268, %s269
      %p278 = scmp.eq.s32.totalorder %s44, 0
      %p279 = por %p277, %p278
      %p280 = scmp.ne.s32.totalorder %s268, %s269
      %p281 = scmp.eq.s32.totalorder %s45, 1
      %p282 = por %p280, %p281
      %p284 = scmp.ne.s32.totalorder %s269, %s283
      %p285 = scmp.eq.s32.totalorder %s45, 0
      %p286 = por %p284, %p285
      %s288 = sadd.s32 %s287, 1
      %p291 = scmp.eq.s32.totalorder %s39, 1
      %p292 = scmp.ne.s32.totalorder %s287, %s289
      %p293 = scmp.eq.s32.totalorder %s39, 0
      %p294 = por %p292, %p293
      %p295 = scmp.ne.s32.totalorder %s287, %s289
      %p296 = scmp.eq.s32.totalorder %s44, 1
      %p297 = por %p295, %p296
      %p298 = scmp.ne.s32.totalorder %s289, %s290
      %p299 = scmp.eq.s32.totalorder %s44, 0
      %p300 = por %p298, %p299
      %p301 = scmp.ne.s32.totalorder %s289, %s290
      %p302 = scmp.eq.s32.totalorder %s45, 1
      %p303 = por %p301, %p302
      %p305 = scmp.ne.s32.totalorder %s290, %s304
      %p306 = scmp.eq.s32.totalorder %s45, 0
      %p307 = por %p305, %p306
      %s309 = sadd.s32 %s308, 1
      %p312 = scmp.eq.s32.totalorder %s39, 1
      %p313 = scmp.ne.s32.totalorder %s308, %s310
      %p314 = scmp.eq.s32.totalorder %s39, 0
      %p315 = por %p313, %p314
      %p316 = scmp.ne.s32.totalorder %s308, %s310
      %p317 = scmp.eq.s32.totalorder %s44, 1
      %p318 = por %p316, %p317
      %p319 = scmp.ne.s32.totalorder %s310, %s311
      %p320 = scmp.eq.s32.totalorder %s44, 0
      %p321 = por %p319, %p320
      %p322 = scmp.ne.s32.totalorder %s310, %s311
      %p323 = scmp.eq.s32.totalorder %s45, 1
      %p324 = por %p322, %p323
      %p326 = scmp.ne.s32.totalorder %s311, %s325
      %p327 = scmp.eq.s32.totalorder %s45, 0
      %p328 = por %p326, %p327
      %s330 = sadd.s32 %s329, 1
      %p333 = scmp.eq.s32.totalorder %s39, 1
      %p334 = scmp.ne.s32.totalorder %s329, %s331
      %p335 = scmp.eq.s32.totalorder %s39, 0
      %p336 = por %p334, %p335
      %p337 = scmp.ne.s32.totalorder %s329, %s331
      %p338 = scmp.eq.s32.totalorder %s44, 1
      %p339 = por %p337, %p338
      %p340 = scmp.ne.s32.totalorder %s331, %s332
      %p341 = scmp.eq.s32.totalorder %s44, 0
      %p342 = por %p340, %p341
      %p343 = scmp.ne.s32.totalorder %s331, %s332
      %p344 = scmp.eq.s32.totalorder %s45, 1
      %p345 = por %p343, %p344
      %p347 = scmp.ne.s32.totalorder %s332, %s346
      %p348 = scmp.eq.s32.totalorder %s45, 0
      %p349 = por %p347, %p348
      %s351 = sadd.s32 %s350, 1
      %p354 = scmp.eq.s32.totalorder %s39, 1
      %p355 = scmp.ne.s32.totalorder %s350, %s352
      %p356 = scmp.eq.s32.totalorder %s39, 0
      %p357 = por %p355, %p356
      %p358 = scmp.ne.s32.totalorder %s350, %s352
      %p359 = scmp.eq.s32.totalorder %s44, 1
      %p360 = por %p358, %p359
      %p361 = scmp.ne.s32.totalorder %s352, %s353
      %p362 = scmp.eq.s32.totalorder %s44, 0
      %p363 = por %p361, %p362
      %p364 = scmp.ne.s32.totalorder %s352, %s353
      %p365 = scmp.eq.s32.totalorder %s45, 1
      %p366 = por %p364, %p365
      %p368 = scmp.ne.s32.totalorder %s353, %s367
      %p369 = scmp.eq.s32.totalorder %s45, 0
      %p370 = por %p368, %p369
      %s371 = ssub.s32 %s39, %s46
      %p372 = scmp.eq.s32.totalorder %s371, 0
      %s374 = sadd.s32 %s373, 1
      %s375 = scalar_select %p372, %s373, %s374
      %p378 = pneg %p372
      %p379 = scmp.eq.s32.totalorder %s39, 1
      %p380 = por %p378, %p379
      %p381 = scmp.ne.s32.totalorder %s373, %s376
      %p382 = scmp.eq.s32.totalorder %s39, 0
      %p383 = por %p381, %p382
      %p384 = scmp.ne.s32.totalorder %s373, %s376
      %p385 = scmp.eq.s32.totalorder %s44, 1
      %p386 = por %p384, %p385
      %p387 = scmp.ne.s32.totalorder %s376, %s377
      %p388 = scmp.eq.s32.totalorder %s44, 0
      %p389 = por %p387, %p388
      %p390 = scmp.ne.s32.totalorder %s376, %s377
      %p391 = scmp.eq.s32.totalorder %s45, 1
      %p392 = por %p390, %p391
      %p394 = scmp.ne.s32.totalorder %s377, %s393
      %p395 = scmp.eq.s32.totalorder %s45, 0
      %p396 = por %p394, %p395
      %p397 = scmp.le.s32.totalorder 1, %s39
      %p398 = scmp.lt.s32.totalorder %s39, 3
      %p399 = pnand %p397, %p398
      %p400 = pneg %p399
      // Predicated region
      $region9: #{tpu_custom_call.1} parent=5 // pred_check
        _
      $region10: #{tpu_custom_call.1} parent=5 // pred_check_branch
        %402 = sbr.rel (%p399) target = $region12
      $region11: #{tpu_custom_call.1} parent=5 // pred_region
        %s403 = ssub.s32 %s39, 1
        // Predicated region
        $region13: #{tpu_custom_call.1} parent=11 // pred_check
          %p404 = pneg %p216
        $region14: #{tpu_custom_call.1} parent=11 // pred_check_branch
          %406 = sbr.rel (%p404) target = $region16
        $region15: #{tpu_custom_call.1} parent=11 // pred_region
          %s408 = ssub.s32 16, 16
          %409 = vsyncadd [#allocation7], %s408
          %s411 = sshll.u32 %s6, 4
          %s412 = int_to_ptr.vmem [resolvable:$true] %s411
          %414 = dma.vmem_to_smem %s412, 16, [#allocation16], [#allocation7]
        $region16: #{tpu_custom_call.1} parent=11 // pred_fallthru
          _
        // Predicated region
        $region17: #{tpu_custom_call.1} parent=11 // pred_check
          %p415 = pneg %p237
        $region18: #{tpu_custom_call.1} parent=11 // pred_check_branch
          %417 = sbr.rel (%p415) target = $region20
        $region19: #{tpu_custom_call.1} parent=11 // pred_region
          %s419 = ssub.s32 16, 16
          %420 = vsyncadd [#allocation6], %s419
          %423 = dma.hbm_to_smem %s7, 16, [#allocation17], [#allocation6]
        $region20: #{tpu_custom_call.1} parent=11 // pred_fallthru
          _
        // Predicated region
        $region21: #{tpu_custom_call.1} parent=11 // pred_check
          %p424 = pneg %p258
        $region22: #{tpu_custom_call.1} parent=11 // pred_check_branch
          %426 = sbr.rel (%p424) target = $region24
        $region23: #{tpu_custom_call.1} parent=11 // pred_region
          %s428 = ssub.s32 16, 16
          %429 = vsyncadd [#allocation19], %s428
          %432 = dma.hbm_to_smem %s8, 16, [#allocation18], [#allocation19]
        $region24: #{tpu_custom_call.1} parent=11 // pred_fallthru
          _
        // Predicated region
        $region25: #{tpu_custom_call.1} parent=11 // pred_check
          %p433 = pneg %p279
        $region26: #{tpu_custom_call.1} parent=11 // pred_check_branch
          %435 = sbr.rel (%p433) target = $region28
        $region27: #{tpu_custom_call.1} parent=11 // pred_region
          _
        $region28: #{tpu_custom_call.1} parent=11 // pred_fallthru
          _
        // Predicated region
        $region29: #{tpu_custom_call.1} parent=11 // pred_check
          %p436 = pneg %p300
        $region30: #{tpu_custom_call.1} parent=11 // pred_check_branch
          %438 = sbr.rel (%p436) target = $region32
        $region31: #{tpu_custom_call.1} parent=11 // pred_region
          _
        $region32: #{tpu_custom_call.1} parent=11 // pred_fallthru
          _
        // Predicated region
        $region33: #{tpu_custom_call.1} parent=11 // pred_check
          %p439 = pneg %p321
        $region34: #{tpu_custom_call.1} parent=11 // pred_check_branch
          %441 = sbr.rel (%p439) target = $region36
        $region35: #{tpu_custom_call.1} parent=11 // pred_region
          _
        $region36: #{tpu_custom_call.1} parent=11 // pred_fallthru
          _
        // Predicated region
        $region37: #{tpu_custom_call.1} parent=11 // pred_check
          %p442 = pneg %p342
        $region38: #{tpu_custom_call.1} parent=11 // pred_check_branch
          %444 = sbr.rel (%p442) target = $region40
        $region39: #{tpu_custom_call.1} parent=11 // pred_region
          %s446 = ssub.s32 256, 256
          %447 = vsyncadd [#allocation15], %s446
          %s448 = sshll.u32 [#allocation20], 4
          %s449 = int_to_ptr.vmem [resolvable:$true] %s448
          %454 = dma.hbm_to_vmem [thread:$0]  %s12, 256, %s449, [#allocation15], 128, 128, 8
        $region40: #{tpu_custom_call.1} parent=11 // pred_fallthru
          _
        // Predicated region
        $region41: #{tpu_custom_call.1} parent=11 // pred_check
          %p455 = pneg %p363
        $region42: #{tpu_custom_call.1} parent=11 // pred_check_branch
          %457 = sbr.rel (%p455) target = $region44
        $region43: #{tpu_custom_call.1} parent=11 // pred_region
          _
        $region44: #{tpu_custom_call.1} parent=11 // pred_fallthru
          _
      $region12: #{tpu_custom_call.1} parent=5 // pred_fallthru
        _
      %p458 = scmp.lt.s32.totalorder %s39, 2
      // Predicated region
      $region45: #{tpu_custom_call.1} parent=5 // pred_check
        %p459 = pneg %p458
      $region46: #{tpu_custom_call.1} parent=5 // pred_check_branch
        %461 = sbr.rel (%p459) target = $region48
      $region47: #{tpu_custom_call.1} parent=5 // pred_region
        // Predicated region
        $region49: #{tpu_custom_call.1} parent=47 // pred_check
          %p462 = pneg %p59
        $region50: #{tpu_custom_call.1} parent=47 // pred_check_branch
          %464 = sbr.rel (%p462) target = $region52
        $region51: #{tpu_custom_call.1} parent=47 // pred_region
          %s465 = sand.u32 %s49, 1
          %s466 = scalar_lea.sflag [#allocation4], %s465
          %s467 = sand.u32 %s49, 1
          %s468 = smul.addr %s467, 32
          %s469 = scalar_lea.vmem [#allocation3], %s468
          %s471 = ssub.s32 512, 512
          %472 = vsyncadd %s466, %s471
          %s473 = smul.addr %s39, 4
          %s474 = smul.addr %s473, 128
          %s475 = scalar_lea.hbm %s0, %s474
          %s476 = sshll.u32 %s469, 4
          %s477 = int_to_ptr.vmem [resolvable:$true] %s476
          %482 = dma.hbm_to_vmem [thread:$0]  %s475, 512, %s477, %s466, 128, 128, 8
        $region52: #{tpu_custom_call.1} parent=47 // pred_fallthru
          _
        // Predicated region
        $region53: #{tpu_custom_call.1} parent=47 // pred_check
          %p483 = pneg %p85
        $region54: #{tpu_custom_call.1} parent=47 // pred_check_branch
          %485 = sbr.rel (%p483) target = $region56
        $region55: #{tpu_custom_call.1} parent=47 // pred_region
          %s486 = sand.u32 %s39, 1
          %s487 = scalar_lea.sflag [#allocation9], %s486
          %s488 = sand.u32 %s75, 1
          %s489 = smul.addr %s488, 32
          %s490 = scalar_lea.vmem [#allocation8], %s489
          %s492 = ssub.s32 512, 512
          %493 = vsyncadd %s487, %s492
          %s494 = smul.addr %s39, 4
          %s495 = smul.addr %s494, 128
          %s496 = scalar_lea.hbm %s1, %s495
          %s497 = sshll.u32 %s490, 4
          %s498 = int_to_ptr.vmem [resolvable:$true] %s497
          %503 = dma.hbm_to_vmem [thread:$0]  %s496, 512, %s498, %s487, 128, 128, 8
        $region56: #{tpu_custom_call.1} parent=47 // pred_fallthru
          _
        // Predicated region
        $region57: #{tpu_custom_call.1} parent=47 // pred_check
          %p504 = pneg %p111
        $region58: #{tpu_custom_call.1} parent=47 // pred_check_branch
          %506 = sbr.rel (%p504) target = $region60
        $region59: #{tpu_custom_call.1} parent=47 // pred_region
          %s507 = sand.u32 %s39, 1
          %s508 = scalar_lea.sflag [#allocation9], %s507
          %s509 = sand.u32 %s101, 1
          %s510 = smul.addr %s509, 32
          %s511 = scalar_lea.vmem [#allocation10], %s510
          %s513 = ssub.s32 512, 512
          %514 = vsyncadd %s508, %s513
          %s515 = smul.addr %s39, 4
          %s516 = smul.addr %s515, 128
          %s517 = scalar_lea.hbm %s2, %s516
          %s518 = sshll.u32 %s511, 4
          %s519 = int_to_ptr.vmem [resolvable:$true] %s518
          %524 = dma.hbm_to_vmem [thread:$0]  %s517, 512, %s519, %s508, 128, 128, 8
        $region60: #{tpu_custom_call.1} parent=47 // pred_fallthru
          _
        // Predicated region
        $region61: #{tpu_custom_call.1} parent=47 // pred_check
          %p525 = pneg %p137
        $region62: #{tpu_custom_call.1} parent=47 // pred_check_branch
          %527 = sbr.rel (%p525) target = $region64
        $region63: #{tpu_custom_call.1} parent=47 // pred_region
          %s528 = sand.u32 %s39, 1
          %s529 = scalar_lea.sflag [#allocation12], %s528
          %s530 = sand.u32 %s127, 1
          %s531 = smul.addr %s530, 32
          %s532 = scalar_lea.vmem [#allocation11], %s531
          %s534 = ssub.s32 512, 512
          %535 = vsyncadd %s529, %s534
          %s536 = smul.addr %s39, 4
          %s537 = smul.addr %s536, 128
          %s538 = scalar_lea.hbm %s3, %s537
          %s539 = sshll.u32 %s532, 4
          %s540 = int_to_ptr.vmem [resolvable:$true] %s539
          %545 = dma.hbm_to_vmem [thread:$0]  %s538, 512, %s540, %s529, 128, 128, 8
        $region64: #{tpu_custom_call.1} parent=47 // pred_fallthru
          _
        // Predicated region
        $region65: #{tpu_custom_call.1} parent=47 // pred_check
          %p546 = pneg %p163
        $region66: #{tpu_custom_call.1} parent=47 // pred_check_branch
          %548 = sbr.rel (%p546) target = $region68
        $region67: #{tpu_custom_call.1} parent=47 // pred_region
          %s549 = sand.u32 %s39, 1
          %s550 = scalar_lea.sflag [#allocation12], %s549
          %s551 = sand.u32 %s153, 1
          %s552 = smul.addr %s551, 32
          %s553 = scalar_lea.vmem [#allocation13], %s552
          %s555 = ssub.s32 512, 512
          %556 = vsyncadd %s550, %s555
          %s557 = smul.addr %s39, 4
          %s558 = smul.addr %s557, 128
          %s559 = scalar_lea.hbm %s4, %s558
          %s560 = sshll.u32 %s553, 4
          %s561 = int_to_ptr.vmem [resolvable:$true] %s560
          %566 = dma.hbm_to_vmem [thread:$0]  %s559, 512, %s561, %s550, 128, 128, 8
        $region68: #{tpu_custom_call.1} parent=47 // pred_fallthru
          _
        // Predicated region
        $region69: #{tpu_custom_call.1} parent=47 // pred_check
          %p567 = pneg %p189
        $region70: #{tpu_custom_call.1} parent=47 // pred_check_branch
          %569 = sbr.rel (%p567) target = $region72
        $region71: #{tpu_custom_call.1} parent=47 // pred_region
          %s570 = sand.u32 %s39, 1
          %s571 = scalar_lea.sflag [#allocation15], %s570
          %s572 = sand.u32 %s179, 1
          %s573 = smul.addr %s572, 16
          %s574 = scalar_lea.vmem [#allocation14], %s573
          %s576 = ssub.s32 256, 256
          %577 = vsyncadd %s571, %s576
          %s578 = smul.addr %s39, 2
          %s579 = smul.addr %s578, 128
          %s580 = scalar_lea.hbm %s5, %s579
          %s581 = sshll.u32 %s574, 4
          %s582 = int_to_ptr.vmem [resolvable:$true] %s581
          %587 = dma.hbm_to_vmem [thread:$0]  %s580, 256, %s582, %s571, 128, 128, 8
        $region72: #{tpu_custom_call.1} parent=47 // pred_fallthru
          _
      $region48: #{tpu_custom_call.1} parent=5 // pred_fallthru
        _
      %p588 = scmp.le.s32.totalorder 1, %s39
      %p589 = scmp.lt.s32.totalorder %s39, 3
      %p590 = pnand %p588, %p589
      %p591 = pneg %p590
      // Predicated region
      $region73: #{tpu_custom_call.1} parent=5 // pred_check
        _
      $region74: #{tpu_custom_call.1} parent=5 // pred_check_branch
        %593 = sbr.rel (%p590) target = $region76
      $region75: #{tpu_custom_call.1} parent=5 // pred_region
        %s594 = ssub.s32 %s39, 1
        %s595 = sand.u32 %s52, 1
        %s596 = scalar_lea.sflag [#allocation4], %s595
        %s597 = sand.u32 %s52, 1
        %s598 = smul.addr %s597, 32
        %s599 = scalar_lea.vmem [#allocation3], %s598
        // Predicated region
        $region77: #{tpu_custom_call.1} parent=75 // pred_check
          %p600 = pneg %p65
        $region78: #{tpu_custom_call.1} parent=75 // pred_check_branch
          %602 = sbr.rel (%p600) target = $region80
        $region79: #{tpu_custom_call.1} parent=75 // pred_region
          %603 = dma.done %s596, 512
        $region80: #{tpu_custom_call.1} parent=75 // pred_fallthru
          _
        %s604 = sand.u32 %s44, 1
        %s605 = scalar_lea.sflag [#allocation9], %s604
        %s606 = sand.u32 %s78, 1
        %s607 = smul.addr %s606, 32
        %s608 = scalar_lea.vmem [#allocation8], %s607
        // Predicated region
        $region81: #{tpu_custom_call.1} parent=75 // pred_check
          %p609 = pneg %p91
        $region82: #{tpu_custom_call.1} parent=75 // pred_check_branch
          %611 = sbr.rel (%p609) target = $region84
        $region83: #{tpu_custom_call.1} parent=75 // pred_region
          %612 = dma.done %s605, 512
        $region84: #{tpu_custom_call.1} parent=75 // pred_fallthru
          _
        %s613 = sand.u32 %s44, 1
        %s614 = scalar_lea.sflag [#allocation9], %s613
        %s615 = sand.u32 %s104, 1
        %s616 = smul.addr %s615, 32
        %s617 = scalar_lea.vmem [#allocation10], %s616
        // Predicated region
        $region85: #{tpu_custom_call.1} parent=75 // pred_check
          %p618 = pneg %p117
        $region86: #{tpu_custom_call.1} parent=75 // pred_check_branch
          %620 = sbr.rel (%p618) target = $region88
        $region87: #{tpu_custom_call.1} parent=75 // pred_region
          %621 = dma.done %s614, 512
        $region88: #{tpu_custom_call.1} parent=75 // pred_fallthru
          _
        %s622 = sand.u32 %s44, 1
        %s623 = scalar_lea.sflag [#allocation12], %s622
        %s624 = sand.u32 %s130, 1
        %s625 = smul.addr %s624, 32
        %s626 = scalar_lea.vmem [#allocation11], %s625
        // Predicated region
        $region89: #{tpu_custom_call.1} parent=75 // pred_check
          %p627 = pneg %p143
        $region90: #{tpu_custom_call.1} parent=75 // pred_check_branch
          %629 = sbr.rel (%p627) target = $region92
        $region91: #{tpu_custom_call.1} parent=75 // pred_region
          %630 = dma.done %s623, 512
        $region92: #{tpu_custom_call.1} parent=75 // pred_fallthru
          _
        %s631 = sand.u32 %s44, 1
        %s632 = scalar_lea.sflag [#allocation12], %s631
        %s633 = sand.u32 %s156, 1
        %s634 = smul.addr %s633, 32
        %s635 = scalar_lea.vmem [#allocation13], %s634
        // Predicated region
        $region93: #{tpu_custom_call.1} parent=75 // pred_check
          %p636 = pneg %p169
        $region94: #{tpu_custom_call.1} parent=75 // pred_check_branch
          %638 = sbr.rel (%p636) target = $region96
        $region95: #{tpu_custom_call.1} parent=75 // pred_region
          %639 = dma.done %s632, 512
        $region96: #{tpu_custom_call.1} parent=75 // pred_fallthru
          _
        %s640 = sand.u32 %s44, 1
        %s641 = scalar_lea.sflag [#allocation15], %s640
        %s642 = sand.u32 %s182, 1
        %s643 = smul.addr %s642, 16
        %s644 = scalar_lea.vmem [#allocation14], %s643
        // Predicated region
        $region97: #{tpu_custom_call.1} parent=75 // pred_check
          %p645 = pneg %p195
        $region98: #{tpu_custom_call.1} parent=75 // pred_check_branch
          %647 = sbr.rel (%p645) target = $region100
        $region99: #{tpu_custom_call.1} parent=75 // pred_region
          %648 = dma.done %s641, 256
        $region100: #{tpu_custom_call.1} parent=75 // pred_fallthru
          _
        // Predicated region
        $region101: #{tpu_custom_call.1} parent=75 // pred_check
          %p649 = pneg %p216
        $region102: #{tpu_custom_call.1} parent=75 // pred_check_branch
          %651 = sbr.rel (%p649) target = $region104
        $region103: #{tpu_custom_call.1} parent=75 // pred_region
          %652 = dma.done [#allocation7], 16
        $region104: #{tpu_custom_call.1} parent=75 // pred_fallthru
          _
        // Predicated region
        $region105: #{tpu_custom_call.1} parent=75 // pred_check
          %p653 = pneg %p237
        $region106: #{tpu_custom_call.1} parent=75 // pred_check_branch
          %655 = sbr.rel (%p653) target = $region108
        $region107: #{tpu_custom_call.1} parent=75 // pred_region
          %656 = dma.done [#allocation6], 16
        $region108: #{tpu_custom_call.1} parent=75 // pred_fallthru
          _
        // Predicated region
        $region109: #{tpu_custom_call.1} parent=75 // pred_check
          %p657 = pneg %p258
        $region110: #{tpu_custom_call.1} parent=75 // pred_check_branch
          %659 = sbr.rel (%p657) target = $region112
        $region111: #{tpu_custom_call.1} parent=75 // pred_region
          %660 = dma.done [#allocation19], 16
        $region112: #{tpu_custom_call.1} parent=75 // pred_fallthru
          _
        // Predicated region
        $region113: #{tpu_custom_call.1} parent=75 // pred_check
          %p661 = pneg %p342
        $region114: #{tpu_custom_call.1} parent=75 // pred_check_branch
          %663 = sbr.rel (%p661) target = $region116
        $region115: #{tpu_custom_call.1} parent=75 // pred_region
          %664 = dma.done [#allocation15], 256
        $region116: #{tpu_custom_call.1} parent=75 // pred_fallthru
          _
        %665 = sfence
        %s666 = sand.u32 %s52, 1
        %s667 = scalar_lea.sflag [#allocation4], %s666
        %s668 = sand.u32 %s52, 1
        %s669 = smul.addr %s668, 32
        %s670 = scalar_lea.vmem [#allocation3], %s669
        %p671 = pneg %p65
        %p672 = pneg %p62
        %s673 = sand.u32 %s44, 1
        %s674 = scalar_lea.sflag [#allocation9], %s673
        %s675 = sand.u32 %s78, 1
        %s676 = smul.addr %s675, 32
        %s677 = scalar_lea.vmem [#allocation8], %s676
        %p678 = pneg %p91
        %p679 = pneg %p88
        %s680 = sand.u32 %s44, 1
        %s681 = scalar_lea.sflag [#allocation9], %s680
        %s682 = sand.u32 %s104, 1
        %s683 = smul.addr %s682, 32
        %s684 = scalar_lea.vmem [#allocation10], %s683
        %p685 = pneg %p117
        %p686 = pneg %p114
        %s687 = sand.u32 %s44, 1
        %s688 = scalar_lea.sflag [#allocation12], %s687
        %s689 = sand.u32 %s130, 1
        %s690 = smul.addr %s689, 32
        %s691 = scalar_lea.vmem [#allocation11], %s690
        %p692 = pneg %p143
        %p693 = pneg %p140
        %s694 = sand.u32 %s44, 1
        %s695 = scalar_lea.sflag [#allocation12], %s694
        %s696 = sand.u32 %s156, 1
        %s697 = smul.addr %s696, 32
        %s698 = scalar_lea.vmem [#allocation13], %s697
        %p699 = pneg %p169
        %p700 = pneg %p166
        %s701 = sand.u32 %s44, 1
        %s702 = scalar_lea.sflag [#allocation15], %s701
        %s703 = sand.u32 %s182, 1
        %s704 = smul.addr %s703, 16
        %s705 = scalar_lea.vmem [#allocation14], %s704
        %p706 = pneg %p195
        %p707 = pneg %p192
        %p708 = pneg %p216
        %p709 = pneg %p213
        %p710 = pneg %p237
        %p711 = pneg %p234
        %p712 = pneg %p258
        %p713 = pneg %p255
        %p714 = pneg %p279
        %p715 = pneg %p276
        %p716 = pneg %p300
        %p717 = pneg %p297
        %p718 = pneg %p321
        %p719 = pneg %p318
        %p720 = pneg %p342
        %p721 = pneg %p339
        %p722 = pneg %p363
        %p723 = pneg %p360
        %p724 = pneg %p389
        %p725 = pneg %p386
        %s726 = sand.u32 %s376, 1
        %s727 = scalar_lea.sflag [#allocation5], %s726
        %s728 = sand.u32 %s376, 1
        %s729 = smul.addr %s728, 32
        %s730 = scalar_lea.vmem [#allocation21], %s729
        %v731 = vld [vmem:[%s644] sm:$0xff]
        %v732 = vld [vmem:[%s644 + $0x8] sm:$0xff]
        %s733 = sld [smem:[#allocation16]]
        %v734 = vstv %s733
        %v735 = vmul.f32 %v731, %v734
        %v736 = vmul.f32 %v732, %v734
        %s737 = sld [smem:[#allocation17]]
        %v738 = vstv %s737
        %v739 = vadd.f32 %v735, %v738
        %v740 = vadd.f32 %v736, %v738
        %v741 = vmax.f32 %v739, 0.0
        %v742 = vmax.f32 %v740, 0.0
        %s743 = sld [smem:[#allocation18]]
        %v744 = vstv %s743
        %v745 = vmul.f32 %v741, %v744
        %v746 = vmul.f32 %v742, %v744
        %v747 = vadd.f32 %v745, 0.0
        %v748 = vadd.f32 %v746, 0.0
        %s749 = sld [smem:[#allocation16 + $0x1]]
        %v750 = vstv %s749
        %v751 = vmul.f32 %v731, %v750
        %v752 = vmul.f32 %v732, %v750
        %s753 = sld [smem:[#allocation17 + $0x1]]
        %v754 = vstv %s753
        %v755 = vadd.f32 %v751, %v754
        %v756 = vadd.f32 %v752, %v754
        %v757 = vmax.f32 %v755, 0.0
        %v758 = vmax.f32 %v756, 0.0
        %s759 = sld [smem:[#allocation18 + $0x1]]
        %v760 = vstv %s759
        %v761 = vmul.f32 %v757, %v760
        %v762 = vmul.f32 %v758, %v760
        %v763 = vadd.f32 %v747, %v761
        %v764 = vadd.f32 %v748, %v762
        %s765 = sld [smem:[#allocation16 + $0x2]]
        %v766 = vstv %s765
        %v767 = vmul.f32 %v731, %v766
        %v768 = vmul.f32 %v732, %v766
        %s769 = sld [smem:[#allocation17 + $0x2]]
        %v770 = vstv %s769
        %v771 = vadd.f32 %v767, %v770
        %v772 = vadd.f32 %v768, %v770
        %v773 = vmax.f32 %v771, 0.0
        %v774 = vmax.f32 %v772, 0.0
        %s775 = sld [smem:[#allocation18 + $0x2]]
        %v776 = vstv %s775
        %v777 = vmul.f32 %v773, %v776
        %v778 = vmul.f32 %v774, %v776
        %v779 = vadd.f32 %v763, %v777
        %v780 = vadd.f32 %v764, %v778
        %s781 = sld [smem:[#allocation16 + $0x3]]
        %v782 = vstv %s781
        %v783 = vmul.f32 %v731, %v782
        %v784 = vmul.f32 %v732, %v782
        %s785 = sld [smem:[#allocation17 + $0x3]]
        %v786 = vstv %s785
        %v787 = vadd.f32 %v783, %v786
        %v788 = vadd.f32 %v784, %v786
        %v789 = vmax.f32 %v787, 0.0
        %v790 = vmax.f32 %v788, 0.0
        %s791 = sld [smem:[#allocation18 + $0x3]]
        %v792 = vstv %s791
        %v793 = vmul.f32 %v789, %v792
        %v794 = vmul.f32 %v790, %v792
        %v795 = vadd.f32 %v779, %v793
        %v796 = vadd.f32 %v780, %v794
        %s797 = sld [smem:[#allocation16 + $0x4]]
        %v798 = vstv %s797
        %v799 = vmul.f32 %v731, %v798
        %v800 = vmul.f32 %v732, %v798
        %s801 = sld [smem:[#allocation17 + $0x4]]
        %v802 = vstv %s801
        %v803 = vadd.f32 %v799, %v802
        %v804 = vadd.f32 %v800, %v802
        %v805 = vmax.f32 %v803, 0.0
        %v806 = vmax.f32 %v804, 0.0
        %s807 = sld [smem:[#allocation18 + $0x4]]
        %v808 = vstv %s807
        %v809 = vmul.f32 %v805, %v808
        %v810 = vmul.f32 %v806, %v808
        %v811 = vadd.f32 %v795, %v809
        %v812 = vadd.f32 %v796, %v810
        %s813 = sld [smem:[#allocation16 + $0x5]]
        %v814 = vstv %s813
        %v815 = vmul.f32 %v731, %v814
        %v816 = vmul.f32 %v732, %v814
        %s817 = sld [smem:[#allocation17 + $0x5]]
        %v818 = vstv %s817
        %v819 = vadd.f32 %v815, %v818
        %v820 = vadd.f32 %v816, %v818
        %v821 = vmax.f32 %v819, 0.0
        %v822 = vmax.f32 %v820, 0.0
        %s823 = sld [smem:[#allocation18 + $0x5]]
        %v824 = vstv %s823
        %v825 = vmul.f32 %v821, %v824
        %v826 = vmul.f32 %v822, %v824
        %v827 = vadd.f32 %v811, %v825
        %v828 = vadd.f32 %v812, %v826
        %s829 = sld [smem:[#allocation16 + $0x6]]
        %v830 = vstv %s829
        %v831 = vmul.f32 %v731, %v830
        %v832 = vmul.f32 %v732, %v830
        %s833 = sld [smem:[#allocation17 + $0x6]]
        %v834 = vstv %s833
        %v835 = vadd.f32 %v831, %v834
        %v836 = vadd.f32 %v832, %v834
        %v837 = vmax.f32 %v835, 0.0
        %v838 = vmax.f32 %v836, 0.0
        %s839 = sld [smem:[#allocation18 + $0x6]]
        %v840 = vstv %s839
        %v841 = vmul.f32 %v837, %v840
        %v842 = vmul.f32 %v838, %v840
        %v843 = vadd.f32 %v827, %v841
        %v844 = vadd.f32 %v828, %v842
        %s845 = sld [smem:[#allocation16 + $0x7]]
        %v846 = vstv %s845
        %v847 = vmul.f32 %v731, %v846
        %v848 = vmul.f32 %v732, %v846
        %s849 = sld [smem:[#allocation17 + $0x7]]
        %v850 = vstv %s849
        %v851 = vadd.f32 %v847, %v850
        %v852 = vadd.f32 %v848, %v850
        %v853 = vmax.f32 %v851, 0.0
        %v854 = vmax.f32 %v852, 0.0
        %s855 = sld [smem:[#allocation18 + $0x7]]
        %v856 = vstv %s855
        %v857 = vmul.f32 %v853, %v856
        %v858 = vmul.f32 %v854, %v856
        %v859 = vadd.f32 %v843, %v857
        %v860 = vadd.f32 %v844, %v858
        %s861 = sld [smem:[#allocation2]]
        %v862 = vstv %s861
        %v863 = vadd.f32 %v859, %v862
        %v864 = vadd.f32 %v860, %v862
        %v865 = vmax.f32 %v863, 0.0
        %v866 = vmax.f32 %v864, 0.0
        %v867 = vand.u32 2147483647, %v863
        %v868 = vand.u32 2147483647, %v864
        %v869 = vsub.f32 0.0, %v867
        %v870 = vsub.f32 0.0, %v868
        %v871 = vmul.f32 %v869, 1.442695
        %v872 = vpow.pop %v871
        %v873 = vmul.f32 %v870, 1.442695
        %v874 = vpow.pop %v873
        %v875 = vadd.f32 %v872, 1.0
        %v876 = vadd.f32 %v874, 1.0
        %v877 = vlog2.pop %v875
        %v878 = vmul.f32 %v877, 0.6931472
        %v879 = vlog2.pop %v876
        %v880 = vmul.f32 %v879, 0.6931472
        %v881 = vadd.f32 %v865, %v878
        %v882 = vadd.f32 %v866, %v880
        %v883 = vld [vmem:[%s10] sm:$0xff]
        %v884 = vld [vmem:[%s10 + $0x8] sm:$0xff]
        %v885 = vld [vmem:[%s11] sm:$0xff]
        %v886 = vld [vmem:[%s11 + $0x8] sm:$0xff]
        %v887 = vld [vmem:[#allocation20] sm:$0xff]
        %v888 = vld [vmem:[#allocation20 + $0x8] sm:$0xff]
        %v889 = vld [vmem:[%s13] sm:$0xff]
        %v890 = vld [vmem:[%s13 + $0x8] sm:$0xff]
        %v891 = vld [vmem:[%s599] sm:$0xff]
        %v892 = vld [vmem:[%s599 + $0x8] sm:$0xff]
        %vm893 = vcmask 130048
        %v895 = vsel %vm893, %v891, 0
        %v898 = vsel %vm893, %v892, 0
        %900 = vmatprep.subr.mxu0 0.0
        %901 = vmatpush1.msra.mxu0 %v887
        %902 = vmatprep.subr.mxu0 0.0
        %903 = vmatpush1.msra.mxu0 %v888
        %904 = vmatprep.subr.mxu0 0.0
        %905 = vmatpush1.msra.mxu0 0.0
        %906 = vmatprep.subr.mxu0 0.0
        %907 = vmatpush1.msra.mxu0 0.0
        %908 = vmatprep.subr.mxu0 0.0
        %909 = vmatpush1.msra.mxu0 0.0
        %910 = vmatprep.subr.mxu0 0.0
        %911 = vmatpush1.msra.mxu0 0.0
        %912 = vmatprep.subr.mxu0 0.0
        %913 = vmatpush1.msra.mxu0 0.0
        %914 = vmatprep.subr.mxu0 0.0
        %915 = vmatpush1.msra.mxu0 0.0
        %916 = vmatprep.subr.mxu0 0.0
        %917 = vmatpush1.msra.mxu0 0.0
        %918 = vmatprep.subr.mxu0 0.0
        %919 = vmatpush1.msra.mxu0 0.0
        %920 = vmatprep.subr.mxu0 0.0
        %921 = vmatpush1.msra.mxu0 0.0
        %922 = vmatprep.subr.mxu0 0.0
        %923 = vmatpush1.msra.mxu0 0.0
        %924 = vmatprep.subr.mxu0 0.0
        %925 = vmatpush1.msra.mxu0 0.0
        %926 = vmatprep.subr.mxu0 0.0
        %927 = vmatpush1.msra.mxu0 0.0
        %928 = vmatprep.subr.mxu0 0.0
        %929 = vmatpush1.msra.mxu0 0.0
        %930 = vmatprep.subr.mxu0 0.0
        %931 = vmatpush1.msra.mxu0 0.0
        %932 = vmatprep.subr.mxu0 0.0
        %933 = vmatpush1.msra.mxu0 0.0
        %934 = vmatprep.subr.mxu0 0.0
        %935 = vmatpush1.msra.mxu0 0.0
        %936 = vmatprep.subr.mxu0 0.0
        %937 = vmatpush1.msra.mxu0 0.0
        %938 = vmatprep.subr.mxu0 0.0
        %939 = vmatpush1.msra.mxu0 0.0
        %940 = vmatprep.subr.mxu0 0.0
        %941 = vmatpush1.msra.mxu0 0.0
        %942 = vmatprep.subr.mxu0 0.0
        %943 = vmatpush1.msra.mxu0 0.0
        %944 = vmatprep.subr.mxu0 0.0
        %945 = vmatpush1.msra.mxu0 0.0
        %946 = vmatprep.subr.mxu0 0.0
        %947 = vmatpush1.msra.mxu0 0.0
        %948 = vmatprep.subr.mxu0 0.0
        %949 = vmatpush1.msra.mxu0 0.0
        %950 = vmatprep.subr.mxu0 0.0
        %951 = vmatpush1.msra.mxu0 0.0
        %952 = vmatprep.subr.mxu0 0.0
        %953 = vmatpush1.msra.mxu0 0.0
        %954 = vmatprep.subr.mxu0 0.0
        %955 = vmatpush1.msra.mxu0 0.0
        %956 = vmatprep.subr.mxu0 0.0
        %957 = vmatpush1.msra.mxu0 0.0
        %958 = vmatprep.subr.mxu0 0.0
        %959 = vmatpush1.msra.mxu0 0.0
        %960 = vmatprep.subr.mxu0 0.0
        %961 = vmatpush1.msra.mxu0 0.0
        %962 = vmatprep.subr.mxu0 0.0
        %963 = vmatpush1.msra.mxu0 0.0
        %964 = vmatprep.mubr.f32.mxu0 0.0
        %965 = vmatmul.mubr.f32.gmra.mrb[0].mxu0 %v895
        %v966 = vpop.f32.mrb[0].mxu0
        %v967 = vadd.f32 0.0, %v966
        %v968 = vpop.f32.mrb[0].mxu0
        %969 = vmatprep.mubr.f32.mxu0 0.0
        %970 = vmatmul.mubr.f32.gmra.mrb[0].mxu0 %v898
        %v971 = vpop.f32.mrb[0].mxu0
        %v972 = vadd.f32 0.0, %v971
        %v973 = vpop.f32.mrb[0].mxu0
        %974 = vdwg.mxu0
        %975 = vmatprep.subr.mxu0 0.0
        %976 = vmatpush1.msra.mxu0 %v889
        %977 = vmatprep.subr.mxu0 0.0
        %978 = vmatpush1.msra.mxu0 %v890
        %979 = vmatprep.subr.mxu0 0.0
        %980 = vmatpush1.msra.mxu0 0.0
        %981 = vmatprep.subr.mxu0 0.0
        %982 = vmatpush1.msra.mxu0 0.0
        %983 = vmatprep.subr.mxu0 0.0
        %984 = vmatpush1.msra.mxu0 0.0
        %985 = vmatprep.subr.mxu0 0.0
        %986 = vmatpush1.msra.mxu0 0.0
        %987 = vmatprep.subr.mxu0 0.0
        %988 = vmatpush1.msra.mxu0 0.0
        %989 = vmatprep.subr.mxu0 0.0
        %990 = vmatpush1.msra.mxu0 0.0
        %991 = vmatprep.subr.mxu0 0.0
        %992 = vmatpush1.msra.mxu0 0.0
        %993 = vmatprep.subr.mxu0 0.0
        %994 = vmatpush1.msra.mxu0 0.0
        %995 = vmatprep.subr.mxu0 0.0
        %996 = vmatpush1.msra.mxu0 0.0
        %997 = vmatprep.subr.mxu0 0.0
        %998 = vmatpush1.msra.mxu0 0.0
        %999 = vmatprep.subr.mxu0 0.0
        %1000 = vmatpush1.msra.mxu0 0.0
        %1001 = vmatprep.subr.mxu0 0.0
        %1002 = vmatpush1.msra.mxu0 0.0
        %1003 = vmatprep.subr.mxu0 0.0
        %1004 = vmatpush1.msra.mxu0 0.0
        %1005 = vmatprep.subr.mxu0 0.0
        %1006 = vmatpush1.msra.mxu0 0.0
        %1007 = vmatprep.subr.mxu0 0.0
        %1008 = vmatpush1.msra.mxu0 0.0
        %1009 = vmatprep.subr.mxu0 0.0
        %1010 = vmatpush1.msra.mxu0 0.0
        %1011 = vmatprep.subr.mxu0 0.0
        %1012 = vmatpush1.msra.mxu0 0.0
        %1013 = vmatprep.subr.mxu0 0.0
        %1014 = vmatpush1.msra.mxu0 0.0
        %1015 = vmatprep.subr.mxu0 0.0
        %1016 = vmatpush1.msra.mxu0 0.0
        %1017 = vmatprep.subr.mxu0 0.0
        %1018 = vmatpush1.msra.mxu0 0.0
        %1019 = vmatprep.subr.mxu0 0.0
        %1020 = vmatpush1.msra.mxu0 0.0
        %1021 = vmatprep.subr.mxu0 0.0
        %1022 = vmatpush1.msra.mxu0 0.0
        %1023 = vmatprep.subr.mxu0 0.0
        %1024 = vmatpush1.msra.mxu0 0.0
        %1025 = vmatprep.subr.mxu0 0.0
        %1026 = vmatpush1.msra.mxu0 0.0
        %1027 = vmatprep.subr.mxu0 0.0
        %1028 = vmatpush1.msra.mxu0 0.0
        %1029 = vmatprep.subr.mxu0 0.0
        %1030 = vmatpush1.msra.mxu0 0.0
        %1031 = vmatprep.subr.mxu0 0.0
        %1032 = vmatpush1.msra.mxu0 0.0
        %1033 = vmatprep.subr.mxu0 0.0
        %1034 = vmatpush1.msra.mxu0 0.0
        %1035 = vmatprep.subr.mxu0 0.0
        %1036 = vmatpush1.msra.mxu0 0.0
        %1037 = vmatprep.subr.mxu0 0.0
        %1038 = vmatpush1.msra.mxu0 0.0
        %1039 = vmatprep.mubr.f32.mxu0 0.0
        %1040 = vmatmul.mubr.f32.gmra.mrb[0].mxu0 %v895
        %v1041 = vpop.f32.mrb[0].mxu0
        %v1042 = vadd.f32 0.0, %v1041
        %v1043 = vpop.f32.mrb[0].mxu0
        %1044 = vmatprep.mubr.f32.mxu0 0.0
        %1045 = vmatmul.mubr.f32.gmra.mrb[0].mxu0 %v898
        %v1046 = vpop.f32.mrb[0].mxu0
        %v1047 = vadd.f32 0.0, %v1046
        %v1048 = vpop.f32.mrb[0].mxu0
        %1049 = vdwg.mxu0
        %v1051 = vsel %vm893, %v883, 0
        %v1054 = vsel %vm893, %v884, 0
        %1056 = vmatprep.subr.mxu0 0.0
        %1057 = vmatpush1.msra.mxu0 %v967
        %1058 = vmatprep.subr.mxu0 0.0
        %1059 = vmatpush1.msra.mxu0 %v972
        %1060 = vmatprep.subr.mxu0 0.0
        %1061 = vmatpush1.msra.mxu0 0.0
        %1062 = vmatprep.subr.mxu0 0.0
        %1063 = vmatpush1.msra.mxu0 0.0
        %1064 = vmatprep.subr.mxu0 0.0
        %1065 = vmatpush1.msra.mxu0 0.0
        %1066 = vmatprep.subr.mxu0 0.0
        %1067 = vmatpush1.msra.mxu0 0.0
        %1068 = vmatprep.subr.mxu0 0.0
        %1069 = vmatpush1.msra.mxu0 0.0
        %1070 = vmatprep.subr.mxu0 0.0
        %1071 = vmatpush1.msra.mxu0 0.0
        %1072 = vmatprep.subr.mxu0 0.0
        %1073 = vmatpush1.msra.mxu0 0.0
        %1074 = vmatprep.subr.mxu0 0.0
        %1075 = vmatpush1.msra.mxu0 0.0
        %1076 = vmatprep.subr.mxu0 0.0
        %1077 = vmatpush1.msra.mxu0 0.0
        %1078 = vmatprep.subr.mxu0 0.0
        %1079 = vmatpush1.msra.mxu0 0.0
        %1080 = vmatprep.subr.mxu0 0.0
        %1081 = vmatpush1.msra.mxu0 0.0
        %1082 = vmatprep.subr.mxu0 0.0
        %1083 = vmatpush1.msra.mxu0 0.0
        %1084 = vmatprep.subr.mxu0 0.0
        %1085 = vmatpush1.msra.mxu0 0.0
        %1086 = vmatprep.subr.mxu0 0.0
        %1087 = vmatpush1.msra.mxu0 0.0
        %1088 = vmatprep.subr.mxu0 0.0
        %1089 = vmatpush1.msra.mxu0 0.0
        %1090 = vmatprep.subr.mxu0 0.0
        %1091 = vmatpush1.msra.mxu0 0.0
        %1092 = vmatprep.subr.mxu0 0.0
        %1093 = vmatpush1.msra.mxu0 0.0
        %1094 = vmatprep.subr.mxu0 0.0
        %1095 = vmatpush1.msra.mxu0 0.0
        %1096 = vmatprep.subr.mxu0 0.0
        %1097 = vmatpush1.msra.mxu0 0.0
        %1098 = vmatprep.subr.mxu0 0.0
        %1099 = vmatpush1.msra.mxu0 0.0
        %1100 = vmatprep.subr.mxu0 0.0
        %1101 = vmatpush1.msra.mxu0 0.0
        %1102 = vmatprep.subr.mxu0 0.0
        %1103 = vmatpush1.msra.mxu0 0.0
        %1104 = vmatprep.subr.mxu0 0.0
        %1105 = vmatpush1.msra.mxu0 0.0
        %1106 = vmatprep.subr.mxu0 0.0
        %1107 = vmatpush1.msra.mxu0 0.0
        %1108 = vmatprep.subr.mxu0 0.0
        %1109 = vmatpush1.msra.mxu0 0.0
        %1110 = vmatprep.subr.mxu0 0.0
        %1111 = vmatpush1.msra.mxu0 0.0
        %1112 = vmatprep.subr.mxu0 0.0
        %1113 = vmatpush1.msra.mxu0 0.0
        %1114 = vmatprep.subr.mxu0 0.0
        %1115 = vmatpush1.msra.mxu0 0.0
        %1116 = vmatprep.subr.mxu0 0.0
        %1117 = vmatpush1.msra.mxu0 0.0
        %1118 = vmatprep.subr.mxu0 0.0
        %1119 = vmatpush1.msra.mxu0 0.0
        %1120 = vmatprep.mubr.f32.mxu0 0.0
        %1121 = vmatmul.mubr.f32.gmra.mrb[0].mxu0 %v1051
        %v1122 = vpop.f32.mrb[0].mxu0
        %v1123 = vadd.f32 0.0, %v1122
        %v1124 = vpop.f32.mrb[0].mxu0
        %1125 = vmatprep.mubr.f32.mxu0 0.0
        %1126 = vmatmul.mubr.f32.gmra.mrb[0].mxu0 %v1054
        %v1127 = vpop.f32.mrb[0].mxu0
        %v1128 = vadd.f32 0.0, %v1127
        %v1129 = vpop.f32.mrb[0].mxu0
        %1130 = vdwg.mxu0
        %v1132 = vsel %vm893, %v885, 0
        %v1135 = vsel %vm893, %v886, 0
        %1137 = vmatprep.subr.mxu0 0.0
        %1138 = vmatpush1.msra.mxu0 %v1042
        %1139 = vmatprep.subr.mxu0 0.0
        %1140 = vmatpush1.msra.mxu0 %v1047
        %1141 = vmatprep.subr.mxu0 0.0
        %1142 = vmatpush1.msra.mxu0 0.0
        %1143 = vmatprep.subr.mxu0 0.0
        %1144 = vmatpush1.msra.mxu0 0.0
        %1145 = vmatprep.subr.mxu0 0.0
        %1146 = vmatpush1.msra.mxu0 0.0
        %1147 = vmatprep.subr.mxu0 0.0
        %1148 = vmatpush1.msra.mxu0 0.0
        %1149 = vmatprep.subr.mxu0 0.0
        %1150 = vmatpush1.msra.mxu0 0.0
        %1151 = vmatprep.subr.mxu0 0.0
        %1152 = vmatpush1.msra.mxu0 0.0
        %1153 = vmatprep.subr.mxu0 0.0
        %1154 = vmatpush1.msra.mxu0 0.0
        %1155 = vmatprep.subr.mxu0 0.0
        %1156 = vmatpush1.msra.mxu0 0.0
        %1157 = vmatprep.subr.mxu0 0.0
        %1158 = vmatpush1.msra.mxu0 0.0
        %1159 = vmatprep.subr.mxu0 0.0
        %1160 = vmatpush1.msra.mxu0 0.0
        %1161 = vmatprep.subr.mxu0 0.0
        %1162 = vmatpush1.msra.mxu0 0.0
        %1163 = vmatprep.subr.mxu0 0.0
        %1164 = vmatpush1.msra.mxu0 0.0
        %1165 = vmatprep.subr.mxu0 0.0
        %1166 = vmatpush1.msra.mxu0 0.0
        %1167 = vmatprep.subr.mxu0 0.0
        %1168 = vmatpush1.msra.mxu0 0.0
        %1169 = vmatprep.subr.mxu0 0.0
        %1170 = vmatpush1.msra.mxu0 0.0
        %1171 = vmatprep.subr.mxu0 0.0
        %1172 = vmatpush1.msra.mxu0 0.0
        %1173 = vmatprep.subr.mxu0 0.0
        %1174 = vmatpush1.msra.mxu0 0.0
        %1175 = vmatprep.subr.mxu0 0.0
        %1176 = vmatpush1.msra.mxu0 0.0
        %1177 = vmatprep.subr.mxu0 0.0
        %1178 = vmatpush1.msra.mxu0 0.0
        %1179 = vmatprep.subr.mxu0 0.0
        %1180 = vmatpush1.msra.mxu0 0.0
        %1181 = vmatprep.subr.mxu0 0.0
        %1182 = vmatpush1.msra.mxu0 0.0
        %1183 = vmatprep.subr.mxu0 0.0
        %1184 = vmatpush1.msra.mxu0 0.0
        %1185 = vmatprep.subr.mxu0 0.0
        %1186 = vmatpush1.msra.mxu0 0.0
        %1187 = vmatprep.subr.mxu0 0.0
        %1188 = vmatpush1.msra.mxu0 0.0
        %1189 = vmatprep.subr.mxu0 0.0
        %1190 = vmatpush1.msra.mxu0 0.0
        %1191 = vmatprep.subr.mxu0 0.0
        %1192 = vmatpush1.msra.mxu0 0.0
        %1193 = vmatprep.subr.mxu0 0.0
        %1194 = vmatpush1.msra.mxu0 0.0
        %1195 = vmatprep.subr.mxu0 0.0
        %1196 = vmatpush1.msra.mxu0 0.0
        %1197 = vmatprep.subr.mxu0 0.0
        %1198 = vmatpush1.msra.mxu0 0.0
        %1199 = vmatprep.subr.mxu0 0.0
        %1200 = vmatpush1.msra.mxu0 0.0
        %1201 = vmatprep.mubr.f32.mxu0 0.0
        %1202 = vmatmul.mubr.f32.gmra.mrb[0].mxu0 %v1132
        %v1203 = vpop.f32.mrb[0].mxu0
        %v1204 = vadd.f32 0.0, %v1203
        %v1205 = vpop.f32.mrb[0].mxu0
        %1206 = vmatprep.mubr.f32.mxu0 0.0
        %1207 = vmatmul.mubr.f32.gmra.mrb[0].mxu0 %v1135
        %v1208 = vpop.f32.mrb[0].mxu0
        %v1209 = vadd.f32 0.0, %v1208
        %v1210 = vpop.f32.mrb[0].mxu0
        %1211 = vdwg.mxu0
        %v1212 = vsub.f32 %v1123, %v1204
        %v1213 = vsub.f32 %v1128, %v1209
        %1214 = vmatprep.subr.mxu0 0.0
        %1215 = vmatpush1.msra.mxu0 %v967
        %1216 = vmatprep.subr.mxu0 0.0
        %1217 = vmatpush1.msra.mxu0 %v972
        %1218 = vmatprep.subr.mxu0 0.0
        %1219 = vmatpush1.msra.mxu0 0.0
        %1220 = vmatprep.subr.mxu0 0.0
        %1221 = vmatpush1.msra.mxu0 0.0
        %1222 = vmatprep.subr.mxu0 0.0
        %1223 = vmatpush1.msra.mxu0 0.0
        %1224 = vmatprep.subr.mxu0 0.0
        %1225 = vmatpush1.msra.mxu0 0.0
        %1226 = vmatprep.subr.mxu0 0.0
        %1227 = vmatpush1.msra.mxu0 0.0
        %1228 = vmatprep.subr.mxu0 0.0
        %1229 = vmatpush1.msra.mxu0 0.0
        %1230 = vmatprep.subr.mxu0 0.0
        %1231 = vmatpush1.msra.mxu0 0.0
        %1232 = vmatprep.subr.mxu0 0.0
        %1233 = vmatpush1.msra.mxu0 0.0
        %1234 = vmatprep.subr.mxu0 0.0
        %1235 = vmatpush1.msra.mxu0 0.0
        %1236 = vmatprep.subr.mxu0 0.0
        %1237 = vmatpush1.msra.mxu0 0.0
        %1238 = vmatprep.subr.mxu0 0.0
        %1239 = vmatpush1.msra.mxu0 0.0
        %1240 = vmatprep.subr.mxu0 0.0
        %1241 = vmatpush1.msra.mxu0 0.0
        %1242 = vmatprep.subr.mxu0 0.0
        %1243 = vmatpush1.msra.mxu0 0.0
        %1244 = vmatprep.subr.mxu0 0.0
        %1245 = vmatpush1.msra.mxu0 0.0
        %1246 = vmatprep.subr.mxu0 0.0
        %1247 = vmatpush1.msra.mxu0 0.0
        %1248 = vmatprep.subr.mxu0 0.0
        %1249 = vmatpush1.msra.mxu0 0.0
        %1250 = vmatprep.subr.mxu0 0.0
        %1251 = vmatpush1.msra.mxu0 0.0
        %1252 = vmatprep.subr.mxu0 0.0
        %1253 = vmatpush1.msra.mxu0 0.0
        %1254 = vmatprep.subr.mxu0 0.0
        %1255 = vmatpush1.msra.mxu0 0.0
        %1256 = vmatprep.subr.mxu0 0.0
        %1257 = vmatpush1.msra.mxu0 0.0
        %1258 = vmatprep.subr.mxu0 0.0
        %1259 = vmatpush1.msra.mxu0 0.0
        %1260 = vmatprep.subr.mxu0 0.0
        %1261 = vmatpush1.msra.mxu0 0.0
        %1262 = vmatprep.subr.mxu0 0.0
        %1263 = vmatpush1.msra.mxu0 0.0
        %1264 = vmatprep.subr.mxu0 0.0
        %1265 = vmatpush1.msra.mxu0 0.0
        %1266 = vmatprep.subr.mxu0 0.0
        %1267 = vmatpush1.msra.mxu0 0.0
        %1268 = vmatprep.subr.mxu0 0.0
        %1269 = vmatpush1.msra.mxu0 0.0
        %1270 = vmatprep.subr.mxu0 0.0
        %1271 = vmatpush1.msra.mxu0 0.0
        %1272 = vmatprep.subr.mxu0 0.0
        %1273 = vmatpush1.msra.mxu0 0.0
        %1274 = vmatprep.subr.mxu0 0.0
        %1275 = vmatpush1.msra.mxu0 0.0
        %1276 = vmatprep.subr.mxu0 0.0
        %1277 = vmatpush1.msra.mxu0 0.0
        %1278 = vmatprep.mubr.f32.mxu0 0.0
        %1279 = vmatmul.mubr.f32.gmra.mrb[0].mxu0 %v1132
        %v1280 = vpop.f32.mrb[0].mxu0
        %v1281 = vadd.f32 0.0, %v1280
        %v1282 = vpop.f32.mrb[0].mxu0
        %1283 = vmatprep.mubr.f32.mxu0 0.0
        %1284 = vmatmul.mubr.f32.gmra.mrb[0].mxu0 %v1135
        %v1285 = vpop.f32.mrb[0].mxu0
        %v1286 = vadd.f32 0.0, %v1285
        %v1287 = vpop.f32.mrb[0].mxu0
        %1288 = vdwg.mxu0
        %1289 = vmatprep.subr.mxu0 0.0
        %1290 = vmatpush1.msra.mxu0 %v1042
        %1291 = vmatprep.subr.mxu0 0.0
        %1292 = vmatpush1.msra.mxu0 %v1047
        %1293 = vmatprep.subr.mxu0 0.0
        %1294 = vmatpush1.msra.mxu0 0.0
        %1295 = vmatprep.subr.mxu0 0.0
        %1296 = vmatpush1.msra.mxu0 0.0
        %1297 = vmatprep.subr.mxu0 0.0
        %1298 = vmatpush1.msra.mxu0 0.0
        %1299 = vmatprep.subr.mxu0 0.0
        %1300 = vmatpush1.msra.mxu0 0.0
        %1301 = vmatprep.subr.mxu0 0.0
        %1302 = vmatpush1.msra.mxu0 0.0
        %1303 = vmatprep.subr.mxu0 0.0
        %1304 = vmatpush1.msra.mxu0 0.0
        %1305 = vmatprep.subr.mxu0 0.0
        %1306 = vmatpush1.msra.mxu0 0.0
        %1307 = vmatprep.subr.mxu0 0.0
        %1308 = vmatpush1.msra.mxu0 0.0
        %1309 = vmatprep.subr.mxu0 0.0
        %1310 = vmatpush1.msra.mxu0 0.0
        %1311 = vmatprep.subr.mxu0 0.0
        %1312 = vmatpush1.msra.mxu0 0.0
        %1313 = vmatprep.subr.mxu0 0.0
        %1314 = vmatpush1.msra.mxu0 0.0
        %1315 = vmatprep.subr.mxu0 0.0
        %1316 = vmatpush1.msra.mxu0 0.0
        %1317 = vmatprep.subr.mxu0 0.0
        %1318 = vmatpush1.msra.mxu0 0.0
        %1319 = vmatprep.subr.mxu0 0.0
        %1320 = vmatpush1.msra.mxu0 0.0
        %1321 = vmatprep.subr.mxu0 0.0
        %1322 = vmatpush1.msra.mxu0 0.0
        %1323 = vmatprep.subr.mxu0 0.0
        %1324 = vmatpush1.msra.mxu0 0.0
        %1325 = vmatprep.subr.mxu0 0.0
        %1326 = vmatpush1.msra.mxu0 0.0
        %1327 = vmatprep.subr.mxu0 0.0
        %1328 = vmatpush1.msra.mxu0 0.0
        %1329 = vmatprep.subr.mxu0 0.0
        %1330 = vmatpush1.msra.mxu0 0.0
        %1331 = vmatprep.subr.mxu0 0.0
        %1332 = vmatpush1.msra.mxu0 0.0
        %1333 = vmatprep.subr.mxu0 0.0
        %1334 = vmatpush1.msra.mxu0 0.0
        %1335 = vmatprep.subr.mxu0 0.0
        %1336 = vmatpush1.msra.mxu0 0.0
        %1337 = vmatprep.subr.mxu0 0.0
        %1338 = vmatpush1.msra.mxu0 0.0
        %1339 = vmatprep.subr.mxu0 0.0
        %1340 = vmatpush1.msra.mxu0 0.0
        %1341 = vmatprep.subr.mxu0 0.0
        %1342 = vmatpush1.msra.mxu0 0.0
        %1343 = vmatprep.subr.mxu0 0.0
        %1344 = vmatpush1.msra.mxu0 0.0
        %1345 = vmatprep.subr.mxu0 0.0
        %1346 = vmatpush1.msra.mxu0 0.0
        %1347 = vmatprep.subr.mxu0 0.0
        %1348 = vmatpush1.msra.mxu0 0.0
        %1349 = vmatprep.subr.mxu0 0.0
        %1350 = vmatpush1.msra.mxu0 0.0
        %1351 = vmatprep.subr.mxu0 0.0
        %1352 = vmatpush1.msra.mxu0 0.0
        %1353 = vmatprep.mubr.f32.mxu0 0.0
        %1354 = vmatmul.mubr.f32.gmra.mrb[0].mxu0 %v1051
        %v1355 = vpop.f32.mrb[0].mxu0
        %v1356 = vadd.f32 %v1281, %v1355
        %v1357 = vpop.f32.mrb[0].mxu0
        %1358 = vmatprep.mubr.f32.mxu0 0.0
        %1359 = vmatmul.mubr.f32.gmra.mrb[0].mxu0 %v1054
        %v1360 = vpop.f32.mrb[0].mxu0
        %v1361 = vadd.f32 %v1286, %v1360
        %v1362 = vpop.f32.mrb[0].mxu0
        %1363 = vdwg.mxu0
        %v1364 = vld [vmem:[%s608] sm:$0xff]
        %v1365 = vld [vmem:[%s608 + $0x8] sm:$0xff]
        %v1366 = vmul.f32 %v881, %v1212
        %v1367 = vmul.f32 %v882, %v1213
        %v1368 = vadd.f32 %v1364, %v1366
        %v1369 = vadd.f32 %v1365, %v1367
        %v1370 = vld [vmem:[%s617] sm:$0xff]
        %v1371 = vld [vmem:[%s617 + $0x8] sm:$0xff]
        %v1372 = vmul.f32 %v881, %v1356
        %v1373 = vmul.f32 %v882, %v1361
        %v1374 = vadd.f32 %v1370, %v1372
        %v1375 = vadd.f32 %v1371, %v1373
        %v1376 = vld [vmem:[%s626] sm:$0xff]
        %v1377 = vld [vmem:[%s626 + $0x8] sm:$0xff]
        %v1378 = vadd.f32 %v1376, %v881
        %v1379 = vadd.f32 %v1377, %v882
        %v1380 = vld [vmem:[%s635] sm:$0xff]
        %v1381 = vld [vmem:[%s635 + $0x8] sm:$0xff]
        %v1382 = vmul.f32 %v1378, %v1378
        %v1383 = vmul.f32 %v1379, %v1379
        %v1384 = vmul.f32 %v1380, %v1380
        %v1385 = vmul.f32 %v1381, %v1381
        %v1386 = vadd.f32 %v1382, %v1384
        %v1387 = vadd.f32 %v1383, %v1385
        %v1388 = vrcp.pop %v1386
        %v1389 = vmul.f32 1.0, %v1388
        %v1390 = vrcp.pop %v1387
        %v1391 = vmul.f32 1.0, %v1390
        %v1392 = vmul.f32 %v1368, %v1378
        %v1393 = vmul.f32 %v1369, %v1379
        %v1394 = vmul.f32 %v1374, %v1380
        %v1395 = vmul.f32 %v1375, %v1381
        %v1396 = vadd.f32 %v1392, %v1394
        %v1397 = vadd.f32 %v1393, %v1395
        %v1398 = vmul.f32 %v1396, %v1389
        %v1399 = vmul.f32 %v1397, %v1391
        %v1400 = vmul.f32 %v1374, %v1378
        %v1401 = vmul.f32 %v1375, %v1379
        %v1402 = vmul.f32 %v1368, %v1380
        %v1403 = vmul.f32 %v1369, %v1381
        %v1404 = vsub.f32 %v1400, %v1402
        %v1405 = vsub.f32 %v1401, %v1403
        %v1406 = vmul.f32 %v1404, %v1389
        %v1407 = vmul.f32 %v1405, %v1391
        %1408 = vmatprep.subr.mxu0 0.0
        %1409 = vmatpush1.msra.mxu0 %v1406
        %1410 = vmatprep.subr.mxu0 0.0
        %1411 = vmatpush1.msra.mxu0 %v1407
        %1412 = vmatprep.subr.mxu0 0.0
        %1413 = vmatpush1.msra.mxu0 0.0
        %1414 = vmatprep.subr.mxu0 0.0
        %1415 = vmatpush1.msra.mxu0 0.0
        %1416 = vmatprep.subr.mxu0 0.0
        %1417 = vmatpush1.msra.mxu0 0.0
        %1418 = vmatprep.subr.mxu0 0.0
        %1419 = vmatpush1.msra.mxu0 0.0
        %1420 = vmatprep.subr.mxu0 0.0
        %1421 = vmatpush1.msra.mxu0 0.0
        %1422 = vmatprep.subr.mxu0 0.0
        %1423 = vmatpush1.msra.mxu0 0.0
        %1424 = vmatprep.subr.mxu0 0.0
        %1425 = vmatpush1.msra.mxu0 0.0
        %1426 = vmatprep.subr.mxu0 0.0
        %1427 = vmatpush1.msra.mxu0 0.0
        %1428 = vmatprep.subr.mxu0 0.0
        %1429 = vmatpush1.msra.mxu0 0.0
        %1430 = vmatprep.subr.mxu0 0.0
        %1431 = vmatpush1.msra.mxu0 0.0
        %1432 = vmatprep.subr.mxu0 0.0
        %1433 = vmatpush1.msra.mxu0 0.0
        %1434 = vmatprep.subr.mxu0 0.0
        %1435 = vmatpush1.msra.mxu0 0.0
        %1436 = vmatprep.subr.mxu0 0.0
        %1437 = vmatpush1.msra.mxu0 0.0
        %1438 = vmatprep.subr.mxu0 0.0
        %1439 = vmatpush1.msra.mxu0 0.0
        %1440 = vmatprep.subr.mxu0 0.0
        %1441 = vmatpush1.msra.mxu0 0.0
        %1442 = vmatprep.subr.mxu0 0.0
        %1443 = vmatpush1.msra.mxu0 0.0
        %1444 = vmatprep.subr.mxu0 0.0
        %1445 = vmatpush1.msra.mxu0 0.0
        %1446 = vmatprep.subr.mxu0 0.0
        %1447 = vmatpush1.msra.mxu0 0.0
        %1448 = vmatprep.subr.mxu0 0.0
        %1449 = vmatpush1.msra.mxu0 0.0
        %1450 = vmatprep.subr.mxu0 0.0
        %1451 = vmatpush1.msra.mxu0 0.0
        %1452 = vmatprep.subr.mxu0 0.0
        %1453 = vmatpush1.msra.mxu0 0.0
        %1454 = vmatprep.subr.mxu0 0.0
        %1455 = vmatpush1.msra.mxu0 0.0
        %1456 = vmatprep.subr.mxu0 0.0
        %1457 = vmatpush1.msra.mxu0 0.0
        %1458 = vmatprep.subr.mxu0 0.0
        %1459 = vmatpush1.msra.mxu0 0.0
        %1460 = vmatprep.subr.mxu0 0.0
        %1461 = vmatpush1.msra.mxu0 0.0
        %1462 = vmatprep.subr.mxu0 0.0
        %1463 = vmatpush1.msra.mxu0 0.0
        %1464 = vmatprep.subr.mxu0 0.0
        %1465 = vmatpush1.msra.mxu0 0.0
        %1466 = vmatprep.subr.mxu0 0.0
        %1467 = vmatpush1.msra.mxu0 0.0
        %1468 = vmatprep.subr.mxu0 0.0
        %1469 = vmatpush1.msra.mxu0 0.0
        %1470 = vmatprep.subr.mxu0 0.0
        %1471 = vmatpush1.msra.mxu0 0.0
        %1472 = vmatprep.mubr.f32.mxu0 0.0
        %1473 = vmatmul.mubr.f32.gmra.mrb[0].mxu0 %v1132
        %v1474 = vpop.f32.mrb[0].mxu0
        %v1475 = vadd.f32 0.0, %v1474
        %v1476 = vpop.f32.mrb[0].mxu0
        %1477 = vmatprep.mubr.f32.mxu0 0.0
        %1478 = vmatmul.mubr.f32.gmra.mrb[0].mxu0 %v1135
        %v1479 = vpop.f32.mrb[0].mxu0
        %v1480 = vadd.f32 0.0, %v1479
        %v1481 = vpop.f32.mrb[0].mxu0
        %1482 = vdwg.mxu0
        %1483 = vmatprep.subr.mxu0 0.0
        %1484 = vmatpush1.msra.mxu0 %v1398
        %1485 = vmatprep.subr.mxu0 0.0
        %1486 = vmatpush1.msra.mxu0 %v1399
        %1487 = vmatprep.subr.mxu0 0.0
        %1488 = vmatpush1.msra.mxu0 0.0
        %1489 = vmatprep.subr.mxu0 0.0
        %1490 = vmatpush1.msra.mxu0 0.0
        %1491 = vmatprep.subr.mxu0 0.0
        %1492 = vmatpush1.msra.mxu0 0.0
        %1493 = vmatprep.subr.mxu0 0.0
        %1494 = vmatpush1.msra.mxu0 0.0
        %1495 = vmatprep.subr.mxu0 0.0
        %1496 = vmatpush1.msra.mxu0 0.0
        %1497 = vmatprep.subr.mxu0 0.0
        %1498 = vmatpush1.msra.mxu0 0.0
        %1499 = vmatprep.subr.mxu0 0.0
        %1500 = vmatpush1.msra.mxu0 0.0
        %1501 = vmatprep.subr.mxu0 0.0
        %1502 = vmatpush1.msra.mxu0 0.0
        %1503 = vmatprep.subr.mxu0 0.0
        %1504 = vmatpush1.msra.mxu0 0.0
        %1505 = vmatprep.subr.mxu0 0.0
        %1506 = vmatpush1.msra.mxu0 0.0
        %1507 = vmatprep.subr.mxu0 0.0
        %1508 = vmatpush1.msra.mxu0 0.0
        %1509 = vmatprep.subr.mxu0 0.0
        %1510 = vmatpush1.msra.mxu0 0.0
        %1511 = vmatprep.subr.mxu0 0.0
        %1512 = vmatpush1.msra.mxu0 0.0
        %1513 = vmatprep.subr.mxu0 0.0
        %1514 = vmatpush1.msra.mxu0 0.0
        %1515 = vmatprep.subr.mxu0 0.0
        %1516 = vmatpush1.msra.mxu0 0.0
        %1517 = vmatprep.subr.mxu0 0.0
        %1518 = vmatpush1.msra.mxu0 0.0
        %1519 = vmatprep.subr.mxu0 0.0
        %1520 = vmatpush1.msra.mxu0 0.0
        %1521 = vmatprep.subr.mxu0 0.0
        %1522 = vmatpush1.msra.mxu0 0.0
        %1523 = vmatprep.subr.mxu0 0.0
        %1524 = vmatpush1.msra.mxu0 0.0
        %1525 = vmatprep.subr.mxu0 0.0
        %1526 = vmatpush1.msra.mxu0 0.0
        %1527 = vmatprep.subr.mxu0 0.0
        %1528 = vmatpush1.msra.mxu0 0.0
        %1529 = vmatprep.subr.mxu0 0.0
        %1530 = vmatpush1.msra.mxu0 0.0
        %1531 = vmatprep.subr.mxu0 0.0
        %1532 = vmatpush1.msra.mxu0 0.0
        %1533 = vmatprep.subr.mxu0 0.0
        %1534 = vmatpush1.msra.mxu0 0.0
        %1535 = vmatprep.subr.mxu0 0.0
        %1536 = vmatpush1.msra.mxu0 0.0
        %1537 = vmatprep.subr.mxu0 0.0
        %1538 = vmatpush1.msra.mxu0 0.0
        %1539 = vmatprep.subr.mxu0 0.0
        %1540 = vmatpush1.msra.mxu0 0.0
        %1541 = vmatprep.subr.mxu0 0.0
        %1542 = vmatpush1.msra.mxu0 0.0
        %1543 = vmatprep.subr.mxu0 0.0
        %1544 = vmatpush1.msra.mxu0 0.0
        %1545 = vmatprep.subr.mxu0 0.0
        %1546 = vmatpush1.msra.mxu0 0.0
        %1547 = vmatprep.mubr.f32.mxu0 0.0
        %1548 = vmatmul.mubr.f32.gmra.mrb[0].mxu0 %v1051
        %v1549 = vpop.f32.mrb[0].mxu0
        %v1550 = vadd.f32 %v1475, %v1549
        %v1551 = vpop.f32.mrb[0].mxu0
        %1552 = vmatprep.mubr.f32.mxu0 0.0
        %1553 = vmatmul.mubr.f32.gmra.mrb[0].mxu0 %v1054
        %v1554 = vpop.f32.mrb[0].mxu0
        %v1555 = vadd.f32 %v1480, %v1554
        %v1556 = vpop.f32.mrb[0].mxu0
        %1557 = vdwg.mxu0
        %1558 = vmatprep.subr.mxu0 0.0
        %1559 = vmatpush1.msra.mxu0 %v1406
        %1560 = vmatprep.subr.mxu0 0.0
        %1561 = vmatpush1.msra.mxu0 %v1407
        %1562 = vmatprep.subr.mxu0 0.0
        %1563 = vmatpush1.msra.mxu0 0.0
        %1564 = vmatprep.subr.mxu0 0.0
        %1565 = vmatpush1.msra.mxu0 0.0
        %1566 = vmatprep.subr.mxu0 0.0
        %1567 = vmatpush1.msra.mxu0 0.0
        %1568 = vmatprep.subr.mxu0 0.0
        %1569 = vmatpush1.msra.mxu0 0.0
        %1570 = vmatprep.subr.mxu0 0.0
        %1571 = vmatpush1.msra.mxu0 0.0
        %1572 = vmatprep.subr.mxu0 0.0
        %1573 = vmatpush1.msra.mxu0 0.0
        %1574 = vmatprep.subr.mxu0 0.0
        %1575 = vmatpush1.msra.mxu0 0.0
        %1576 = vmatprep.subr.mxu0 0.0
        %1577 = vmatpush1.msra.mxu0 0.0
        %1578 = vmatprep.subr.mxu0 0.0
        %1579 = vmatpush1.msra.mxu0 0.0
        %1580 = vmatprep.subr.mxu0 0.0
        %1581 = vmatpush1.msra.mxu0 0.0
        %1582 = vmatprep.subr.mxu0 0.0
        %1583 = vmatpush1.msra.mxu0 0.0
        %1584 = vmatprep.subr.mxu0 0.0
        %1585 = vmatpush1.msra.mxu0 0.0
        %1586 = vmatprep.subr.mxu0 0.0
        %1587 = vmatpush1.msra.mxu0 0.0
        %1588 = vmatprep.subr.mxu0 0.0
        %1589 = vmatpush1.msra.mxu0 0.0
        %1590 = vmatprep.subr.mxu0 0.0
        %1591 = vmatpush1.msra.mxu0 0.0
        %1592 = vmatprep.subr.mxu0 0.0
        %1593 = vmatpush1.msra.mxu0 0.0
        %1594 = vmatprep.subr.mxu0 0.0
        %1595 = vmatpush1.msra.mxu0 0.0
        %1596 = vmatprep.subr.mxu0 0.0
        %1597 = vmatpush1.msra.mxu0 0.0
        %1598 = vmatprep.subr.mxu0 0.0
        %1599 = vmatpush1.msra.mxu0 0.0
        %1600 = vmatprep.subr.mxu0 0.0
        %1601 = vmatpush1.msra.mxu0 0.0
        %1602 = vmatprep.subr.mxu0 0.0
        %1603 = vmatpush1.msra.mxu0 0.0
        %1604 = vmatprep.subr.mxu0 0.0
        %1605 = vmatpush1.msra.mxu0 0.0
        %1606 = vmatprep.subr.mxu0 0.0
        %1607 = vmatpush1.msra.mxu0 0.0
        %1608 = vmatprep.subr.mxu0 0.0
        %1609 = vmatpush1.msra.mxu0 0.0
        %1610 = vmatprep.subr.mxu0 0.0
        %1611 = vmatpush1.msra.mxu0 0.0
        %1612 = vmatprep.subr.mxu0 0.0
        %1613 = vmatpush1.msra.mxu0 0.0
        %1614 = vmatprep.subr.mxu0 0.0
        %1615 = vmatpush1.msra.mxu0 0.0
        %1616 = vmatprep.subr.mxu0 0.0
        %1617 = vmatpush1.msra.mxu0 0.0
        %1618 = vmatprep.subr.mxu0 0.0
        %1619 = vmatpush1.msra.mxu0 0.0
        %1620 = vmatprep.subr.mxu0 0.0
        %1621 = vmatpush1.msra.mxu0 0.0
        %1622 = vmatprep.mubr.f32.mxu0 0.0
        %1623 = vmatmul.mubr.f32.gmra.mrb[0].mxu0 %v1051
        %v1624 = vpop.f32.mrb[0].mxu0
        %v1625 = vadd.f32 0.0, %v1624
        %v1626 = vpop.f32.mrb[0].mxu0
        %1627 = vmatprep.mubr.f32.mxu0 0.0
        %1628 = vmatmul.mubr.f32.gmra.mrb[0].mxu0 %v1054
        %v1629 = vpop.f32.mrb[0].mxu0
        %v1630 = vadd.f32 0.0, %v1629
        %v1631 = vpop.f32.mrb[0].mxu0
        %1632 = vdwg.mxu0
        %1633 = vmatprep.subr.mxu0 0.0
        %1634 = vmatpush1.msra.mxu0 %v1398
        %1635 = vmatprep.subr.mxu0 0.0
        %1636 = vmatpush1.msra.mxu0 %v1399
        %1637 = vmatprep.subr.mxu0 0.0
        %1638 = vmatpush1.msra.mxu0 0.0
        %1639 = vmatprep.subr.mxu0 0.0
        %1640 = vmatpush1.msra.mxu0 0.0
        %1641 = vmatprep.subr.mxu0 0.0
        %1642 = vmatpush1.msra.mxu0 0.0
        %1643 = vmatprep.subr.mxu0 0.0
        %1644 = vmatpush1.msra.mxu0 0.0
        %1645 = vmatprep.subr.mxu0 0.0
        %1646 = vmatpush1.msra.mxu0 0.0
        %1647 = vmatprep.subr.mxu0 0.0
        %1648 = vmatpush1.msra.mxu0 0.0
        %1649 = vmatprep.subr.mxu0 0.0
        %1650 = vmatpush1.msra.mxu0 0.0
        %1651 = vmatprep.subr.mxu0 0.0
        %1652 = vmatpush1.msra.mxu0 0.0
        %1653 = vmatprep.subr.mxu0 0.0
        %1654 = vmatpush1.msra.mxu0 0.0
        %1655 = vmatprep.subr.mxu0 0.0
        %1656 = vmatpush1.msra.mxu0 0.0
        %1657 = vmatprep.subr.mxu0 0.0
        %1658 = vmatpush1.msra.mxu0 0.0
        %1659 = vmatprep.subr.mxu0 0.0
        %1660 = vmatpush1.msra.mxu0 0.0
        %1661 = vmatprep.subr.mxu0 0.0
        %1662 = vmatpush1.msra.mxu0 0.0
        %1663 = vmatprep.subr.mxu0 0.0
        %1664 = vmatpush1.msra.mxu0 0.0
        %1665 = vmatprep.subr.mxu0 0.0
        %1666 = vmatpush1.msra.mxu0 0.0
        %1667 = vmatprep.subr.mxu0 0.0
        %1668 = vmatpush1.msra.mxu0 0.0
        %1669 = vmatprep.subr.mxu0 0.0
        %1670 = vmatpush1.msra.mxu0 0.0
        %1671 = vmatprep.subr.mxu0 0.0
        %1672 = vmatpush1.msra.mxu0 0.0
        %1673 = vmatprep.subr.mxu0 0.0
        %1674 = vmatpush1.msra.mxu0 0.0
        %1675 = vmatprep.subr.mxu0 0.0
        %1676 = vmatpush1.msra.mxu0 0.0
        %1677 = vmatprep.subr.mxu0 0.0
        %1678 = vmatpush1.msra.mxu0 0.0
        %1679 = vmatprep.subr.mxu0 0.0
        %1680 = vmatpush1.msra.mxu0 0.0
        %1681 = vmatprep.subr.mxu0 0.0
        %1682 = vmatpush1.msra.mxu0 0.0
        %1683 = vmatprep.subr.mxu0 0.0
        %1684 = vmatpush1.msra.mxu0 0.0
        %1685 = vmatprep.subr.mxu0 0.0
        %1686 = vmatpush1.msra.mxu0 0.0
        %1687 = vmatprep.subr.mxu0 0.0
        %1688 = vmatpush1.msra.mxu0 0.0
        %1689 = vmatprep.subr.mxu0 0.0
        %1690 = vmatpush1.msra.mxu0 0.0
        %1691 = vmatprep.subr.mxu0 0.0
        %1692 = vmatpush1.msra.mxu0 0.0
        %1693 = vmatprep.subr.mxu0 0.0
        %1694 = vmatpush1.msra.mxu0 0.0
        %1695 = vmatprep.subr.mxu0 0.0
        %1696 = vmatpush1.msra.mxu0 0.0
        %1697 = vmatprep.mubr.f32.mxu0 0.0
        %1698 = vmatmul.mubr.f32.gmra.mrb[0].mxu0 %v1132
        %v1699 = vpop.f32.mrb[0].mxu0
        %v1700 = vadd.f32 0.0, %v1699
        %v1701 = vpop.f32.mrb[0].mxu0
        %1702 = vmatprep.mubr.f32.mxu0 0.0
        %1703 = vmatmul.mubr.f32.gmra.mrb[0].mxu0 %v1135
        %v1704 = vpop.f32.mrb[0].mxu0
        %v1705 = vadd.f32 0.0, %v1704
        %v1706 = vpop.f32.mrb[0].mxu0
        %1707 = vdwg.mxu0
        %v1708 = vsub.f32 %v1625, %v1700
        %v1709 = vsub.f32 %v1630, %v1705
        %v1711 = vsel %vm893, %v1708, 0
        %v1714 = vsel %vm893, %v1709, 0
        %1716 = vmatprep.subr.mxu0 0.0
        %1717 = vmatpush1.msra.mxu0 %v889
        %1718 = vmatprep.subr.mxu0 0.0
        %1719 = vmatpush1.msra.mxu0 %v890
        %1720 = vmatprep.subr.mxu0 0.0
        %1721 = vmatpush1.msra.mxu0 0.0
        %1722 = vmatprep.subr.mxu0 0.0
        %1723 = vmatpush1.msra.mxu0 0.0
        %1724 = vmatprep.subr.mxu0 0.0
        %1725 = vmatpush1.msra.mxu0 0.0
        %1726 = vmatprep.subr.mxu0 0.0
        %1727 = vmatpush1.msra.mxu0 0.0
        %1728 = vmatprep.subr.mxu0 0.0
        %1729 = vmatpush1.msra.mxu0 0.0
        %1730 = vmatprep.subr.mxu0 0.0
        %1731 = vmatpush1.msra.mxu0 0.0
        %1732 = vmatprep.subr.mxu0 0.0
        %1733 = vmatpush1.msra.mxu0 0.0
        %1734 = vmatprep.subr.mxu0 0.0
        %1735 = vmatpush1.msra.mxu0 0.0
        %1736 = vmatprep.subr.mxu0 0.0
        %1737 = vmatpush1.msra.mxu0 0.0
        %1738 = vmatprep.subr.mxu0 0.0
        %1739 = vmatpush1.msra.mxu0 0.0
        %1740 = vmatprep.subr.mxu0 0.0
        %1741 = vmatpush1.msra.mxu0 0.0
        %1742 = vmatprep.subr.mxu0 0.0
        %1743 = vmatpush1.msra.mxu0 0.0
        %1744 = vmatprep.subr.mxu0 0.0
        %1745 = vmatpush1.msra.mxu0 0.0
        %1746 = vmatprep.subr.mxu0 0.0
        %1747 = vmatpush1.msra.mxu0 0.0
        %1748 = vmatprep.subr.mxu0 0.0
        %1749 = vmatpush1.msra.mxu0 0.0
        %1750 = vmatprep.subr.mxu0 0.0
        %1751 = vmatpush1.msra.mxu0 0.0
        %1752 = vmatprep.subr.mxu0 0.0
        %1753 = vmatpush1.msra.mxu0 0.0
        %1754 = vmatprep.subr.mxu0 0.0
        %1755 = vmatpush1.msra.mxu0 0.0
        %1756 = vmatprep.subr.mxu0 0.0
        %1757 = vmatpush1.msra.mxu0 0.0
        %1758 = vmatprep.subr.mxu0 0.0
        %1759 = vmatpush1.msra.mxu0 0.0
        %1760 = vmatprep.subr.mxu0 0.0
        %1761 = vmatpush1.msra.mxu0 0.0
        %1762 = vmatprep.subr.mxu0 0.0
        %1763 = vmatpush1.msra.mxu0 0.0
        %1764 = vmatprep.subr.mxu0 0.0
        %1765 = vmatpush1.msra.mxu0 0.0
        %1766 = vmatprep.subr.mxu0 0.0
        %1767 = vmatpush1.msra.mxu0 0.0
        %1768 = vmatprep.subr.mxu0 0.0
        %1769 = vmatpush1.msra.mxu0 0.0
        %1770 = vmatprep.subr.mxu0 0.0
        %1771 = vmatpush1.msra.mxu0 0.0
        %1772 = vmatprep.subr.mxu0 0.0
        %1773 = vmatpush1.msra.mxu0 0.0
        %1774 = vmatprep.subr.mxu0 0.0
        %1775 = vmatpush1.msra.mxu0 0.0
        %1776 = vmatprep.subr.mxu0 0.0
        %1777 = vmatpush1.msra.mxu0 0.0
        %1778 = vmatprep.subr.mxu0 0.0
        %1779 = vmatpush1.msra.mxu0 0.0
        %1780 = vmatprep.mubr.f32.mxu0 0.0
        %1781 = vmatmul.mubr.f32.gmra.mrb[0].mxu0 %v1711
        %v1782 = vpop.f32.mrb[0].mxu0
        %v1783 = vadd.f32 0.0, %v1782
        %v1784 = vpop.f32.mrb[0].mxu0
        %1785 = vmatprep.mubr.f32.mxu0 0.0
        %1786 = vmatmul.mubr.f32.gmra.mrb[0].mxu0 %v1714
        %v1787 = vpop.f32.mrb[0].mxu0
        %v1788 = vadd.f32 0.0, %v1787
        %v1789 = vpop.f32.mrb[0].mxu0
        %1790 = vdwg.mxu0
        %v1792 = vsel %vm893, %v1550, 0
        %v1795 = vsel %vm893, %v1555, 0
        %1797 = vmatprep.subr.mxu0 0.0
        %1798 = vmatpush1.msra.mxu0 %v887
        %1799 = vmatprep.subr.mxu0 0.0
        %1800 = vmatpush1.msra.mxu0 %v888
        %1801 = vmatprep.subr.mxu0 0.0
        %1802 = vmatpush1.msra.mxu0 0.0
        %1803 = vmatprep.subr.mxu0 0.0
        %1804 = vmatpush1.msra.mxu0 0.0
        %1805 = vmatprep.subr.mxu0 0.0
        %1806 = vmatpush1.msra.mxu0 0.0
        %1807 = vmatprep.subr.mxu0 0.0
        %1808 = vmatpush1.msra.mxu0 0.0
        %1809 = vmatprep.subr.mxu0 0.0
        %1810 = vmatpush1.msra.mxu0 0.0
        %1811 = vmatprep.subr.mxu0 0.0
        %1812 = vmatpush1.msra.mxu0 0.0
        %1813 = vmatprep.subr.mxu0 0.0
        %1814 = vmatpush1.msra.mxu0 0.0
        %1815 = vmatprep.subr.mxu0 0.0
        %1816 = vmatpush1.msra.mxu0 0.0
        %1817 = vmatprep.subr.mxu0 0.0
        %1818 = vmatpush1.msra.mxu0 0.0
        %1819 = vmatprep.subr.mxu0 0.0
        %1820 = vmatpush1.msra.mxu0 0.0
        %1821 = vmatprep.subr.mxu0 0.0
        %1822 = vmatpush1.msra.mxu0 0.0
        %1823 = vmatprep.subr.mxu0 0.0
        %1824 = vmatpush1.msra.mxu0 0.0
        %1825 = vmatprep.subr.mxu0 0.0
        %1826 = vmatpush1.msra.mxu0 0.0
        %1827 = vmatprep.subr.mxu0 0.0
        %1828 = vmatpush1.msra.mxu0 0.0
        %1829 = vmatprep.subr.mxu0 0.0
        %1830 = vmatpush1.msra.mxu0 0.0
        %1831 = vmatprep.subr.mxu0 0.0
        %1832 = vmatpush1.msra.mxu0 0.0
        %1833 = vmatprep.subr.mxu0 0.0
        %1834 = vmatpush1.msra.mxu0 0.0
        %1835 = vmatprep.subr.mxu0 0.0
        %1836 = vmatpush1.msra.mxu0 0.0
        %1837 = vmatprep.subr.mxu0 0.0
        %1838 = vmatpush1.msra.mxu0 0.0
        %1839 = vmatprep.subr.mxu0 0.0
        %1840 = vmatpush1.msra.mxu0 0.0
        %1841 = vmatprep.subr.mxu0 0.0
        %1842 = vmatpush1.msra.mxu0 0.0
        %1843 = vmatprep.subr.mxu0 0.0
        %1844 = vmatpush1.msra.mxu0 0.0
        %1845 = vmatprep.subr.mxu0 0.0
        %1846 = vmatpush1.msra.mxu0 0.0
        %1847 = vmatprep.subr.mxu0 0.0
        %1848 = vmatpush1.msra.mxu0 0.0
        %1849 = vmatprep.subr.mxu0 0.0
        %1850 = vmatpush1.msra.mxu0 0.0
        %1851 = vmatprep.subr.mxu0 0.0
        %1852 = vmatpush1.msra.mxu0 0.0
        %1853 = vmatprep.subr.mxu0 0.0
        %1854 = vmatpush1.msra.mxu0 0.0
        %1855 = vmatprep.subr.mxu0 0.0
        %1856 = vmatpush1.msra.mxu0 0.0
        %1857 = vmatprep.subr.mxu0 0.0
        %1858 = vmatpush1.msra.mxu0 0.0
        %1859 = vmatprep.subr.mxu0 0.0
        %1860 = vmatpush1.msra.mxu0 0.0
        %1861 = vmatprep.mubr.f32.mxu0 0.0
        %1862 = vmatmul.mubr.f32.gmra.mrb[0].mxu0 %v1792
        %v1863 = vpop.f32.mrb[0].mxu0
        %v1864 = vadd.f32 %v1783, %v1863
        %v1865 = vpop.f32.mrb[0].mxu0
        %1866 = vmatprep.mubr.f32.mxu0 0.0
        %1867 = vmatmul.mubr.f32.gmra.mrb[0].mxu0 %v1795
        %v1868 = vpop.f32.mrb[0].mxu0
        %v1869 = vadd.f32 %v1788, %v1868
        %v1870 = vpop.f32.mrb[0].mxu0
        %1871 = vdwg.mxu0
        %v1872 = vmul.f32 %v1864, 0.00390625
        %v1873 = vmul.f32 %v1869, 0.00390625
        %1874 = vst.msk [vmem:[%s730] sm:$0xff] %vm893, %v1872
        %1875 = vst.msk [vmem:[%s730 + $0x8] sm:$0xff] %vm893, %v1873
        %s1876 = scalar_lea.vmem %s599, 16 [#allocation3]
        %v1877 = vld [vmem:[%s1876] sm:$0xff]
        %v1878 = vld [vmem:[%s1876 + $0x8] sm:$0xff]
        %v1880 = vsel %vm893, %v1877, 0
        %v1883 = vsel %vm893, %v1878, 0
        %1885 = vmatprep.subr.mxu0 0.0
        %1886 = vmatpush1.msra.mxu0 %v887
        %1887 = vmatprep.subr.mxu0 0.0
        %1888 = vmatpush1.msra.mxu0 %v888
        %1889 = vmatprep.subr.mxu0 0.0
        %1890 = vmatpush1.msra.mxu0 0.0
        %1891 = vmatprep.subr.mxu0 0.0
        %1892 = vmatpush1.msra.mxu0 0.0
        %1893 = vmatprep.subr.mxu0 0.0
        %1894 = vmatpush1.msra.mxu0 0.0
        %1895 = vmatprep.subr.mxu0 0.0
        %1896 = vmatpush1.msra.mxu0 0.0
        %1897 = vmatprep.subr.mxu0 0.0
        %1898 = vmatpush1.msra.mxu0 0.0
        %1899 = vmatprep.subr.mxu0 0.0
        %1900 = vmatpush1.msra.mxu0 0.0
        %1901 = vmatprep.subr.mxu0 0.0
        %1902 = vmatpush1.msra.mxu0 0.0
        %1903 = vmatprep.subr.mxu0 0.0
        %1904 = vmatpush1.msra.mxu0 0.0
        %1905 = vmatprep.subr.mxu0 0.0
        %1906 = vmatpush1.msra.mxu0 0.0
        %1907 = vmatprep.subr.mxu0 0.0
        %1908 = vmatpush1.msra.mxu0 0.0
        %1909 = vmatprep.subr.mxu0 0.0
        %1910 = vmatpush1.msra.mxu0 0.0
        %1911 = vmatprep.subr.mxu0 0.0
        %1912 = vmatpush1.msra.mxu0 0.0
        %1913 = vmatprep.subr.mxu0 0.0
        %1914 = vmatpush1.msra.mxu0 0.0
        %1915 = vmatprep.subr.mxu0 0.0
        %1916 = vmatpush1.msra.mxu0 0.0
        %1917 = vmatprep.subr.mxu0 0.0
        %1918 = vmatpush1.msra.mxu0 0.0
        %1919 = vmatprep.subr.mxu0 0.0
        %1920 = vmatpush1.msra.mxu0 0.0
        %1921 = vmatprep.subr.mxu0 0.0
        %1922 = vmatpush1.msra.mxu0 0.0
        %1923 = vmatprep.subr.mxu0 0.0
        %1924 = vmatpush1.msra.mxu0 0.0
        %1925 = vmatprep.subr.mxu0 0.0
        %1926 = vmatpush1.msra.mxu0 0.0
        %1927 = vmatprep.subr.mxu0 0.0
        %1928 = vmatpush1.msra.mxu0 0.0
        %1929 = vmatprep.subr.mxu0 0.0
        %1930 = vmatpush1.msra.mxu0 0.0
        %1931 = vmatprep.subr.mxu0 0.0
        %1932 = vmatpush1.msra.mxu0 0.0
        %1933 = vmatprep.subr.mxu0 0.0
        %1934 = vmatpush1.msra.mxu0 0.0
        %1935 = vmatprep.subr.mxu0 0.0
        %1936 = vmatpush1.msra.mxu0 0.0
        %1937 = vmatprep.subr.mxu0 0.0
        %1938 = vmatpush1.msra.mxu0 0.0
        %1939 = vmatprep.subr.mxu0 0.0
        %1940 = vmatpush1.msra.mxu0 0.0
        %1941 = vmatprep.subr.mxu0 0.0
        %1942 = vmatpush1.msra.mxu0 0.0
        %1943 = vmatprep.subr.mxu0 0.0
        %1944 = vmatpush1.msra.mxu0 0.0
        %1945 = vmatprep.subr.mxu0 0.0
        %1946 = vmatpush1.msra.mxu0 0.0
        %1947 = vmatprep.subr.mxu0 0.0
        %1948 = vmatpush1.msra.mxu0 0.0
        %1949 = vmatprep.mubr.f32.mxu0 0.0
        %1950 = vmatmul.mubr.f32.gmra.mrb[0].mxu0 %v1880
        %v1951 = vpop.f32.mrb[0].mxu0
        %v1952 = vadd.f32 0.0, %v1951
        %v1953 = vpop.f32.mrb[0].mxu0
        %1954 = vmatprep.mubr.f32.mxu0 0.0
        %1955 = vmatmul.mubr.f32.gmra.mrb[0].mxu0 %v1883
        %v1956 = vpop.f32.mrb[0].mxu0
        %v1957 = vadd.f32 0.0, %v1956
        %v1958 = vpop.f32.mrb[0].mxu0
        %1959 = vdwg.mxu0
        %1960 = vmatprep.subr.mxu0 0.0
        %1961 = vmatpush1.msra.mxu0 %v889
        %1962 = vmatprep.subr.mxu0 0.0
        %1963 = vmatpush1.msra.mxu0 %v890
        %1964 = vmatprep.subr.mxu0 0.0
        %1965 = vmatpush1.msra.mxu0 0.0
        %1966 = vmatprep.subr.mxu0 0.0
        %1967 = vmatpush1.msra.mxu0 0.0
        %1968 = vmatprep.subr.mxu0 0.0
        %1969 = vmatpush1.msra.mxu0 0.0
        %1970 = vmatprep.subr.mxu0 0.0
        %1971 = vmatpush1.msra.mxu0 0.0
        %1972 = vmatprep.subr.mxu0 0.0
        %1973 = vmatpush1.msra.mxu0 0.0
        %1974 = vmatprep.subr.mxu0 0.0
        %1975 = vmatpush1.msra.mxu0 0.0
        %1976 = vmatprep.subr.mxu0 0.0
        %1977 = vmatpush1.msra.mxu0 0.0
        %1978 = vmatprep.subr.mxu0 0.0
        %1979 = vmatpush1.msra.mxu0 0.0
        %1980 = vmatprep.subr.mxu0 0.0
        %1981 = vmatpush1.msra.mxu0 0.0
        %1982 = vmatprep.subr.mxu0 0.0
        %1983 = vmatpush1.msra.mxu0 0.0
        %1984 = vmatprep.subr.mxu0 0.0
        %1985 = vmatpush1.msra.mxu0 0.0
        %1986 = vmatprep.subr.mxu0 0.0
        %1987 = vmatpush1.msra.mxu0 0.0
        %1988 = vmatprep.subr.mxu0 0.0
        %1989 = vmatpush1.msra.mxu0 0.0
        %1990 = vmatprep.subr.mxu0 0.0
        %1991 = vmatpush1.msra.mxu0 0.0
        %1992 = vmatprep.subr.mxu0 0.0
        %1993 = vmatpush1.msra.mxu0 0.0
        %1994 = vmatprep.subr.mxu0 0.0
        %1995 = vmatpush1.msra.mxu0 0.0
        %1996 = vmatprep.subr.mxu0 0.0
        %1997 = vmatpush1.msra.mxu0 0.0
        %1998 = vmatprep.subr.mxu0 0.0
        %1999 = vmatpush1.msra.mxu0 0.0
        %2000 = vmatprep.subr.mxu0 0.0
        %2001 = vmatpush1.msra.mxu0 0.0
        %2002 = vmatprep.subr.mxu0 0.0
        %2003 = vmatpush1.msra.mxu0 0.0
        %2004 = vmatprep.subr.mxu0 0.0
        %2005 = vmatpush1.msra.mxu0 0.0
        %2006 = vmatprep.subr.mxu0 0.0
        %2007 = vmatpush1.msra.mxu0 0.0
        %2008 = vmatprep.subr.mxu0 0.0
        %2009 = vmatpush1.msra.mxu0 0.0
        %2010 = vmatprep.subr.mxu0 0.0
        %2011 = vmatpush1.msra.mxu0 0.0
        %2012 = vmatprep.subr.mxu0 0.0
        %2013 = vmatpush1.msra.mxu0 0.0
        %2014 = vmatprep.subr.mxu0 0.0
        %2015 = vmatpush1.msra.mxu0 0.0
        %2016 = vmatprep.subr.mxu0 0.0
        %2017 = vmatpush1.msra.mxu0 0.0
        %2018 = vmatprep.subr.mxu0 0.0
        %2019 = vmatpush1.msra.mxu0 0.0
        %2020 = vmatprep.subr.mxu0 0.0
        %2021 = vmatpush1.msra.mxu0 0.0
        %2022 = vmatprep.subr.mxu0 0.0
        %2023 = vmatpush1.msra.mxu0 0.0
        %2024 = vmatprep.mubr.f32.mxu0 0.0
        %2025 = vmatmul.mubr.f32.gmra.mrb[0].mxu0 %v1880
        %v2026 = vpop.f32.mrb[0].mxu0
        %v2027 = vadd.f32 0.0, %v2026
        %v2028 = vpop.f32.mrb[0].mxu0
        %2029 = vmatprep.mubr.f32.mxu0 0.0
        %2030 = vmatmul.mubr.f32.gmra.mrb[0].mxu0 %v1883
        %v2031 = vpop.f32.mrb[0].mxu0
        %v2032 = vadd.f32 0.0, %v2031
        %v2033 = vpop.f32.mrb[0].mxu0
        %2034 = vdwg.mxu0
        %2035 = vmatprep.subr.mxu0 0.0
        %2036 = vmatpush1.msra.mxu0 %v1952
        %2037 = vmatprep.subr.mxu0 0.0
        %2038 = vmatpush1.msra.mxu0 %v1957
        %2039 = vmatprep.subr.mxu0 0.0
        %2040 = vmatpush1.msra.mxu0 0.0
        %2041 = vmatprep.subr.mxu0 0.0
        %2042 = vmatpush1.msra.mxu0 0.0
        %2043 = vmatprep.subr.mxu0 0.0
        %2044 = vmatpush1.msra.mxu0 0.0
        %2045 = vmatprep.subr.mxu0 0.0
        %2046 = vmatpush1.msra.mxu0 0.0
        %2047 = vmatprep.subr.mxu0 0.0
        %2048 = vmatpush1.msra.mxu0 0.0
        %2049 = vmatprep.subr.mxu0 0.0
        %2050 = vmatpush1.msra.mxu0 0.0
        %2051 = vmatprep.subr.mxu0 0.0
        %2052 = vmatpush1.msra.mxu0 0.0
        %2053 = vmatprep.subr.mxu0 0.0
        %2054 = vmatpush1.msra.mxu0 0.0
        %2055 = vmatprep.subr.mxu0 0.0
        %2056 = vmatpush1.msra.mxu0 0.0
        %2057 = vmatprep.subr.mxu0 0.0
        %2058 = vmatpush1.msra.mxu0 0.0
        %2059 = vmatprep.subr.mxu0 0.0
        %2060 = vmatpush1.msra.mxu0 0.0
        %2061 = vmatprep.subr.mxu0 0.0
        %2062 = vmatpush1.msra.mxu0 0.0
        %2063 = vmatprep.subr.mxu0 0.0
        %2064 = vmatpush1.msra.mxu0 0.0
        %2065 = vmatprep.subr.mxu0 0.0
        %2066 = vmatpush1.msra.mxu0 0.0
        %2067 = vmatprep.subr.mxu0 0.0
        %2068 = vmatpush1.msra.mxu0 0.0
        %2069 = vmatprep.subr.mxu0 0.0
        %2070 = vmatpush1.msra.mxu0 0.0
        %2071 = vmatprep.subr.mxu0 0.0
        %2072 = vmatpush1.msra.mxu0 0.0
        %2073 = vmatprep.subr.mxu0 0.0
        %2074 = vmatpush1.msra.mxu0 0.0
        %2075 = vmatprep.subr.mxu0 0.0
        %2076 = vmatpush1.msra.mxu0 0.0
        %2077 = vmatprep.subr.mxu0 0.0
        %2078 = vmatpush1.msra.mxu0 0.0
        %2079 = vmatprep.subr.mxu0 0.0
        %2080 = vmatpush1.msra.mxu0 0.0
        %2081 = vmatprep.subr.mxu0 0.0
        %2082 = vmatpush1.msra.mxu0 0.0
        %2083 = vmatprep.subr.mxu0 0.0
        %2084 = vmatpush1.msra.mxu0 0.0
        %2085 = vmatprep.subr.mxu0 0.0
        %2086 = vmatpush1.msra.mxu0 0.0
        %2087 = vmatprep.subr.mxu0 0.0
        %2088 = vmatpush1.msra.mxu0 0.0
        %2089 = vmatprep.subr.mxu0 0.0
        %2090 = vmatpush1.msra.mxu0 0.0
        %2091 = vmatprep.subr.mxu0 0.0
        %2092 = vmatpush1.msra.mxu0 0.0
        %2093 = vmatprep.subr.mxu0 0.0
        %2094 = vmatpush1.msra.mxu0 0.0
        %2095 = vmatprep.subr.mxu0 0.0
        %2096 = vmatpush1.msra.mxu0 0.0
        %2097 = vmatprep.subr.mxu0 0.0
        %2098 = vmatpush1.msra.mxu0 0.0
        %2099 = vmatprep.mubr.f32.mxu0 0.0
        %2100 = vmatmul.mubr.f32.gmra.mrb[0].mxu0 %v1051
        %v2101 = vpop.f32.mrb[0].mxu0
        %v2102 = vadd.f32 0.0, %v2101
        %v2103 = vpop.f32.mrb[0].mxu0
        %2104 = vmatprep.mubr.f32.mxu0 0.0
        %2105 = vmatmul.mubr.f32.gmra.mrb[0].mxu0 %v1054
        %v2106 = vpop.f32.mrb[0].mxu0
        %v2107 = vadd.f32 0.0, %v2106
        %v2108 = vpop.f32.mrb[0].mxu0
        %2109 = vdwg.mxu0
        %2110 = vmatprep.subr.mxu0 0.0
        %2111 = vmatpush1.msra.mxu0 %v2027
        %2112 = vmatprep.subr.mxu0 0.0
        %2113 = vmatpush1.msra.mxu0 %v2032
        %2114 = vmatprep.subr.mxu0 0.0
        %2115 = vmatpush1.msra.mxu0 0.0
        %2116 = vmatprep.subr.mxu0 0.0
        %2117 = vmatpush1.msra.mxu0 0.0
        %2118 = vmatprep.subr.mxu0 0.0
        %2119 = vmatpush1.msra.mxu0 0.0
        %2120 = vmatprep.subr.mxu0 0.0
        %2121 = vmatpush1.msra.mxu0 0.0
        %2122 = vmatprep.subr.mxu0 0.0
        %2123 = vmatpush1.msra.mxu0 0.0
        %2124 = vmatprep.subr.mxu0 0.0
        %2125 = vmatpush1.msra.mxu0 0.0
        %2126 = vmatprep.subr.mxu0 0.0
        %2127 = vmatpush1.msra.mxu0 0.0
        %2128 = vmatprep.subr.mxu0 0.0
        %2129 = vmatpush1.msra.mxu0 0.0
        %2130 = vmatprep.subr.mxu0 0.0
        %2131 = vmatpush1.msra.mxu0 0.0
        %2132 = vmatprep.subr.mxu0 0.0
        %2133 = vmatpush1.msra.mxu0 0.0
        %2134 = vmatprep.subr.mxu0 0.0
        %2135 = vmatpush1.msra.mxu0 0.0
        %2136 = vmatprep.subr.mxu0 0.0
        %2137 = vmatpush1.msra.mxu0 0.0
        %2138 = vmatprep.subr.mxu0 0.0
        %2139 = vmatpush1.msra.mxu0 0.0
        %2140 = vmatprep.subr.mxu0 0.0
        %2141 = vmatpush1.msra.mxu0 0.0
        %2142 = vmatprep.subr.mxu0 0.0
        %2143 = vmatpush1.msra.mxu0 0.0
        %2144 = vmatprep.subr.mxu0 0.0
        %2145 = vmatpush1.msra.mxu0 0.0
        %2146 = vmatprep.subr.mxu0 0.0
        %2147 = vmatpush1.msra.mxu0 0.0
        %2148 = vmatprep.subr.mxu0 0.0
        %2149 = vmatpush1.msra.mxu0 0.0
        %2150 = vmatprep.subr.mxu0 0.0
        %2151 = vmatpush1.msra.mxu0 0.0
        %2152 = vmatprep.subr.mxu0 0.0
        %2153 = vmatpush1.msra.mxu0 0.0
        %2154 = vmatprep.subr.mxu0 0.0
        %2155 = vmatpush1.msra.mxu0 0.0
        %2156 = vmatprep.subr.mxu0 0.0
        %2157 = vmatpush1.msra.mxu0 0.0
        %2158 = vmatprep.subr.mxu0 0.0
        %2159 = vmatpush1.msra.mxu0 0.0
        %2160 = vmatprep.subr.mxu0 0.0
        %2161 = vmatpush1.msra.mxu0 0.0
        %2162 = vmatprep.subr.mxu0 0.0
        %2163 = vmatpush1.msra.mxu0 0.0
        %2164 = vmatprep.subr.mxu0 0.0
        %2165 = vmatpush1.msra.mxu0 0.0
        %2166 = vmatprep.subr.mxu0 0.0
        %2167 = vmatpush1.msra.mxu0 0.0
        %2168 = vmatprep.subr.mxu0 0.0
        %2169 = vmatpush1.msra.mxu0 0.0
        %2170 = vmatprep.subr.mxu0 0.0
        %2171 = vmatpush1.msra.mxu0 0.0
        %2172 = vmatprep.subr.mxu0 0.0
        %2173 = vmatpush1.msra.mxu0 0.0
        %2174 = vmatprep.mubr.f32.mxu0 0.0
        %2175 = vmatmul.mubr.f32.gmra.mrb[0].mxu0 %v1132
        %v2176 = vpop.f32.mrb[0].mxu0
        %v2177 = vadd.f32 0.0, %v2176
        %v2178 = vpop.f32.mrb[0].mxu0
        %2179 = vmatprep.mubr.f32.mxu0 0.0
        %2180 = vmatmul.mubr.f32.gmra.mrb[0].mxu0 %v1135
        %v2181 = vpop.f32.mrb[0].mxu0
        %v2182 = vadd.f32 0.0, %v2181
        %v2183 = vpop.f32.mrb[0].mxu0
        %2184 = vdwg.mxu0
        %v2185 = vsub.f32 %v2102, %v2177
        %v2186 = vsub.f32 %v2107, %v2182
        %2187 = vmatprep.subr.mxu0 0.0
        %2188 = vmatpush1.msra.mxu0 %v1952
        %2189 = vmatprep.subr.mxu0 0.0
        %2190 = vmatpush1.msra.mxu0 %v1957
        %2191 = vmatprep.subr.mxu0 0.0
        %2192 = vmatpush1.msra.mxu0 0.0
        %2193 = vmatprep.subr.mxu0 0.0
        %2194 = vmatpush1.msra.mxu0 0.0
        %2195 = vmatprep.subr.mxu0 0.0
        %2196 = vmatpush1.msra.mxu0 0.0
        %2197 = vmatprep.subr.mxu0 0.0
        %2198 = vmatpush1.msra.mxu0 0.0
        %2199 = vmatprep.subr.mxu0 0.0
        %2200 = vmatpush1.msra.mxu0 0.0
        %2201 = vmatprep.subr.mxu0 0.0
        %2202 = vmatpush1.msra.mxu0 0.0
        %2203 = vmatprep.subr.mxu0 0.0
        %2204 = vmatpush1.msra.mxu0 0.0
        %2205 = vmatprep.subr.mxu0 0.0
        %2206 = vmatpush1.msra.mxu0 0.0
        %2207 = vmatprep.subr.mxu0 0.0
        %2208 = vmatpush1.msra.mxu0 0.0
        %2209 = vmatprep.subr.mxu0 0.0
        %2210 = vmatpush1.msra.mxu0 0.0
        %2211 = vmatprep.subr.mxu0 0.0
        %2212 = vmatpush1.msra.mxu0 0.0
        %2213 = vmatprep.subr.mxu0 0.0
        %2214 = vmatpush1.msra.mxu0 0.0
        %2215 = vmatprep.subr.mxu0 0.0
        %2216 = vmatpush1.msra.mxu0 0.0
        %2217 = vmatprep.subr.mxu0 0.0
        %2218 = vmatpush1.msra.mxu0 0.0
        %2219 = vmatprep.subr.mxu0 0.0
        %2220 = vmatpush1.msra.mxu0 0.0
        %2221 = vmatprep.subr.mxu0 0.0
        %2222 = vmatpush1.msra.mxu0 0.0
        %2223 = vmatprep.subr.mxu0 0.0
        %2224 = vmatpush1.msra.mxu0 0.0
        %2225 = vmatprep.subr.mxu0 0.0
        %2226 = vmatpush1.msra.mxu0 0.0
        %2227 = vmatprep.subr.mxu0 0.0
        %2228 = vmatpush1.msra.mxu0 0.0
        %2229 = vmatprep.subr.mxu0 0.0
        %2230 = vmatpush1.msra.mxu0 0.0
        %2231 = vmatprep.subr.mxu0 0.0
        %2232 = vmatpush1.msra.mxu0 0.0
        %2233 = vmatprep.subr.mxu0 0.0
        %2234 = vmatpush1.msra.mxu0 0.0
        %2235 = vmatprep.subr.mxu0 0.0
        %2236 = vmatpush1.msra.mxu0 0.0
        %2237 = vmatprep.subr.mxu0 0.0
        %2238 = vmatpush1.msra.mxu0 0.0
        %2239 = vmatprep.subr.mxu0 0.0
        %2240 = vmatpush1.msra.mxu0 0.0
        %2241 = vmatprep.subr.mxu0 0.0
        %2242 = vmatpush1.msra.mxu0 0.0
        %2243 = vmatprep.subr.mxu0 0.0
        %2244 = vmatpush1.msra.mxu0 0.0
        %2245 = vmatprep.subr.mxu0 0.0
        %2246 = vmatpush1.msra.mxu0 0.0
        %2247 = vmatprep.subr.mxu0 0.0
        %2248 = vmatpush1.msra.mxu0 0.0
        %2249 = vmatprep.subr.mxu0 0.0
        %2250 = vmatpush1.msra.mxu0 0.0
        %2251 = vmatprep.mubr.f32.mxu0 0.0
        %2252 = vmatmul.mubr.f32.gmra.mrb[0].mxu0 %v1132
        %v2253 = vpop.f32.mrb[0].mxu0
        %v2254 = vadd.f32 0.0, %v2253
        %v2255 = vpop.f32.mrb[0].mxu0
        %2256 = vmatprep.mubr.f32.mxu0 0.0
        %2257 = vmatmul.mubr.f32.gmra.mrb[0].mxu0 %v1135
        %v2258 = vpop.f32.mrb[0].mxu0
        %v2259 = vadd.f32 0.0, %v2258
        %v2260 = vpop.f32.mrb[0].mxu0
        %2261 = vdwg.mxu0
        %2262 = vmatprep.subr.mxu0 0.0
        %2263 = vmatpush1.msra.mxu0 %v2027
        %2264 = vmatprep.subr.mxu0 0.0
        %2265 = vmatpush1.msra.mxu0 %v2032
        %2266 = vmatprep.subr.mxu0 0.0
        %2267 = vmatpush1.msra.mxu0 0.0
        %2268 = vmatprep.subr.mxu0 0.0
        %2269 = vmatpush1.msra.mxu0 0.0
        %2270 = vmatprep.subr.mxu0 0.0
        %2271 = vmatpush1.msra.mxu0 0.0
        %2272 = vmatprep.subr.mxu0 0.0
        %2273 = vmatpush1.msra.mxu0 0.0
        %2274 = vmatprep.subr.mxu0 0.0
        %2275 = vmatpush1.msra.mxu0 0.0
        %2276 = vmatprep.subr.mxu0 0.0
        %2277 = vmatpush1.msra.mxu0 0.0
        %2278 = vmatprep.subr.mxu0 0.0
        %2279 = vmatpush1.msra.mxu0 0.0
        %2280 = vmatprep.subr.mxu0 0.0
        %2281 = vmatpush1.msra.mxu0 0.0
        %2282 = vmatprep.subr.mxu0 0.0
        %2283 = vmatpush1.msra.mxu0 0.0
        %2284 = vmatprep.subr.mxu0 0.0
        %2285 = vmatpush1.msra.mxu0 0.0
        %2286 = vmatprep.subr.mxu0 0.0
        %2287 = vmatpush1.msra.mxu0 0.0
        %2288 = vmatprep.subr.mxu0 0.0
        %2289 = vmatpush1.msra.mxu0 0.0
        %2290 = vmatprep.subr.mxu0 0.0
        %2291 = vmatpush1.msra.mxu0 0.0
        %2292 = vmatprep.subr.mxu0 0.0
        %2293 = vmatpush1.msra.mxu0 0.0
        %2294 = vmatprep.subr.mxu0 0.0
        %2295 = vmatpush1.msra.mxu0 0.0
        %2296 = vmatprep.subr.mxu0 0.0
        %2297 = vmatpush1.msra.mxu0 0.0
        %2298 = vmatprep.subr.mxu0 0.0
        %2299 = vmatpush1.msra.mxu0 0.0
        %2300 = vmatprep.subr.mxu0 0.0
        %2301 = vmatpush1.msra.mxu0 0.0
        %2302 = vmatprep.subr.mxu0 0.0
        %2303 = vmatpush1.msra.mxu0 0.0
        %2304 = vmatprep.subr.mxu0 0.0
        %2305 = vmatpush1.msra.mxu0 0.0
        %2306 = vmatprep.subr.mxu0 0.0
        %2307 = vmatpush1.msra.mxu0 0.0
        %2308 = vmatprep.subr.mxu0 0.0
        %2309 = vmatpush1.msra.mxu0 0.0
        %2310 = vmatprep.subr.mxu0 0.0
        %2311 = vmatpush1.msra.mxu0 0.0
        %2312 = vmatprep.subr.mxu0 0.0
        %2313 = vmatpush1.msra.mxu0 0.0
        %2314 = vmatprep.subr.mxu0 0.0
        %2315 = vmatpush1.msra.mxu0 0.0
        %2316 = vmatprep.subr.mxu0 0.0
        %2317 = vmatpush1.msra.mxu0 0.0
        %2318 = vmatprep.subr.mxu0 0.0
        %2319 = vmatpush1.msra.mxu0 0.0
        %2320 = vmatprep.subr.mxu0 0.0
        %2321 = vmatpush1.msra.mxu0 0.0
        %2322 = vmatprep.subr.mxu0 0.0
        %2323 = vmatpush1.msra.mxu0 0.0
        %2324 = vmatprep.subr.mxu0 0.0
        %2325 = vmatpush1.msra.mxu0 0.0
        %2326 = vmatprep.mubr.f32.mxu0 0.0
        %2327 = vmatmul.mubr.f32.gmra.mrb[0].mxu0 %v1051
        %v2328 = vpop.f32.mrb[0].mxu0
        %v2329 = vadd.f32 %v2254, %v2328
        %v2330 = vpop.f32.mrb[0].mxu0
        %2331 = vmatprep.mubr.f32.mxu0 0.0
        %2332 = vmatmul.mubr.f32.gmra.mrb[0].mxu0 %v1054
        %v2333 = vpop.f32.mrb[0].mxu0
        %v2334 = vadd.f32 %v2259, %v2333
        %v2335 = vpop.f32.mrb[0].mxu0
        %2336 = vdwg.mxu0
        %s2337 = scalar_lea.vmem %s608, 16 [#allocation8]
        %v2338 = vld [vmem:[%s2337] sm:$0xff]
        %v2339 = vld [vmem:[%s2337 + $0x8] sm:$0xff]
        %v2340 = vmul.f32 %v881, %v2185
        %v2341 = vmul.f32 %v882, %v2186
        %v2342 = vadd.f32 %v2338, %v2340
        %v2343 = vadd.f32 %v2339, %v2341
        %s2344 = scalar_lea.vmem %s617, 16 [#allocation10]
        %v2345 = vld [vmem:[%s2344] sm:$0xff]
        %v2346 = vld [vmem:[%s2344 + $0x8] sm:$0xff]
        %v2347 = vmul.f32 %v881, %v2329
        %v2348 = vmul.f32 %v882, %v2334
        %v2349 = vadd.f32 %v2345, %v2347
        %v2350 = vadd.f32 %v2346, %v2348
        %s2351 = scalar_lea.vmem %s626, 16 [#allocation11]
        %v2352 = vld [vmem:[%s2351] sm:$0xff]
        %v2353 = vld [vmem:[%s2351 + $0x8] sm:$0xff]
        %v2354 = vadd.f32 %v2352, %v881
        %v2355 = vadd.f32 %v2353, %v882
        %s2356 = scalar_lea.vmem %s635, 16 [#allocation13]
        %v2357 = vld [vmem:[%s2356] sm:$0xff]
        %v2358 = vld [vmem:[%s2356 + $0x8] sm:$0xff]
        %v2359 = vmul.f32 %v2354, %v2354
        %v2360 = vmul.f32 %v2355, %v2355
        %v2361 = vmul.f32 %v2357, %v2357
        %v2362 = vmul.f32 %v2358, %v2358
        %v2363 = vadd.f32 %v2359, %v2361
        %v2364 = vadd.f32 %v2360, %v2362
        %v2365 = vrcp.pop %v2363
        %v2366 = vmul.f32 1.0, %v2365
        %v2367 = vrcp.pop %v2364
        %v2368 = vmul.f32 1.0, %v2367
        %v2369 = vmul.f32 %v2342, %v2354
        %v2370 = vmul.f32 %v2343, %v2355
        %v2371 = vmul.f32 %v2349, %v2357
        %v2372 = vmul.f32 %v2350, %v2358
        %v2373 = vadd.f32 %v2369, %v2371
        %v2374 = vadd.f32 %v2370, %v2372
        %v2375 = vmul.f32 %v2373, %v2366
        %v2376 = vmul.f32 %v2374, %v2368
        %v2377 = vmul.f32 %v2349, %v2354
        %v2378 = vmul.f32 %v2350, %v2355
        %v2379 = vmul.f32 %v2342, %v2357
        %v2380 = vmul.f32 %v2343, %v2358
        %v2381 = vsub.f32 %v2377, %v2379
        %v2382 = vsub.f32 %v2378, %v2380
        %v2383 = vmul.f32 %v2381, %v2366
        %v2384 = vmul.f32 %v2382, %v2368
        %2385 = vmatprep.subr.mxu0 0.0
        %2386 = vmatpush1.msra.mxu0 %v2383
        %2387 = vmatprep.subr.mxu0 0.0
        %2388 = vmatpush1.msra.mxu0 %v2384
        %2389 = vmatprep.subr.mxu0 0.0
        %2390 = vmatpush1.msra.mxu0 0.0
        %2391 = vmatprep.subr.mxu0 0.0
        %2392 = vmatpush1.msra.mxu0 0.0
        %2393 = vmatprep.subr.mxu0 0.0
        %2394 = vmatpush1.msra.mxu0 0.0
        %2395 = vmatprep.subr.mxu0 0.0
        %2396 = vmatpush1.msra.mxu0 0.0
        %2397 = vmatprep.subr.mxu0 0.0
        %2398 = vmatpush1.msra.mxu0 0.0
        %2399 = vmatprep.subr.mxu0 0.0
        %2400 = vmatpush1.msra.mxu0 0.0
        %2401 = vmatprep.subr.mxu0 0.0
        %2402 = vmatpush1.msra.mxu0 0.0
        %2403 = vmatprep.subr.mxu0 0.0
        %2404 = vmatpush1.msra.mxu0 0.0
        %2405 = vmatprep.subr.mxu0 0.0
        %2406 = vmatpush1.msra.mxu0 0.0
        %2407 = vmatprep.subr.mxu0 0.0
        %2408 = vmatpush1.msra.mxu0 0.0
        %2409 = vmatprep.subr.mxu0 0.0
        %2410 = vmatpush1.msra.mxu0 0.0
        %2411 = vmatprep.subr.mxu0 0.0
        %2412 = vmatpush1.msra.mxu0 0.0
        %2413 = vmatprep.subr.mxu0 0.0
        %2414 = vmatpush1.msra.mxu0 0.0
        %2415 = vmatprep.subr.mxu0 0.0
        %2416 = vmatpush1.msra.mxu0 0.0
        %2417 = vmatprep.subr.mxu0 0.0
        %2418 = vmatpush1.msra.mxu0 0.0
        %2419 = vmatprep.subr.mxu0 0.0
        %2420 = vmatpush1.msra.mxu0 0.0
        %2421 = vmatprep.subr.mxu0 0.0
        %2422 = vmatpush1.msra.mxu0 0.0
        %2423 = vmatprep.subr.mxu0 0.0
        %2424 = vmatpush1.msra.mxu0 0.0
        %2425 = vmatprep.subr.mxu0 0.0
        %2426 = vmatpush1.msra.mxu0 0.0
        %2427 = vmatprep.subr.mxu0 0.0
        %2428 = vmatpush1.msra.mxu0 0.0
        %2429 = vmatprep.subr.mxu0 0.0
        %2430 = vmatpush1.msra.mxu0 0.0
        %2431 = vmatprep.subr.mxu0 0.0
        %2432 = vmatpush1.msra.mxu0 0.0
        %2433 = vmatprep.subr.mxu0 0.0
        %2434 = vmatpush1.msra.mxu0 0.0
        %2435 = vmatprep.subr.mxu0 0.0
        %2436 = vmatpush1.msra.mxu0 0.0
        %2437 = vmatprep.subr.mxu0 0.0
        %2438 = vmatpush1.msra.mxu0 0.0
        %2439 = vmatprep.subr.mxu0 0.0
        %2440 = vmatpush1.msra.mxu0 0.0
        %2441 = vmatprep.subr.mxu0 0.0
        %2442 = vmatpush1.msra.mxu0 0.0
        %2443 = vmatprep.subr.mxu0 0.0
        %2444 = vmatpush1.msra.mxu0 0.0
        %2445 = vmatprep.subr.mxu0 0.0
        %2446 = vmatpush1.msra.mxu0 0.0
        %2447 = vmatprep.subr.mxu0 0.0
        %2448 = vmatpush1.msra.mxu0 0.0
        %2449 = vmatprep.mubr.f32.mxu0 0.0
        %2450 = vmatmul.mubr.f32.gmra.mrb[0].mxu0 %v1132
        %v2451 = vpop.f32.mrb[0].mxu0
        %v2452 = vadd.f32 0.0, %v2451
        %v2453 = vpop.f32.mrb[0].mxu0
        %2454 = vmatprep.mubr.f32.mxu0 0.0
        %2455 = vmatmul.mubr.f32.gmra.mrb[0].mxu0 %v1135
        %v2456 = vpop.f32.mrb[0].mxu0
        %v2457 = vadd.f32 0.0, %v2456
        %v2458 = vpop.f32.mrb[0].mxu0
        %2459 = vdwg.mxu0
        %2460 = vmatprep.subr.mxu0 0.0
        %2461 = vmatpush1.msra.mxu0 %v2375
        %2462 = vmatprep.subr.mxu0 0.0
        %2463 = vmatpush1.msra.mxu0 %v2376
        %2464 = vmatprep.subr.mxu0 0.0
        %2465 = vmatpush1.msra.mxu0 0.0
        %2466 = vmatprep.subr.mxu0 0.0
        %2467 = vmatpush1.msra.mxu0 0.0
        %2468 = vmatprep.subr.mxu0 0.0
        %2469 = vmatpush1.msra.mxu0 0.0
        %2470 = vmatprep.subr.mxu0 0.0
        %2471 = vmatpush1.msra.mxu0 0.0
        %2472 = vmatprep.subr.mxu0 0.0
        %2473 = vmatpush1.msra.mxu0 0.0
        %2474 = vmatprep.subr.mxu0 0.0
        %2475 = vmatpush1.msra.mxu0 0.0
        %2476 = vmatprep.subr.mxu0 0.0
        %2477 = vmatpush1.msra.mxu0 0.0
        %2478 = vmatprep.subr.mxu0 0.0
        %2479 = vmatpush1.msra.mxu0 0.0
        %2480 = vmatprep.subr.mxu0 0.0
        %2481 = vmatpush1.msra.mxu0 0.0
        %2482 = vmatprep.subr.mxu0 0.0
        %2483 = vmatpush1.msra.mxu0 0.0
        %2484 = vmatprep.subr.mxu0 0.0
        %2485 = vmatpush1.msra.mxu0 0.0
        %2486 = vmatprep.subr.mxu0 0.0
        %2487 = vmatpush1.msra.mxu0 0.0
        %2488 = vmatprep.subr.mxu0 0.0
        %2489 = vmatpush1.msra.mxu0 0.0
        %2490 = vmatprep.subr.mxu0 0.0
        %2491 = vmatpush1.msra.mxu0 0.0
        %2492 = vmatprep.subr.mxu0 0.0
        %2493 = vmatpush1.msra.mxu0 0.0
        %2494 = vmatprep.subr.mxu0 0.0
        %2495 = vmatpush1.msra.mxu0 0.0
        %2496 = vmatprep.subr.mxu0 0.0
        %2497 = vmatpush1.msra.mxu0 0.0
        %2498 = vmatprep.subr.mxu0 0.0
        %2499 = vmatpush1.msra.mxu0 0.0
        %2500 = vmatprep.subr.mxu0 0.0
        %2501 = vmatpush1.msra.mxu0 0.0
        %2502 = vmatprep.subr.mxu0 0.0
        %2503 = vmatpush1.msra.mxu0 0.0
        %2504 = vmatprep.subr.mxu0 0.0
        %2505 = vmatpush1.msra.mxu0 0.0
        %2506 = vmatprep.subr.mxu0 0.0
        %2507 = vmatpush1.msra.mxu0 0.0
        %2508 = vmatprep.subr.mxu0 0.0
        %2509 = vmatpush1.msra.mxu0 0.0
        %2510 = vmatprep.subr.mxu0 0.0
        %2511 = vmatpush1.msra.mxu0 0.0
        %2512 = vmatprep.subr.mxu0 0.0
        %2513 = vmatpush1.msra.mxu0 0.0
        %2514 = vmatprep.subr.mxu0 0.0
        %2515 = vmatpush1.msra.mxu0 0.0
        %2516 = vmatprep.subr.mxu0 0.0
        %2517 = vmatpush1.msra.mxu0 0.0
        %2518 = vmatprep.subr.mxu0 0.0
        %2519 = vmatpush1.msra.mxu0 0.0
        %2520 = vmatprep.subr.mxu0 0.0
        %2521 = vmatpush1.msra.mxu0 0.0
        %2522 = vmatprep.subr.mxu0 0.0
        %2523 = vmatpush1.msra.mxu0 0.0
        %2524 = vmatprep.mubr.f32.mxu0 0.0
        %2525 = vmatmul.mubr.f32.gmra.mrb[0].mxu0 %v1051
        %v2526 = vpop.f32.mrb[0].mxu0
        %v2527 = vadd.f32 %v2452, %v2526
        %v2528 = vpop.f32.mrb[0].mxu0
        %2529 = vmatprep.mubr.f32.mxu0 0.0
        %2530 = vmatmul.mubr.f32.gmra.mrb[0].mxu0 %v1054
        %v2531 = vpop.f32.mrb[0].mxu0
        %v2532 = vadd.f32 %v2457, %v2531
        %v2533 = vpop.f32.mrb[0].mxu0
        %2534 = vdwg.mxu0
        %2535 = vmatprep.subr.mxu0 0.0
        %2536 = vmatpush1.msra.mxu0 %v2383
        %2537 = vmatprep.subr.mxu0 0.0
        %2538 = vmatpush1.msra.mxu0 %v2384
        %2539 = vmatprep.subr.mxu0 0.0
        %2540 = vmatpush1.msra.mxu0 0.0
        %2541 = vmatprep.subr.mxu0 0.0
        %2542 = vmatpush1.msra.mxu0 0.0
        %2543 = vmatprep.subr.mxu0 0.0
        %2544 = vmatpush1.msra.mxu0 0.0
        %2545 = vmatprep.subr.mxu0 0.0
        %2546 = vmatpush1.msra.mxu0 0.0
        %2547 = vmatprep.subr.mxu0 0.0
        %2548 = vmatpush1.msra.mxu0 0.0
        %2549 = vmatprep.subr.mxu0 0.0
        %2550 = vmatpush1.msra.mxu0 0.0
        %2551 = vmatprep.subr.mxu0 0.0
        %2552 = vmatpush1.msra.mxu0 0.0
        %2553 = vmatprep.subr.mxu0 0.0
        %2554 = vmatpush1.msra.mxu0 0.0
        %2555 = vmatprep.subr.mxu0 0.0
        %2556 = vmatpush1.msra.mxu0 0.0
        %2557 = vmatprep.subr.mxu0 0.0
        %2558 = vmatpush1.msra.mxu0 0.0
        %2559 = vmatprep.subr.mxu0 0.0
        %2560 = vmatpush1.msra.mxu0 0.0
        %2561 = vmatprep.subr.mxu0 0.0
        %2562 = vmatpush1.msra.mxu0 0.0
        %2563 = vmatprep.subr.mxu0 0.0
        %2564 = vmatpush1.msra.mxu0 0.0
        %2565 = vmatprep.subr.mxu0 0.0
        %2566 = vmatpush1.msra.mxu0 0.0
        %2567 = vmatprep.subr.mxu0 0.0
        %2568 = vmatpush1.msra.mxu0 0.0
        %2569 = vmatprep.subr.mxu0 0.0
        %2570 = vmatpush1.msra.mxu0 0.0
        %2571 = vmatprep.subr.mxu0 0.0
        %2572 = vmatpush1.msra.mxu0 0.0
        %2573 = vmatprep.subr.mxu0 0.0
        %2574 = vmatpush1.msra.mxu0 0.0
        %2575 = vmatprep.subr.mxu0 0.0
        %2576 = vmatpush1.msra.mxu0 0.0
        %2577 = vmatprep.subr.mxu0 0.0
        %2578 = vmatpush1.msra.mxu0 0.0
        %2579 = vmatprep.subr.mxu0 0.0
        %2580 = vmatpush1.msra.mxu0 0.0
        %2581 = vmatprep.subr.mxu0 0.0
        %2582 = vmatpush1.msra.mxu0 0.0
        %2583 = vmatprep.subr.mxu0 0.0
        %2584 = vmatpush1.msra.mxu0 0.0
        %2585 = vmatprep.subr.mxu0 0.0
        %2586 = vmatpush1.msra.mxu0 0.0
        %2587 = vmatprep.subr.mxu0 0.0
        %2588 = vmatpush1.msra.mxu0 0.0
        %2589 = vmatprep.subr.mxu0 0.0
        %2590 = vmatpush1.msra.mxu0 0.0
        %2591 = vmatprep.subr.mxu0 0.0
        %2592 = vmatpush1.msra.mxu0 0.0
        %2593 = vmatprep.subr.mxu0 0.0
        %2594 = vmatpush1.msra.mxu0 0.0
        %2595 = vmatprep.subr.mxu0 0.0
        %2596 = vmatpush1.msra.mxu0 0.0
        %2597 = vmatprep.subr.mxu0 0.0
        %2598 = vmatpush1.msra.mxu0 0.0
        %2599 = vmatprep.mubr.f32.mxu0 0.0
        %2600 = vmatmul.mubr.f32.gmra.mrb[0].mxu0 %v1051
        %v2601 = vpop.f32.mrb[0].mxu0
        %v2602 = vadd.f32 0.0, %v2601
        %v2603 = vpop.f32.mrb[0].mxu0
        %2604 = vmatprep.mubr.f32.mxu0 0.0
        %2605 = vmatmul.mubr.f32.gmra.mrb[0].mxu0 %v1054
        %v2606 = vpop.f32.mrb[0].mxu0
        %v2607 = vadd.f32 0.0, %v2606
        %v2608 = vpop.f32.mrb[0].mxu0
        %2609 = vdwg.mxu0
        %2610 = vmatprep.subr.mxu0 0.0
        %2611 = vmatpush1.msra.mxu0 %v2375
        %2612 = vmatprep.subr.mxu0 0.0
        %2613 = vmatpush1.msra.mxu0 %v2376
        %2614 = vmatprep.subr.mxu0 0.0
        %2615 = vmatpush1.msra.mxu0 0.0
        %2616 = vmatprep.subr.mxu0 0.0
        %2617 = vmatpush1.msra.mxu0 0.0
        %2618 = vmatprep.subr.mxu0 0.0
        %2619 = vmatpush1.msra.mxu0 0.0
        %2620 = vmatprep.subr.mxu0 0.0
        %2621 = vmatpush1.msra.mxu0 0.0
        %2622 = vmatprep.subr.mxu0 0.0
        %2623 = vmatpush1.msra.mxu0 0.0
        %2624 = vmatprep.subr.mxu0 0.0
        %2625 = vmatpush1.msra.mxu0 0.0
        %2626 = vmatprep.subr.mxu0 0.0
        %2627 = vmatpush1.msra.mxu0 0.0
        %2628 = vmatprep.subr.mxu0 0.0
        %2629 = vmatpush1.msra.mxu0 0.0
        %2630 = vmatprep.subr.mxu0 0.0
        %2631 = vmatpush1.msra.mxu0 0.0
        %2632 = vmatprep.subr.mxu0 0.0
        %2633 = vmatpush1.msra.mxu0 0.0
        %2634 = vmatprep.subr.mxu0 0.0
        %2635 = vmatpush1.msra.mxu0 0.0
        %2636 = vmatprep.subr.mxu0 0.0
        %2637 = vmatpush1.msra.mxu0 0.0
        %2638 = vmatprep.subr.mxu0 0.0
        %2639 = vmatpush1.msra.mxu0 0.0
        %2640 = vmatprep.subr.mxu0 0.0
        %2641 = vmatpush1.msra.mxu0 0.0
        %2642 = vmatprep.subr.mxu0 0.0
        %2643 = vmatpush1.msra.mxu0 0.0
        %2644 = vmatprep.subr.mxu0 0.0
        %2645 = vmatpush1.msra.mxu0 0.0
        %2646 = vmatprep.subr.mxu0 0.0
        %2647 = vmatpush1.msra.mxu0 0.0
        %2648 = vmatprep.subr.mxu0 0.0
        %2649 = vmatpush1.msra.mxu0 0.0
        %2650 = vmatprep.subr.mxu0 0.0
        %2651 = vmatpush1.msra.mxu0 0.0
        %2652 = vmatprep.subr.mxu0 0.0
        %2653 = vmatpush1.msra.mxu0 0.0
        %2654 = vmatprep.subr.mxu0 0.0
        %2655 = vmatpush1.msra.mxu0 0.0
        %2656 = vmatprep.subr.mxu0 0.0
        %2657 = vmatpush1.msra.mxu0 0.0
        %2658 = vmatprep.subr.mxu0 0.0
        %2659 = vmatpush1.msra.mxu0 0.0
        %2660 = vmatprep.subr.mxu0 0.0
        %2661 = vmatpush1.msra.mxu0 0.0
        %2662 = vmatprep.subr.mxu0 0.0
        %2663 = vmatpush1.msra.mxu0 0.0
        %2664 = vmatprep.subr.mxu0 0.0
        %2665 = vmatpush1.msra.mxu0 0.0
        %2666 = vmatprep.subr.mxu0 0.0
        %2667 = vmatpush1.msra.mxu0 0.0
        %2668 = vmatprep.subr.mxu0 0.0
        %2669 = vmatpush1.msra.mxu0 0.0
        %2670 = vmatprep.subr.mxu0 0.0
        %2671 = vmatpush1.msra.mxu0 0.0
        %2672 = vmatprep.subr.mxu0 0.0
        %2673 = vmatpush1.msra.mxu0 0.0
        %2674 = vmatprep.mubr.f32.mxu0 0.0
        %2675 = vmatmul.mubr.f32.gmra.mrb[0].mxu0 %v1132
        %v2676 = vpop.f32.mrb[0].mxu0
        %v2677 = vadd.f32 0.0, %v2676
        %v2678 = vpop.f32.mrb[0].mxu0
        %2679 = vmatprep.mubr.f32.mxu0 0.0
        %2680 = vmatmul.mubr.f32.gmra.mrb[0].mxu0 %v1135
        %v2681 = vpop.f32.mrb[0].mxu0
        %v2682 = vadd.f32 0.0, %v2681
        %v2683 = vpop.f32.mrb[0].mxu0
        %2684 = vdwg.mxu0
        %v2685 = vsub.f32 %v2602, %v2677
        %v2686 = vsub.f32 %v2607, %v2682
        %v2688 = vsel %vm893, %v2685, 0
        %v2691 = vsel %vm893, %v2686, 0
        %2693 = vmatprep.subr.mxu0 0.0
        %2694 = vmatpush1.msra.mxu0 %v889
        %2695 = vmatprep.subr.mxu0 0.0
        %2696 = vmatpush1.msra.mxu0 %v890
        %2697 = vmatprep.subr.mxu0 0.0
        %2698 = vmatpush1.msra.mxu0 0.0
        %2699 = vmatprep.subr.mxu0 0.0
        %2700 = vmatpush1.msra.mxu0 0.0
        %2701 = vmatprep.subr.mxu0 0.0
        %2702 = vmatpush1.msra.mxu0 0.0
        %2703 = vmatprep.subr.mxu0 0.0
        %2704 = vmatpush1.msra.mxu0 0.0
        %2705 = vmatprep.subr.mxu0 0.0
        %2706 = vmatpush1.msra.mxu0 0.0
        %2707 = vmatprep.subr.mxu0 0.0
        %2708 = vmatpush1.msra.mxu0 0.0
        %2709 = vmatprep.subr.mxu0 0.0
        %2710 = vmatpush1.msra.mxu0 0.0
        %2711 = vmatprep.subr.mxu0 0.0
        %2712 = vmatpush1.msra.mxu0 0.0
        %2713 = vmatprep.subr.mxu0 0.0
        %2714 = vmatpush1.msra.mxu0 0.0
        %2715 = vmatprep.subr.mxu0 0.0
        %2716 = vmatpush1.msra.mxu0 0.0
        %2717 = vmatprep.subr.mxu0 0.0
        %2718 = vmatpush1.msra.mxu0 0.0
        %2719 = vmatprep.subr.mxu0 0.0
        %2720 = vmatpush1.msra.mxu0 0.0
        %2721 = vmatprep.subr.mxu0 0.0
        %2722 = vmatpush1.msra.mxu0 0.0
        %2723 = vmatprep.subr.mxu0 0.0
        %2724 = vmatpush1.msra.mxu0 0.0
        %2725 = vmatprep.subr.mxu0 0.0
        %2726 = vmatpush1.msra.mxu0 0.0
        %2727 = vmatprep.subr.mxu0 0.0
        %2728 = vmatpush1.msra.mxu0 0.0
        %2729 = vmatprep.subr.mxu0 0.0
        %2730 = vmatpush1.msra.mxu0 0.0
        %2731 = vmatprep.subr.mxu0 0.0
        %2732 = vmatpush1.msra.mxu0 0.0
        %2733 = vmatprep.subr.mxu0 0.0
        %2734 = vmatpush1.msra.mxu0 0.0
        %2735 = vmatprep.subr.mxu0 0.0
        %2736 = vmatpush1.msra.mxu0 0.0
        %2737 = vmatprep.subr.mxu0 0.0
        %2738 = vmatpush1.msra.mxu0 0.0
        %2739 = vmatprep.subr.mxu0 0.0
        %2740 = vmatpush1.msra.mxu0 0.0
        %2741 = vmatprep.subr.mxu0 0.0
        %2742 = vmatpush1.msra.mxu0 0.0
        %2743 = vmatprep.subr.mxu0 0.0
        %2744 = vmatpush1.msra.mxu0 0.0
        %2745 = vmatprep.subr.mxu0 0.0
        %2746 = vmatpush1.msra.mxu0 0.0
        %2747 = vmatprep.subr.mxu0 0.0
        %2748 = vmatpush1.msra.mxu0 0.0
        %2749 = vmatprep.subr.mxu0 0.0
        %2750 = vmatpush1.msra.mxu0 0.0
        %2751 = vmatprep.subr.mxu0 0.0
        %2752 = vmatpush1.msra.mxu0 0.0
        %2753 = vmatprep.subr.mxu0 0.0
        %2754 = vmatpush1.msra.mxu0 0.0
        %2755 = vmatprep.subr.mxu0 0.0
        %2756 = vmatpush1.msra.mxu0 0.0
        %2757 = vmatprep.mubr.f32.mxu0 0.0
        %2758 = vmatmul.mubr.f32.gmra.mrb[0].mxu0 %v2688
        %v2759 = vpop.f32.mrb[0].mxu0
        %v2760 = vadd.f32 0.0, %v2759
        %v2761 = vpop.f32.mrb[0].mxu0
        %2762 = vmatprep.mubr.f32.mxu0 0.0
        %2763 = vmatmul.mubr.f32.gmra.mrb[0].mxu0 %v2691
        %v2764 = vpop.f32.mrb[0].mxu0
        %v2765 = vadd.f32 0.0, %v2764
        %v2766 = vpop.f32.mrb[0].mxu0
        %2767 = vdwg.mxu0
        %v2769 = vsel %vm893, %v2527, 0
        %v2772 = vsel %vm893, %v2532, 0
        %2774 = vmatprep.subr.mxu0 0.0
        %2775 = vmatpush1.msra.mxu0 %v887
        %2776 = vmatprep.subr.mxu0 0.0
        %2777 = vmatpush1.msra.mxu0 %v888
        %2778 = vmatprep.subr.mxu0 0.0
        %2779 = vmatpush1.msra.mxu0 0.0
        %2780 = vmatprep.subr.mxu0 0.0
        %2781 = vmatpush1.msra.mxu0 0.0
        %2782 = vmatprep.subr.mxu0 0.0
        %2783 = vmatpush1.msra.mxu0 0.0
        %2784 = vmatprep.subr.mxu0 0.0
        %2785 = vmatpush1.msra.mxu0 0.0
        %2786 = vmatprep.subr.mxu0 0.0
        %2787 = vmatpush1.msra.mxu0 0.0
        %2788 = vmatprep.subr.mxu0 0.0
        %2789 = vmatpush1.msra.mxu0 0.0
        %2790 = vmatprep.subr.mxu0 0.0
        %2791 = vmatpush1.msra.mxu0 0.0
        %2792 = vmatprep.subr.mxu0 0.0
        %2793 = vmatpush1.msra.mxu0 0.0
        %2794 = vmatprep.subr.mxu0 0.0
        %2795 = vmatpush1.msra.mxu0 0.0
        %2796 = vmatprep.subr.mxu0 0.0
        %2797 = vmatpush1.msra.mxu0 0.0
        %2798 = vmatprep.subr.mxu0 0.0
        %2799 = vmatpush1.msra.mxu0 0.0
        %2800 = vmatprep.subr.mxu0 0.0
        %2801 = vmatpush1.msra.mxu0 0.0
        %2802 = vmatprep.subr.mxu0 0.0
        %2803 = vmatpush1.msra.mxu0 0.0
        %2804 = vmatprep.subr.mxu0 0.0
        %2805 = vmatpush1.msra.mxu0 0.0
        %2806 = vmatprep.subr.mxu0 0.0
        %2807 = vmatpush1.msra.mxu0 0.0
        %2808 = vmatprep.subr.mxu0 0.0
        %2809 = vmatpush1.msra.mxu0 0.0
        %2810 = vmatprep.subr.mxu0 0.0
        %2811 = vmatpush1.msra.mxu0 0.0
        %2812 = vmatprep.subr.mxu0 0.0
        %2813 = vmatpush1.msra.mxu0 0.0
        %2814 = vmatprep.subr.mxu0 0.0
        %2815 = vmatpush1.msra.mxu0 0.0
        %2816 = vmatprep.subr.mxu0 0.0
        %2817 = vmatpush1.msra.mxu0 0.0
        %2818 = vmatprep.subr.mxu0 0.0
        %2819 = vmatpush1.msra.mxu0 0.0
        %2820 = vmatprep.subr.mxu0 0.0
        %2821 = vmatpush1.msra.mxu0 0.0
        %2822 = vmatprep.subr.mxu0 0.0
        %2823 = vmatpush1.msra.mxu0 0.0
        %2824 = vmatprep.subr.mxu0 0.0
        %2825 = vmatpush1.msra.mxu0 0.0
        %2826 = vmatprep.subr.mxu0 0.0
        %2827 = vmatpush1.msra.mxu0 0.0
        %2828 = vmatprep.subr.mxu0 0.0
        %2829 = vmatpush1.msra.mxu0 0.0
        %2830 = vmatprep.subr.mxu0 0.0
        %2831 = vmatpush1.msra.mxu0 0.0
        %2832 = vmatprep.subr.mxu0 0.0
        %2833 = vmatpush1.msra.mxu0 0.0
        %2834 = vmatprep.subr.mxu0 0.0
        %2835 = vmatpush1.msra.mxu0 0.0
        %2836 = vmatprep.subr.mxu0 0.0
        %2837 = vmatpush1.msra.mxu0 0.0
        %2838 = vmatprep.mubr.f32.mxu0 0.0
        %2839 = vmatmul.mubr.f32.gmra.mrb[0].mxu0 %v2769
        %v2840 = vpop.f32.mrb[0].mxu0
        %v2841 = vadd.f32 %v2760, %v2840
        %v2842 = vpop.f32.mrb[0].mxu0
        %2843 = vmatprep.mubr.f32.mxu0 0.0
        %2844 = vmatmul.mubr.f32.gmra.mrb[0].mxu0 %v2772
        %v2845 = vpop.f32.mrb[0].mxu0
        %v2846 = vadd.f32 %v2765, %v2845
        %v2847 = vpop.f32.mrb[0].mxu0
        %2848 = vdwg.mxu0
        %v2849 = vmul.f32 %v2841, 0.00390625
        %v2850 = vmul.f32 %v2846, 0.00390625
        %s2851 = scalar_lea.vmem %s730, 16 [#allocation21]
        %2852 = vst.msk [vmem:[%s2851] sm:$0xff] %vm893, %v2849
        %2853 = vst.msk [vmem:[%s2851 + $0x8] sm:$0xff] %vm893, %v2850
        %s2854 = sand.u32 %s376, 1
        %s2855 = scalar_lea.sflag [#allocation5], %s2854
        %s2856 = sand.u32 %s376, 1
        %s2857 = smul.addr %s2856, 32
        %s2858 = scalar_lea.vmem [#allocation21], %s2857
        // Predicated region
        $region117: #{tpu_custom_call.1} parent=75 // pred_check
          %p2859 = pneg %p386
        $region118: #{tpu_custom_call.1} parent=75 // pred_check_branch
          %2861 = sbr.rel (%p2859) target = $region120
        $region119: #{tpu_custom_call.1} parent=75 // pred_region
          %s2863 = ssub.s32 512, 512
          %2864 = vsyncadd %s2855, %s2863
          %s2865 = smul.addr %s44, 4
          %s2866 = smul.addr %s2865, 128
          %s2867 = scalar_lea.hbm %s14, %s2866
          %s2868 = sshll.u32 %s2858, 4
          %s2869 = int_to_ptr.vmem [resolvable:$true] %s2868
          %2874 = dma.vmem_to_hbm [thread:$0]  %s2869, 512, %s2867, %s2855, 128, 128, 8
        $region120: #{tpu_custom_call.1} parent=75 // pred_fallthru
          _
      $region76: #{tpu_custom_call.1} parent=5 // pred_fallthru
        _
      %p2875 = scmp.le.s32.totalorder 2, %s39
      // Predicated region
      $region121: #{tpu_custom_call.1} parent=5 // pred_check
        %p2876 = pneg %p2875
      $region122: #{tpu_custom_call.1} parent=5 // pred_check_branch
        %2878 = sbr.rel (%p2876) target = $region124
      $region123: #{tpu_custom_call.1} parent=5 // pred_region
        %s2879 = ssub.s32 %s39, 2
        // Predicated region
        $region125: #{tpu_custom_call.1} parent=123 // pred_check
          %p2880 = pneg %p392
        $region126: #{tpu_custom_call.1} parent=123 // pred_check_branch
          %2882 = sbr.rel (%p2880) target = $region128
        $region127: #{tpu_custom_call.1} parent=123 // pred_region
          %s2883 = sand.u32 %s377, 1
          %s2884 = scalar_lea.sflag [#allocation5], %s2883
          %s2885 = sand.u32 %s377, 1
          %s2886 = smul.addr %s2885, 32
          %s2887 = scalar_lea.vmem [#allocation21], %s2886
          %2888 = dma.done %s2884, 512
        $region128: #{tpu_custom_call.1} parent=123 // pred_fallthru
          _
      $region124: #{tpu_custom_call.1} parent=5 // pred_fallthru
        _
    $region6: #{tpu_custom_call.1} parent=1 // loop_footer
      %s43 = sadd.s32 1, %s39
    $region7: #{tpu_custom_call.1} parent=1 // loop_footer_branch
      %38 = sbr.rel target = $region3
    $region8: #{tpu_custom_call.1} parent=1 // loop_exit
      _
    %2889 = vsyncpa [#allocation4], 1
    %s2890 = scalar_lea.sflag [#allocation4], 1
    %2891 = vsyncpa %s2890, 1
    %2892 = vsyncpa [#allocation9], 1
    %s2893 = scalar_lea.sflag [#allocation9], 1
    %2894 = vsyncpa %s2893, 1
    %2895 = vsyncpa [#allocation12], 1
    %s2896 = scalar_lea.sflag [#allocation12], 1
    %2897 = vsyncpa %s2896, 1
    %2898 = vsyncpa [#allocation15], 1
    %s2899 = scalar_lea.sflag [#allocation15], 1
    %2900 = vsyncpa %s2899, 1
    %2901 = vsyncpa [#allocation5], 1
    %s2902 = scalar_lea.sflag [#allocation5], 1
    %2903 = vsyncpa %s2902, 1
    %2904 = vsyncpa [#allocation6], 1
    %s2905 = scalar_lea.sflag [#allocation6], 1
    %2906 = vsyncpa %s2905, 1
    %2907 = vsyncpa [#allocation19], 1
    %2908 = vsyncpa [#allocation7], 1
    %s2909 = scalar_lea.sflag [#allocation7], 1
    %2910 = vsyncpa %s2909, 1

</llo_original>
